<compile_context>
chip_gen: v7x
topology: tpu7x:2x2x1
jax: 0.10.0
libtpu: 0.0.40
codegen_flags: <defaults>
</compile_context>

<pallas_src>
import jax
import jax.numpy as jnp
from jax.experimental import pallas as pl
from jax.experimental.pallas import tpu as pltpu

_LN_EPS = 1e-5       # nn.LayerNorm default
_ALPHA_EPS = 1e-6


def _round_up(v, m):
    return ((v + m - 1) // m) * m


def _pad2(a, r, c):
    pr, pc = r - a.shape[0], c - a.shape[1]
    if pr == 0 and pc == 0:
        return a                      # no-op when caller pre-padded (see prepare_params)
    return jnp.pad(a, ((0, pr), (0, pc)))


def _vmem_limit_bytes():
    """Generation-aware VMEM limit: ~75% of physical (96 MiB on v5e/v6e, 48 MiB on v7x)."""
    try:
        cap = int(pltpu.get_tpu_info().vmem_capacity_bytes)
    except Exception:
        cap = 64 * 1024 * 1024        # conservative fallback (v7x-sized)
    return max(32 * 1024 * 1024, (cap * 3) // 4)


def _choose_tile_n(n, d_pad, r_pad, f_pad, vmem_limit):
    """Largest row tile that fits the per-generation VMEM budget; >=2 tiles when possible."""
    # Grid-invariant operands (double-buffered by the pipeliner): bf16 weights + f32 vectors.
    const_bytes = 2 * (4 * (d_pad * r_pad + d_pad * f_pad) + 4 * (5 * d_pad + f_pad))
    # Per-row bytes: pipelined x(f32 in)/sia(bf16 out)/y(f32 out) buffers (2x each)
    # + live f32 intermediates (~4x [*,Dp], 2x [*,Rp], 2x [*,Fp]).
    per_row = 2 * (4 + 2 + 4) * d_pad + 16 * d_pad + 8 * r_pad + 8 * f_pad
    budget = vmem_limit - const_bytes - (4 << 20)           # headroom for scratch/spill
    cap_rows = max(0, budget) // per_row
    cap = int(max(64, min(1024, (cap_rows // 16) * 16)))    # 16-row multiples (bf16 tiling)
    n16 = _round_up(max(n, 1), 16)
    if n16 <= cap:
        # Whole problem would be one grid step: split so both v7x TensorCores get work.
        return max(16, _round_up(-(-n // 2), 16))
    return cap


# ---------------------------------------------------------------------------
# Single pass: per N-tile compute sia (bf16 out), y = x + z (f32 out), and the
# per-tile sum-of-squares partials for the two global norms.
# ---------------------------------------------------------------------------
def _make_pass1_kernel(d_true, d_pad, n_true, tile_n, n_pad):
    inv_d = 1.0 / float(d_true)
    needs_col_mask = (d_true != d_pad)
    needs_row_mask = (n_true != n_pad)

    def kernel(x_ref,
               ln1w_ref, ln1b_ref,        # [1, Dp] f32
               wdown_ref,                 # [Dp, Rp] bf16
               wdq_ref,                   # [Rp, Dp] bf16
               ln2w_ref, ln2b_ref,        # [1, Dp] f32
               w1_ref, b1_ref,            # [Dp, Fp] bf16, [1, Fp] f32
               w2_ref, b2_ref,            # [Fp, Dp] bf16, [1, Dp] f32
               sia_ref,                   # out [TN, Dp] bf16
               y_ref,                     # out [TN, Dp] f32  (x + z)
               parts_ref):                # out [8, 256] f32  (ssia | sffn broadcast)
        x = x_ref[...]                    # f32 [TN, Dp]; padded cols/rows are zero

        if needs_col_mask:
            col_mask = (jax.lax.broadcasted_iota(jnp.int32, (1, d_pad), 1)
                        < d_true).astype(jnp.float32)

        def layer_norm(v, w, b):
            # Statistics over the true d_model columns only (padded cols of v are 0).
            mu = jnp.sum(v, axis=-1, keepdims=True) * inv_d
            cen = v - mu
            if needs_col_mask:
                cen = cen * col_mask
            var = jnp.sum(cen * cen, axis=-1, keepdims=True) * inv_d
            return cen * jax.lax.rsqrt(var + _LN_EPS) * w + b

        def gelu(v):
            # tanh-approximation GELU (EUP tanh + VALU polynomial).
            c = 0.7978845608028654  # sqrt(2/pi)
            return 0.5 * v * (1.0 + jnp.tanh(c * (v + 0.044715 * v * v * v)))

        # ---------------- SIA branch (bf16 MXU inputs, f32 accumulate) ----------
        h = layer_norm(x, ln1w_ref[...], ln1b_ref[...])
        u = jnp.dot(h.astype(jnp.bfloat16), wdown_ref[...],
                    preferred_element_type=jnp.float32)
        s = u * jnp.tanh(u)                                   # self-interaction gate
        sia = jnp.dot(s.astype(jnp.bfloat16), wdq_ref[...],
                      preferred_element_type=jnp.float32)
        sia_ref[...] = sia.astype(sia_ref.dtype)              # bf16 to HBM; f32 kept below

        # ---------------- FFN branch (uses the f32 sia) --------------------------
        g = layer_norm(x + sia, ln2w_ref[...], ln2b_ref[...])
        h1 = jnp.dot(g.astype(jnp.bfloat16), w1_ref[...],
                     preferred_element_type=jnp.float32) + b1_ref[...]
        h1 = gelu(h1)
        z = jnp.dot(h1.astype(jnp.bfloat16), w2_ref[...],
                    preferred_element_type=jnp.float32) + b2_ref[...]
        y_ref[...] = (x + z).astype(y_ref.dtype)              # fused residual + FFN out

        # ---------------- norm partials (row mask only on the [TN,1] reduces) ----
        r_sia = jnp.sum(sia * sia, axis=-1, keepdims=True)    # [TN, 1]
        r_ffn = jnp.sum(z * z, axis=-1, keepdims=True)
        if needs_row_mask:
            row0 = pl.program_id(0) * tile_n
            rid = row0 + jax.lax.broadcasted_iota(jnp.int32, (r_sia.shape[0], 1), 0)
            row_mask = (rid < n_true).astype(jnp.float32)
            r_sia = r_sia * row_mask
            r_ffn = r_ffn * row_mask
        parts_ref[:, 0:128] = jnp.zeros((8, 128), jnp.float32) + jnp.sum(r_sia)
        parts_ref[:, 128:256] = jnp.zeros((8, 128), jnp.float32) + jnp.sum(r_ffn)

    return kernel


# ---------------------------------------------------------------------------
# Wrapper: padding, tiling, one pallas_call, tiny XLA epilogue.
# ---------------------------------------------------------------------------
def prepare_params(params):
    """Optional: pre-pad (zeros) to 128-multiples and pre-cast matmul weights to bf16
    once, outside jit, so the per-call pad/cast inside `spectral_block` is a no-op."""
    D = params["ln1_w"].shape[-1]
    R = params["w_down"].shape[1]
    F = params["w1"].shape[1]
    Dp, Rp, Fp = _round_up(D, 128), _round_up(R, 128), _round_up(F, 128)
    p = dict(params)
    p["ln1_w"] = _pad2(params["ln1_w"], 1, Dp)
    p["ln1_b"] = _pad2(params["ln1_b"], 1, Dp)
    p["ln2_w"] = _pad2(params["ln2_w"], 1, Dp)
    p["ln2_b"] = _pad2(params["ln2_b"], 1, Dp)
    p["w_down"] = _pad2(params["w_down"], Dp, Rp).astype(jnp.bfloat16)
    p["w_dq"] = _pad2(params["w_dq"], Rp, Dp).astype(jnp.bfloat16)
    p["w1"] = _pad2(params["w1"], Dp, Fp).astype(jnp.bfloat16)
    p["b1"] = _pad2(params["b1"], 1, Fp)
    p["w2"] = _pad2(params["w2"], Fp, Dp).astype(jnp.bfloat16)
    p["b2"] = _pad2(params["b2"], 1, Dp)
    return p


def spectral_block(x, params, *, step: int = 0, layer_idx: int = 0):
    """x: [B, S, D] float32.  step/layer_idx kept for API parity (unused)."""
    del step, layer_idx
    B, S, D = x.shape
    N = B * S
    R = params["w_down"].shape[1]
    F = params["w1"].shape[1]

    Dp = _round_up(D, 128)
    Rp = _round_up(R, 128)
    Fp = _round_up(F, 128)

    vmem_limit = _vmem_limit_bytes()
    TN = _choose_tile_n(N, Dp, Rp, Fp, vmem_limit)
    Np = _round_up(N, TN)
    num_tiles = Np // TN

    # Zero-pad activations / params; matmul weights to bf16 (no-ops if pre-prepared).
    xp = _pad2(x.reshape(N, D).astype(jnp.float32), Np, Dp)
    ln1w = _pad2(params["ln1_w"], 1, Dp)
    ln1b = _pad2(params["ln1_b"], 1, Dp)
    ln2w = _pad2(params["ln2_w"], 1, Dp)
    ln2b = _pad2(params["ln2_b"], 1, Dp)
    wdown = _pad2(params["w_down"], Dp, Rp).astype(jnp.bfloat16)
    wdq = _pad2(params["w_dq"], Rp, Dp).astype(jnp.bfloat16)
    w1 = _pad2(params["w1"], Dp, Fp).astype(jnp.bfloat16)
    b1 = _pad2(params["b1"], 1, Fp)
    w2 = _pad2(params["w2"], Fp, Dp).astype(jnp.bfloat16)
    b2 = _pad2(params["b2"], 1, Dp)

    row_spec = pl.BlockSpec((TN, Dp), lambda i: (i, 0))
    parts_spec = pl.BlockSpec((8, 256), lambda i: (i, 0))

    def const_spec(shape):               # grid-invariant: stays VMEM-resident
        return pl.BlockSpec(shape, lambda i: (0, 0))
    # TODO(synk): on v7x, pipeline_mode=pl.Buffered(1) on the const specs would halve
    # resident-weight VMEM; kept at the default for portability across jax versions.

    weight_bytes = 2 * (Dp * Rp + Rp * Dp + Dp * Fp + Fp * Dp)
    flops = 2 * Np * (Dp * Rp + Rp * Dp + Dp * Fp + Fp * Dp)
    transcendentals = Np * (Rp + Fp)
    bytes_accessed = (4 * Np * Dp            # x in (f32)
                      + 2 * Np * Dp          # sia out (bf16)
                      + 4 * Np * Dp          # y out (f32)
                      + weight_bytes
                      + 4 * (5 * Dp + Fp)
                      + 4 * num_tiles * 8 * 256)

    sia_bf16, y_full, parts = pl.pallas_call(
        _make_pass1_kernel(D, Dp, N, TN, Np),
        out_shape=(
            jax.ShapeDtypeStruct((Np, Dp), jnp.bfloat16),
            jax.ShapeDtypeStruct((Np, Dp), jnp.float32),
            jax.ShapeDtypeStruct((num_tiles * 8, 256), jnp.float32),
        ),
        grid=(num_tiles,),
        in_specs=[
            row_spec,
            const_spec((1, Dp)), const_spec((1, Dp)),
            const_spec((Dp, Rp)), const_spec((Rp, Dp)),
            const_spec((1, Dp)), const_spec((1, Dp)),
            const_spec((Dp, Fp)), const_spec((1, Fp)),
            const_spec((Fp, Dp)), const_spec((1, Dp)),
        ],
        out_specs=(row_spec, row_spec, parts_spec),
        compiler_params=pltpu.CompilerParams(
            dimension_semantics=("parallel",),        # v7x: split tiles across 2 TCs
            vmem_limit_bytes=vmem_limit),
        cost_estimate=pl.CostEstimate(flops=flops,
                                      transcendentals=transcendentals,
                                      bytes_accessed=bytes_accessed),
    )(xp, ln1w, ln1b, wdown, wdq, ln2w, ln2b, w1, b1, w2, b2)

    # Tiny scalar epilogue: exact global L2 norms from per-tile f32 partial sums.
    ss_sia = jnp.sum(parts[::8, 0])
    ss_ffn = jnp.sum(parts[::8, 128])
    norm_sia = jnp.sqrt(ss_sia)
    norm_ffn = jnp.sqrt(ss_ffn)
    alpha = norm_sia / (norm_sia + norm_ffn + _ALPHA_EPS)

    # Final combine fused with the de-pad slice by XLA (no padded writeback, no 2nd call):
    #   out = x + alpha*sia + z = (x + z) + alpha*sia = y + alpha*sia
    out = y_full[:N, :D] + alpha * sia_bf16[:N, :D].astype(jnp.float32)
    return out.reshape(B, S, D).astype(x.dtype)


# ---------------------------------------------------------------------------
# Parameters / reference / demo.
# ---------------------------------------------------------------------------
def init_params(key, d_model, sia_r, fsp_rank):
    k1, k2, k3 = jax.random.split(key, 3)
    scale_dm = 1.0 / jnp.sqrt(d_model)
    scale_fr = 1.0 / jnp.sqrt(fsp_rank)
    return {
        "ln1_w": jnp.ones((1, d_model), jnp.float32),
        "ln1_b": jnp.zeros((1, d_model), jnp.float32),
        "ln2_w": jnp.ones((1, d_model), jnp.float32),
        "ln2_b": jnp.zeros((1, d_model), jnp.float32),
        "w_down": jax.random.uniform(k1, (d_model, sia_r), jnp.float32,
                                     -scale_dm, scale_dm),
        "w_dq": jnp.full((sia_r, d_model), 0.01, jnp.float32),   # delta_Q.weight.T
        "w1": jax.random.uniform(k2, (d_model, fsp_rank), jnp.float32,
                                 -scale_dm, scale_dm),
        "b1": jnp.zeros((1, fsp_rank), jnp.float32),
        "w2": jax.random.uniform(k3, (fsp_rank, d_model), jnp.float32,
                                 -scale_fr, scale_fr),
        "b2": jnp.zeros((1, d_model), jnp.float32),
    }


def _reference(x, params):
    """Pure-JAX f32 reference (exact-erf GELU), matching the PyTorch module."""
    def ln(v, w, b):
        mu = jnp.mean(v, -1, keepdims=True)
        var = jnp.mean((v - mu) ** 2, -1, keepdims=True)
        return (v - mu) * jax.lax.rsqrt(var + _LN_EPS) * w + b

    h = ln(x, params["ln1_w"][0], params["ln1_b"][0])
    u = h @ params["w_down"]
    s = u * jnp.tanh(u)
    sia = s @ params["w_dq"]
    norm_sia = jnp.sqrt(jnp.sum(sia * sia))
    g = ln(x + sia, params["ln2_w"][0], params["ln2_b"][0])
    h1 = g @ params["w1"] + params["b1"][0]
    h1 = jax.nn.gelu(h1, approximate=False)
    z = h1 @ params["w2"] + params["b2"][0]
    norm_ffn = jnp.sqrt(jnp.sum(z * z))
    alpha = norm_sia / (norm_sia + norm_ffn + _ALPHA_EPS)
    return x + alpha * sia + z


if __name__ == "__main__":
    B, S, D = 2, 200, 32        # N = 400 -> 2 tiles (exercises row mask + megacore split)
    SIA_R, FSP_RANK = 8, 64     # low-rank sizes (lane-padded to 128 inside the wrapper)

    key = jax.random.PRNGKey(0)
    kx, kp = jax.random.split(key)
    x = jax.random.normal(kx, (B, S, D), jnp.float32)
    params = prepare_params(init_params(kp, D, SIA_R, FSP_RANK))  # pad/cast once, outside jit

    fwd = jax.jit(spectral_block)
    out = jax.block_until_ready(fwd(x, params))

    assert out.shape == (B, S, D) and out.dtype == jnp.float32
    assert bool(jnp.all(jnp.isfinite(out)))

    # Loose tolerance: kernel uses bf16 MXU inputs / bf16 sia store + tanh-GELU vs f32 ref.
    ref = _reference(x, params | init_params(kp, D, SIA_R, FSP_RANK))  # ref needs f32 weights
    ref = _reference(x, init_params(kp, D, SIA_R, FSP_RANK))
    max_err = float(jnp.max(jnp.abs(out - ref)))
    assert max_err < 0.1, f"max abs err {max_err}"
    print("KERNEL_OK")
</pallas_src>

<mosaic_0001>
module attributes {stable_mosaic.version = 11 : i64} {
  func.func @kernel(%arg0: i32, %arg1: memref<208x128xf32, #tpu.memory_space<vmem>>, %arg2: memref<1x128xf32, #tpu.memory_space<vmem>>, %arg3: memref<1x128xf32, #tpu.memory_space<vmem>>, %arg4: memref<128x128xbf16, #tpu.memory_space<vmem>>, %arg5: memref<128x128xbf16, #tpu.memory_space<vmem>>, %arg6: memref<1x128xf32, #tpu.memory_space<vmem>>, %arg7: memref<1x128xf32, #tpu.memory_space<vmem>>, %arg8: memref<128x128xbf16, #tpu.memory_space<vmem>>, %arg9: memref<1x128xf32, #tpu.memory_space<vmem>>, %arg10: memref<128x128xbf16, #tpu.memory_space<vmem>>, %arg11: memref<1x128xf32, #tpu.memory_space<vmem>>, %arg12: memref<208x128xbf16, #tpu.memory_space<vmem>>, %arg13: memref<208x128xf32, #tpu.memory_space<vmem>>, %arg14: memref<8x256xf32, #tpu.memory_space<vmem>>) attributes {dimension_semantics = [#tpu.dimension_semantics<parallel>], iteration_bounds = array<i64: 2>, scalar_prefetch = 0 : i64, scratch_operands = 0 : i64, tpu.core_type = #tpu.core_type<tc>, window_params = [{transform_indices = @transform_0, window_bounds = array<i64: 208, 128>}, {pipeline_mode = #tpu.pipeline_mode<synchronous>, transform_indices = @transform_1, window_bounds = array<i64: 1, 128>}, {pipeline_mode = #tpu.pipeline_mode<synchronous>, transform_indices = @transform_2, window_bounds = array<i64: 1, 128>}, {pipeline_mode = #tpu.pipeline_mode<synchronous>, transform_indices = @transform_3, window_bounds = array<i64: 128, 128>}, {pipeline_mode = #tpu.pipeline_mode<synchronous>, transform_indices = @transform_4, window_bounds = array<i64: 128, 128>}, {pipeline_mode = #tpu.pipeline_mode<synchronous>, transform_indices = @transform_5, window_bounds = array<i64: 1, 128>}, {pipeline_mode = #tpu.pipeline_mode<synchronous>, transform_indices = @transform_6, window_bounds = array<i64: 1, 128>}, {pipeline_mode = #tpu.pipeline_mode<synchronous>, transform_indices = @transform_7, window_bounds = array<i64: 128, 128>}, {pipeline_mode = #tpu.pipeline_mode<synchronous>, transform_indices = @transform_8, window_bounds = array<i64: 1, 128>}, {pipeline_mode = #tpu.pipeline_mode<synchronous>, transform_indices = @transform_9, window_bounds = array<i64: 128, 128>}, {pipeline_mode = #tpu.pipeline_mode<synchronous>, transform_indices = @transform_10, window_bounds = array<i64: 1, 128>}, {transform_indices = @transform_11, window_bounds = array<i64: 208, 128>}, {transform_indices = @transform_12, window_bounds = array<i64: 208, 128>}, {transform_indices = @transform_13, window_bounds = array<i64: 8, 256>}]} {
    %c0 = arith.constant 0 : index
    %c0_0 = arith.constant 0 : index
    %0 = vector.load %arg1[%c0, %c0_0] : memref<208x128xf32, #tpu.memory_space<vmem>>, vector<208x128xf32>
    %1 = tpu.iota {dimensions = array<i32: 1>} : vector<1x128xi32>
    %c32_i32 = arith.constant 32 : i32
    %2 = vector.broadcast %c32_i32 : i32 to vector<1x128xi32>
    %3 = arith.cmpi slt, %1, %2 : vector<1x128xi32>
    %4 = arith.extui %3 : vector<1x128xi1> to vector<1x128xi32>
    %5 = arith.sitofp %4 : vector<1x128xi32> to vector<1x128xf32>
    %c0_1 = arith.constant 0 : index
    %c0_2 = arith.constant 0 : index
    %6 = vector.load %arg2[%c0_1, %c0_2] : memref<1x128xf32, #tpu.memory_space<vmem>>, vector<1x128xf32>
    %c0_3 = arith.constant 0 : index
    %c0_4 = arith.constant 0 : index
    %7 = vector.load %arg3[%c0_3, %c0_4] : memref<1x128xf32, #tpu.memory_space<vmem>>, vector<1x128xf32>
    %cst = arith.constant dense<0.000000e+00> : vector<208xf32>
    %8 = vector.multi_reduction <add>, %0, %cst [1] : vector<208x128xf32> to vector<208xf32>
    %9 = vector.shape_cast %8 : vector<208xf32> to vector<208x1xf32>
    %cst_5 = arith.constant 3.125000e-02 : f32
    %10 = vector.broadcast %cst_5 : f32 to vector<208x1xf32>
    %11 = arith.mulf %9, %10 : vector<208x1xf32>
    %12 = vector.broadcast %11 : vector<208x1xf32> to vector<208x128xf32>
    %13 = arith.subf %0, %12 : vector<208x128xf32>
    %14 = vector.broadcast %5 : vector<1x128xf32> to vector<208x128xf32>
    %15 = arith.mulf %13, %14 : vector<208x128xf32>
    %16 = arith.mulf %15, %15 : vector<208x128xf32>
    %cst_6 = arith.constant dense<0.000000e+00> : vector<208xf32>
    %17 = vector.multi_reduction <add>, %16, %cst_6 [1] : vector<208x128xf32> to vector<208xf32>
    %18 = vector.shape_cast %17 : vector<208xf32> to vector<208x1xf32>
    %cst_7 = arith.constant 3.125000e-02 : f32
    %19 = vector.broadcast %cst_7 : f32 to vector<208x1xf32>
    %20 = arith.mulf %18, %19 : vector<208x1xf32>
    %cst_8 = arith.constant 9.99999974E-6 : f32
    %21 = vector.broadcast %cst_8 : f32 to vector<208x1xf32>
    %22 = arith.addf %20, %21 : vector<208x1xf32>
    %23 = math.rsqrt %22 : vector<208x1xf32>
    %24 = vector.broadcast %23 : vector<208x1xf32> to vector<208x128xf32>
    %25 = arith.mulf %15, %24 : vector<208x128xf32>
    %26 = vector.broadcast %6 : vector<1x128xf32> to vector<208x128xf32>
    %27 = arith.mulf %25, %26 : vector<208x128xf32>
    %28 = vector.broadcast %7 : vector<1x128xf32> to vector<208x128xf32>
    %29 = arith.addf %27, %28 : vector<208x128xf32>
    %30 = arith.truncf %29 : vector<208x128xf32> to vector<208x128xbf16>
    %c0_9 = arith.constant 0 : index
    %c0_10 = arith.constant 0 : index
    %31 = vector.load %arg4[%c0_9, %c0_10] : memref<128x128xbf16, #tpu.memory_space<vmem>>, vector<128x128xbf16>
    %cst_11 = arith.constant dense<0.000000e+00> : vector<208x128xf32>
    %32 = tpu.matmul %30, %31, %cst_11 {dimension_numbers = #tpu.dot_dimension_numbers<[1], [0], [0], [1], [0, 0, 1, 1], [], []>} : vector<208x128xbf16>, vector<128x128xbf16>, vector<208x128xf32> -> vector<208x128xf32>
    %33 = math.tanh %32 : vector<208x128xf32>
    %34 = arith.mulf %32, %33 : vector<208x128xf32>
    %35 = arith.truncf %34 : vector<208x128xf32> to vector<208x128xbf16>
    %c0_12 = arith.constant 0 : index
    %c0_13 = arith.constant 0 : index
    %36 = vector.load %arg5[%c0_12, %c0_13] : memref<128x128xbf16, #tpu.memory_space<vmem>>, vector<128x128xbf16>
    %cst_14 = arith.constant dense<0.000000e+00> : vector<208x128xf32>
    %37 = tpu.matmul %35, %36, %cst_14 {dimension_numbers = #tpu.dot_dimension_numbers<[1], [0], [0], [1], [0, 0, 1, 1], [], []>} : vector<208x128xbf16>, vector<128x128xbf16>, vector<208x128xf32> -> vector<208x128xf32>
    %38 = arith.truncf %37 : vector<208x128xf32> to vector<208x128xbf16>
    %c0_15 = arith.constant 0 : index
    %c0_16 = arith.constant 0 : index
    %39 = vector.load %arg12[%c0_15, %c0_16] : memref<208x128xbf16, #tpu.memory_space<vmem>>, vector<208x128xbf16>
    tpu.vector_store %arg12[%c0_15, %c0_16], %38 {strides = array<i32>} : memref<208x128xbf16, #tpu.memory_space<vmem>>, vector<208x128xbf16>,
    %40 = arith.addf %0, %37 : vector<208x128xf32>
    %c0_17 = arith.constant 0 : index
    %c0_18 = arith.constant 0 : index
    %41 = vector.load %arg6[%c0_17, %c0_18] : memref<1x128xf32, #tpu.memory_space<vmem>>, vector<1x128xf32>
    %c0_19 = arith.constant 0 : index
    %c0_20 = arith.constant 0 : index
    %42 = vector.load %arg7[%c0_19, %c0_20] : memref<1x128xf32, #tpu.memory_space<vmem>>, vector<1x128xf32>
    %cst_21 = arith.constant dense<0.000000e+00> : vector<208xf32>
    %43 = vector.multi_reduction <add>, %40, %cst_21 [1] : vector<208x128xf32> to vector<208xf32>
    %44 = vector.shape_cast %43 : vector<208xf32> to vector<208x1xf32>
    %cst_22 = arith.constant 3.125000e-02 : f32
    %45 = vector.broadcast %cst_22 : f32 to vector<208x1xf32>
    %46 = arith.mulf %44, %45 : vector<208x1xf32>
    %47 = vector.broadcast %46 : vector<208x1xf32> to vector<208x128xf32>
    %48 = arith.subf %40, %47 : vector<208x128xf32>
    %49 = vector.broadcast %5 : vector<1x128xf32> to vector<208x128xf32>
    %50 = arith.mulf %48, %49 : vector<208x128xf32>
    %51 = arith.mulf %50, %50 : vector<208x128xf32>
    %cst_23 = arith.constant dense<0.000000e+00> : vector<208xf32>
    %52 = vector.multi_reduction <add>, %51, %cst_23 [1] : vector<208x128xf32> to vector<208xf32>
    %53 = vector.shape_cast %52 : vector<208xf32> to vector<208x1xf32>
    %cst_24 = arith.constant 3.125000e-02 : f32
    %54 = vector.broadcast %cst_24 : f32 to vector<208x1xf32>
    %55 = arith.mulf %53, %54 : vector<208x1xf32>
    %cst_25 = arith.constant 9.99999974E-6 : f32
    %56 = vector.broadcast %cst_25 : f32 to vector<208x1xf32>
    %57 = arith.addf %55, %56 : vector<208x1xf32>
    %58 = math.rsqrt %57 : vector<208x1xf32>
    %59 = vector.broadcast %58 : vector<208x1xf32> to vector<208x128xf32>
    %60 = arith.mulf %50, %59 : vector<208x128xf32>
    %61 = vector.broadcast %41 : vector<1x128xf32> to vector<208x128xf32>
    %62 = arith.mulf %60, %61 : vector<208x128xf32>
    %63 = vector.broadcast %42 : vector<1x128xf32> to vector<208x128xf32>
    %64 = arith.addf %62, %63 : vector<208x128xf32>
    %65 = arith.truncf %64 : vector<208x128xf32> to vector<208x128xbf16>
    %c0_26 = arith.constant 0 : index
    %c0_27 = arith.constant 0 : index
    %66 = vector.load %arg8[%c0_26, %c0_27] : memref<128x128xbf16, #tpu.memory_space<vmem>>, vector<128x128xbf16>
    %cst_28 = arith.constant dense<0.000000e+00> : vector<208x128xf32>
    %67 = tpu.matmul %65, %66, %cst_28 {dimension_numbers = #tpu.dot_dimension_numbers<[1], [0], [0], [1], [0, 0, 1, 1], [], []>} : vector<208x128xbf16>, vector<128x128xbf16>, vector<208x128xf32> -> vector<208x128xf32>
    %c0_29 = arith.constant 0 : index
    %c0_30 = arith.constant 0 : index
    %68 = vector.load %arg9[%c0_29, %c0_30] : memref<1x128xf32, #tpu.memory_space<vmem>>, vector<1x128xf32>
    %69 = vector.broadcast %68 : vector<1x128xf32> to vector<208x128xf32>
    %70 = arith.addf %67, %69 : vector<208x128xf32>
    %cst_31 = arith.constant 5.000000e-01 : f32
    %71 = vector.broadcast %cst_31 : f32 to vector<208x128xf32>
    %72 = arith.mulf %71, %70 : vector<208x128xf32>
    %cst_32 = arith.constant 4.471500e-02 : f32
    %73 = vector.broadcast %cst_32 : f32 to vector<208x128xf32>
    %74 = arith.mulf %73, %70 : vector<208x128xf32>
    %75 = arith.mulf %74, %70 : vector<208x128xf32>
    %76 = arith.mulf %75, %70 : vector<208x128xf32>
    %77 = arith.addf %70, %76 : vector<208x128xf32>
    %cst_33 = arith.constant 0.797884583 : f32
    %78 = vector.broadcast %cst_33 : f32 to vector<208x128xf32>
    %79 = arith.mulf %78, %77 : vector<208x128xf32>
    %80 = math.tanh %79 : vector<208x128xf32>
    %cst_34 = arith.constant 1.000000e+00 : f32
    %81 = vector.broadcast %cst_34 : f32 to vector<208x128xf32>
    %82 = arith.addf %81, %80 : vector<208x128xf32>
    %83 = arith.mulf %72, %82 : vector<208x128xf32>
    %84 = arith.truncf %83 : vector<208x128xf32> to vector<208x128xbf16>
    %c0_35 = arith.constant 0 : index
    %c0_36 = arith.constant 0 : index
    %85 = vector.load %arg10[%c0_35, %c0_36] : memref<128x128xbf16, #tpu.memory_space<vmem>>, vector<128x128xbf16>
    %cst_37 = arith.constant dense<0.000000e+00> : vector<208x128xf32>
    %86 = tpu.matmul %84, %85, %cst_37 {dimension_numbers = #tpu.dot_dimension_numbers<[1], [0], [0], [1], [0, 0, 1, 1], [], []>} : vector<208x128xbf16>, vector<128x128xbf16>, vector<208x128xf32> -> vector<208x128xf32>
    %c0_38 = arith.constant 0 : index
    %c0_39 = arith.constant 0 : index
    %87 = vector.load %arg11[%c0_38, %c0_39] : memref<1x128xf32, #tpu.memory_space<vmem>>, vector<1x128xf32>
    %88 = vector.broadcast %87 : vector<1x128xf32> to vector<208x128xf32>
    %89 = arith.addf %86, %88 : vector<208x128xf32>
    %90 = arith.addf %0, %89 : vector<208x128xf32>
    %c0_40 = arith.constant 0 : index
    %c0_41 = arith.constant 0 : index
    %91 = vector.load %arg13[%c0_40, %c0_41] : memref<208x128xf32, #tpu.memory_space<vmem>>, vector<208x128xf32>
    tpu.vector_store %arg13[%c0_40, %c0_41], %90 {strides = array<i32>} : memref<208x128xf32, #tpu.memory_space<vmem>>, vector<208x128xf32>,
    %92 = arith.mulf %37, %37 : vector<208x128xf32>
    %cst_42 = arith.constant dense<0.000000e+00> : vector<208xf32>
    %93 = vector.multi_reduction <add>, %92, %cst_42 [1] : vector<208x128xf32> to vector<208xf32>
    %94 = vector.shape_cast %93 : vector<208xf32> to vector<208x1xf32>
    %95 = arith.mulf %89, %89 : vector<208x128xf32>
    %cst_43 = arith.constant dense<0.000000e+00> : vector<208xf32>
    %96 = vector.multi_reduction <add>, %95, %cst_43 [1] : vector<208x128xf32> to vector<208xf32>
    %97 = vector.shape_cast %96 : vector<208xf32> to vector<208x1xf32>
    %c208_i32 = arith.constant 208 : i32
    %98 = arith.muli %arg0, %c208_i32 : i32
    %99 = tpu.iota {dimensions = array<i32: 0>} : vector<208x1xi32>
    %100 = vector.broadcast %98 : i32 to vector<208x1xi32>
    %101 = arith.addi %100, %99 : vector<208x1xi32>
    %c400_i32 = arith.constant 400 : i32
    %102 = vector.broadcast %c400_i32 : i32 to vector<208x1xi32>
    %103 = arith.cmpi slt, %101, %102 : vector<208x1xi32>
    %104 = arith.extui %103 : vector<208x1xi1> to vector<208x1xi32>
    %105 = arith.sitofp %104 : vector<208x1xi32> to vector<208x1xf32>
    %106 = arith.mulf %94, %105 : vector<208x1xf32>
    %107 = arith.mulf %97, %105 : vector<208x1xf32>
    %cst_44 = arith.constant 0.000000e+00 : f32
    %108 = vector.broadcast %cst_44 : f32 to vector<8x128xf32>
    %109 = vector.shape_cast %106 : vector<208x1xf32> to vector<1x208x1xf32>
    %cst_45 = arith.constant dense<0.000000e+00> : vector<1xf32>
    %110 = vector.multi_reduction <add>, %109, %cst_45 [1, 2] : vector<1x208x1xf32> to vector<1xf32>
    %111 = vector.shape_cast %110 : vector<1xf32> to vector<1x1x1xf32>
    %112 = vector.extract %111[0, 0, 0] : f32 from vector<1x1x1xf32>
    %113 = vector.broadcast %112 : f32 to vector<8x128xf32>
    %114 = arith.addf %108, %113 : vector<8x128xf32>
    %c0_46 = arith.constant 0 : index
    %c0_47 = arith.constant 0 : index
    %115 = vector.load %arg14[%c0_46, %c0_47] : memref<8x256xf32, #tpu.memory_space<vmem>>, vector<8x128xf32>
    tpu.vector_store %arg14[%c0_46, %c0_47], %114 {strides = array<i32>} : memref<8x256xf32, #tpu.memory_space<vmem>>, vector<8x128xf32>,
    %cst_48 = arith.constant 0.000000e+00 : f32
    %116 = vector.broadcast %cst_48 : f32 to vector<8x128xf32>
    %117 = vector.shape_cast %107 : vector<208x1xf32> to vector<1x208x1xf32>
    %cst_49 = arith.constant dense<0.000000e+00> : vector<1xf32>
    %118 = vector.multi_reduction <add>, %117, %cst_49 [1, 2] : vector<1x208x1xf32> to vector<1xf32>
    %119 = vector.shape_cast %118 : vector<1xf32> to vector<1x1x1xf32>
    %120 = vector.extract %119[0, 0, 0] : f32 from vector<1x1x1xf32>
    %121 = vector.broadcast %120 : f32 to vector<8x128xf32>
    %122 = arith.addf %116, %121 : vector<8x128xf32>
    %c0_50 = arith.constant 0 : index
    %c128 = arith.constant 128 : index
    %123 = vector.load %arg14[%c0_50, %c128] : memref<8x256xf32, #tpu.memory_space<vmem>>, vector<8x128xf32>
    tpu.vector_store %arg14[%c0_50, %c128], %122 {strides = array<i32>} : memref<8x256xf32, #tpu.memory_space<vmem>>, vector<8x128xf32>,
    return
  }
  func.func @transform_0(%arg0: i32) -> (i32, i32) {
    %c0_i32 = arith.constant 0 : i32
    %c0_i32_0 = arith.constant 0 : i32
    return %arg0, %c0_i32 : i32, i32
  }
  func.func @transform_1(%arg0: i32) -> (i32, i32) {
    %c0_i32 = arith.constant 0 : i32
    %c0_i32_0 = arith.constant 0 : i32
    %c0_i32_1 = arith.constant 0 : i32
    return %c0_i32, %c0_i32_0 : i32, i32
  }
  func.func @transform_2(%arg0: i32) -> (i32, i32) {
    %c0_i32 = arith.constant 0 : i32
    %c0_i32_0 = arith.constant 0 : i32
    %c0_i32_1 = arith.constant 0 : i32
    return %c0_i32, %c0_i32_0 : i32, i32
  }
  func.func @transform_3(%arg0: i32) -> (i32, i32) {
    %c0_i32 = arith.constant 0 : i32
    %c0_i32_0 = arith.constant 0 : i32
    %c0_i32_1 = arith.constant 0 : i32
    return %c0_i32, %c0_i32_0 : i32, i32
  }
  func.func @transform_4(%arg0: i32) -> (i32, i32) {
    %c0_i32 = arith.constant 0 : i32
    %c0_i32_0 = arith.constant 0 : i32
    %c0_i32_1 = arith.constant 0 : i32
    return %c0_i32, %c0_i32_0 : i32, i32
  }
  func.func @transform_5(%arg0: i32) -> (i32, i32) {
    %c0_i32 = arith.constant 0 : i32
    %c0_i32_0 = arith.constant 0 : i32
    %c0_i32_1 = arith.constant 0 : i32
    return %c0_i32, %c0_i32_0 : i32, i32
  }
  func.func @transform_6(%arg0: i32) -> (i32, i32) {
    %c0_i32 = arith.constant 0 : i32
    %c0_i32_0 = arith.constant 0 : i32
    %c0_i32_1 = arith.constant 0 : i32
    return %c0_i32, %c0_i32_0 : i32, i32
  }
  func.func @transform_7(%arg0: i32) -> (i32, i32) {
    %c0_i32 = arith.constant 0 : i32
    %c0_i32_0 = arith.constant 0 : i32
    %c0_i32_1 = arith.constant 0 : i32
    return %c0_i32, %c0_i32_0 : i32, i32
  }
  func.func @transform_8(%arg0: i32) -> (i32, i32) {
    %c0_i32 = arith.constant 0 : i32
    %c0_i32_0 = arith.constant 0 : i32
    %c0_i32_1 = arith.constant 0 : i32
    return %c0_i32, %c0_i32_0 : i32, i32
  }
  func.func @transform_9(%arg0: i32) -> (i32, i32) {
    %c0_i32 = arith.constant 0 : i32
    %c0_i32_0 = arith.constant 0 : i32
    %c0_i32_1 = arith.constant 0 : i32
    return %c0_i32, %c0_i32_0 : i32, i32
  }
  func.func @transform_10(%arg0: i32) -> (i32, i32) {
    %c0_i32 = arith.constant 0 : i32
    %c0_i32_0 = arith.constant 0 : i32
    %c0_i32_1 = arith.constant 0 : i32
    return %c0_i32, %c0_i32_0 : i32, i32
  }
  func.func @transform_11(%arg0: i32) -> (i32, i32) {
    %c0_i32 = arith.constant 0 : i32
    %c0_i32_0 = arith.constant 0 : i32
    return %arg0, %c0_i32 : i32, i32
  }
  func.func @transform_12(%arg0: i32) -> (i32, i32) {
    %c0_i32 = arith.constant 0 : i32
    %c0_i32_0 = arith.constant 0 : i32
    return %arg0, %c0_i32 : i32, i32
  }
  func.func @transform_13(%arg0: i32) -> (i32, i32) {
    %c0_i32 = arith.constant 0 : i32
    %c0_i32_0 = arith.constant 0 : i32
    return %arg0, %c0_i32 : i32, i32
  }
}

</mosaic_0001>

<llo_original>
// kernel: spectral_block.1
$region0: #{spectral_block.1}
  #allocation0 [shape = 'u32[]', space=smem, size = 0x4, offset = 0x4, fixed_abs, tag = 'smem constant byte address 0x4 - core index']
  #allocation1 [shape = 'u32[144,128]{1,0:T(1,128)}', space=vmem, size = 0x12000, scoped, tag = 'internal scratch']
  %s0 = inlined_call_operand.vmem [shape: f32[416,128], index: 0, kind: input, shape index: {}]
  %s1 = inlined_call_operand.vmem [shape: f32[1,128], index: 1, kind: input, shape index: {}]
  %s2 = inlined_call_operand.vmem [shape: f32[1,128], index: 2, kind: input, shape index: {}]
  %s3 = inlined_call_operand.vmem [shape: bf16[128,128], index: 3, kind: input, shape index: {}]
  %s4 = inlined_call_operand.vmem [shape: bf16[128,128], index: 4, kind: input, shape index: {}]
  %s5 = inlined_call_operand.vmem [shape: f32[1,128], index: 5, kind: input, shape index: {}]
  %s6 = inlined_call_operand.vmem [shape: f32[1,128], index: 6, kind: input, shape index: {}]
  %s7 = inlined_call_operand.vmem [shape: bf16[128,128], index: 7, kind: input, shape index: {}]
  %s8 = inlined_call_operand.vmem [shape: f32[1,128], index: 8, kind: input, shape index: {}]
  %s9 = inlined_call_operand.vmem [shape: bf16[128,128], index: 9, kind: input, shape index: {}]
  %s10 = inlined_call_operand.vmem [shape: f32[1,128], index: 10, kind: input, shape index: {}]
  %s11 = inlined_call_operand.vmem [shape: bf16[416,128], index: 11, kind: output, shape index: {0}]
  %s12 = inlined_call_operand.vmem [shape: f32[416,128], index: 12, kind: output, shape index: {1}]
  %s13 = inlined_call_operand.vmem [shape: f32[16,256], index: 13, kind: output, shape index: {2}]
  %14 = xla_tuple %s11, %s12, %s13
  %s15 = sld [smem:[#allocation0]]
  $region93: #{spectral_block.1} parent=0
    _
  %s17 = ssub.s32 1, %s15
  %s18 = scalar_select 0, %s17, %s15
  loop: start=0, step=1, limit=4
  $region2: #{spectral_block.1} parent=0 // loop_pre_header
    _
  $region3: #{spectral_block.1} parent=0 // loop_header
    %s20 = sphi 0, %s24
    %p21 = scmp.ge.s32.totalorder %s20, 4
    %s30 = sphi 0, %s32
    %s33 = sphi 0, %s30
    %s34 = sphi 0, %s33
    %s50 = sphi 0, %s34
    %s54 = sphi 0, %s54
    %s56 = sphi 0, %s54
    %s57 = sphi 0, %s56
    %s71 = sphi 0, %s57
    %s75 = sphi 0, %s75
    %s77 = sphi 0, %s75
    %s78 = sphi 0, %s77
    %s92 = sphi 0, %s78
    %s96 = sphi 0, %s96
    %s98 = sphi 0, %s96
    %s99 = sphi 0, %s98
    %s113 = sphi 0, %s99
    %s117 = sphi 0, %s117
    %s119 = sphi 0, %s117
    %s120 = sphi 0, %s119
    %s134 = sphi 0, %s120
    %s138 = sphi 0, %s138
    %s140 = sphi 0, %s138
    %s141 = sphi 0, %s140
    %s155 = sphi 0, %s141
    %s159 = sphi 0, %s159
    %s161 = sphi 0, %s159
    %s162 = sphi 0, %s161
    %s176 = sphi 0, %s162
    %s180 = sphi 0, %s180
    %s182 = sphi 0, %s180
    %s183 = sphi 0, %s182
    %s197 = sphi 0, %s183
    %s201 = sphi 0, %s201
    %s203 = sphi 0, %s201
    %s204 = sphi 0, %s203
    %s218 = sphi 0, %s204
    %s222 = sphi 0, %s222
    %s224 = sphi 0, %s222
    %s225 = sphi 0, %s224
    %s239 = sphi 0, %s225
    %s243 = sphi 0, %s243
    %s245 = sphi 0, %s243
    %s246 = sphi 0, %s245
    %s260 = sphi 0, %s246
    %s266 = sphi 0, %s268
    %s269 = sphi 0, %s266
    %s270 = sphi 0, %s269
    %s286 = sphi 0, %s270
    %s292 = sphi 0, %s294
    %s295 = sphi 0, %s292
    %s296 = sphi 0, %s295
    %s312 = sphi 0, %s296
    %s318 = sphi 0, %s320
    %s321 = sphi 0, %s318
    %s322 = sphi 0, %s321
    %s338 = sphi 0, %s322
  $region4: #{spectral_block.1} parent=0 // loop_header_branch
    %23 = sbr.rel (%p21) target = $region8
  $region5: #{spectral_block.1} parent=0 // loop_body
    %s25 = ssub.s32 %s20, 1
    %s26 = ssub.s32 %s20, 2
    %s27 = sadd.s32 %s20, 1
    %s28 = ssub.s32 %s20, %s27
    %p29 = scmp.eq.s32.totalorder %s28, 0
    %s31 = sadd.s32 %s30, 1
    %s32 = scalar_select %p29, %s30, %s31
    %p35 = pneg %p29
    %p36 = scmp.eq.s32.totalorder %s20, 1
    %p37 = por %p35, %p36
    %p38 = scmp.ne.s32.totalorder %s30, %s33
    %p39 = scmp.eq.s32.totalorder %s20, 0
    %p40 = por %p38, %p39
    %p41 = scmp.ne.s32.totalorder %s30, %s33
    %p42 = scmp.eq.s32.totalorder %s25, 1
    %p43 = por %p41, %p42
    %p44 = scmp.ne.s32.totalorder %s33, %s34
    %p45 = scmp.eq.s32.totalorder %s25, 0
    %p46 = por %p44, %p45
    %p47 = scmp.ne.s32.totalorder %s33, %s34
    %p48 = scmp.eq.s32.totalorder %s26, 1
    %p49 = por %p47, %p48
    %p51 = scmp.ne.s32.totalorder %s34, %s50
    %p52 = scmp.eq.s32.totalorder %s26, 0
    %p53 = por %p51, %p52
    %s55 = sadd.s32 %s54, 1
    %p58 = scmp.eq.s32.totalorder %s20, 1
    %p59 = scmp.ne.s32.totalorder %s54, %s56
    %p60 = scmp.eq.s32.totalorder %s20, 0
    %p61 = por %p59, %p60
    %p62 = scmp.ne.s32.totalorder %s54, %s56
    %p63 = scmp.eq.s32.totalorder %s25, 1
    %p64 = por %p62, %p63
    %p65 = scmp.ne.s32.totalorder %s56, %s57
    %p66 = scmp.eq.s32.totalorder %s25, 0
    %p67 = por %p65, %p66
    %p68 = scmp.ne.s32.totalorder %s56, %s57
    %p69 = scmp.eq.s32.totalorder %s26, 1
    %p70 = por %p68, %p69
    %p72 = scmp.ne.s32.totalorder %s57, %s71
    %p73 = scmp.eq.s32.totalorder %s26, 0
    %p74 = por %p72, %p73
    %s76 = sadd.s32 %s75, 1
    %p79 = scmp.eq.s32.totalorder %s20, 1
    %p80 = scmp.ne.s32.totalorder %s75, %s77
    %p81 = scmp.eq.s32.totalorder %s20, 0
    %p82 = por %p80, %p81
    %p83 = scmp.ne.s32.totalorder %s75, %s77
    %p84 = scmp.eq.s32.totalorder %s25, 1
    %p85 = por %p83, %p84
    %p86 = scmp.ne.s32.totalorder %s77, %s78
    %p87 = scmp.eq.s32.totalorder %s25, 0
    %p88 = por %p86, %p87
    %p89 = scmp.ne.s32.totalorder %s77, %s78
    %p90 = scmp.eq.s32.totalorder %s26, 1
    %p91 = por %p89, %p90
    %p93 = scmp.ne.s32.totalorder %s78, %s92
    %p94 = scmp.eq.s32.totalorder %s26, 0
    %p95 = por %p93, %p94
    %s97 = sadd.s32 %s96, 1
    %p100 = scmp.eq.s32.totalorder %s20, 1
    %p101 = scmp.ne.s32.totalorder %s96, %s98
    %p102 = scmp.eq.s32.totalorder %s20, 0
    %p103 = por %p101, %p102
    %p104 = scmp.ne.s32.totalorder %s96, %s98
    %p105 = scmp.eq.s32.totalorder %s25, 1
    %p106 = por %p104, %p105
    %p107 = scmp.ne.s32.totalorder %s98, %s99
    %p108 = scmp.eq.s32.totalorder %s25, 0
    %p109 = por %p107, %p108
    %p110 = scmp.ne.s32.totalorder %s98, %s99
    %p111 = scmp.eq.s32.totalorder %s26, 1
    %p112 = por %p110, %p111
    %p114 = scmp.ne.s32.totalorder %s99, %s113
    %p115 = scmp.eq.s32.totalorder %s26, 0
    %p116 = por %p114, %p115
    %s118 = sadd.s32 %s117, 1
    %p121 = scmp.eq.s32.totalorder %s20, 1
    %p122 = scmp.ne.s32.totalorder %s117, %s119
    %p123 = scmp.eq.s32.totalorder %s20, 0
    %p124 = por %p122, %p123
    %p125 = scmp.ne.s32.totalorder %s117, %s119
    %p126 = scmp.eq.s32.totalorder %s25, 1
    %p127 = por %p125, %p126
    %p128 = scmp.ne.s32.totalorder %s119, %s120
    %p129 = scmp.eq.s32.totalorder %s25, 0
    %p130 = por %p128, %p129
    %p131 = scmp.ne.s32.totalorder %s119, %s120
    %p132 = scmp.eq.s32.totalorder %s26, 1
    %p133 = por %p131, %p132
    %p135 = scmp.ne.s32.totalorder %s120, %s134
    %p136 = scmp.eq.s32.totalorder %s26, 0
    %p137 = por %p135, %p136
    %s139 = sadd.s32 %s138, 1
    %p142 = scmp.eq.s32.totalorder %s20, 1
    %p143 = scmp.ne.s32.totalorder %s138, %s140
    %p144 = scmp.eq.s32.totalorder %s20, 0
    %p145 = por %p143, %p144
    %p146 = scmp.ne.s32.totalorder %s138, %s140
    %p147 = scmp.eq.s32.totalorder %s25, 1
    %p148 = por %p146, %p147
    %p149 = scmp.ne.s32.totalorder %s140, %s141
    %p150 = scmp.eq.s32.totalorder %s25, 0
    %p151 = por %p149, %p150
    %p152 = scmp.ne.s32.totalorder %s140, %s141
    %p153 = scmp.eq.s32.totalorder %s26, 1
    %p154 = por %p152, %p153
    %p156 = scmp.ne.s32.totalorder %s141, %s155
    %p157 = scmp.eq.s32.totalorder %s26, 0
    %p158 = por %p156, %p157
    %s160 = sadd.s32 %s159, 1
    %p163 = scmp.eq.s32.totalorder %s20, 1
    %p164 = scmp.ne.s32.totalorder %s159, %s161
    %p165 = scmp.eq.s32.totalorder %s20, 0
    %p166 = por %p164, %p165
    %p167 = scmp.ne.s32.totalorder %s159, %s161
    %p168 = scmp.eq.s32.totalorder %s25, 1
    %p169 = por %p167, %p168
    %p170 = scmp.ne.s32.totalorder %s161, %s162
    %p171 = scmp.eq.s32.totalorder %s25, 0
    %p172 = por %p170, %p171
    %p173 = scmp.ne.s32.totalorder %s161, %s162
    %p174 = scmp.eq.s32.totalorder %s26, 1
    %p175 = por %p173, %p174
    %p177 = scmp.ne.s32.totalorder %s162, %s176
    %p178 = scmp.eq.s32.totalorder %s26, 0
    %p179 = por %p177, %p178
    %s181 = sadd.s32 %s180, 1
    %p184 = scmp.eq.s32.totalorder %s20, 1
    %p185 = scmp.ne.s32.totalorder %s180, %s182
    %p186 = scmp.eq.s32.totalorder %s20, 0
    %p187 = por %p185, %p186
    %p188 = scmp.ne.s32.totalorder %s180, %s182
    %p189 = scmp.eq.s32.totalorder %s25, 1
    %p190 = por %p188, %p189
    %p191 = scmp.ne.s32.totalorder %s182, %s183
    %p192 = scmp.eq.s32.totalorder %s25, 0
    %p193 = por %p191, %p192
    %p194 = scmp.ne.s32.totalorder %s182, %s183
    %p195 = scmp.eq.s32.totalorder %s26, 1
    %p196 = por %p194, %p195
    %p198 = scmp.ne.s32.totalorder %s183, %s197
    %p199 = scmp.eq.s32.totalorder %s26, 0
    %p200 = por %p198, %p199
    %s202 = sadd.s32 %s201, 1
    %p205 = scmp.eq.s32.totalorder %s20, 1
    %p206 = scmp.ne.s32.totalorder %s201, %s203
    %p207 = scmp.eq.s32.totalorder %s20, 0
    %p208 = por %p206, %p207
    %p209 = scmp.ne.s32.totalorder %s201, %s203
    %p210 = scmp.eq.s32.totalorder %s25, 1
    %p211 = por %p209, %p210
    %p212 = scmp.ne.s32.totalorder %s203, %s204
    %p213 = scmp.eq.s32.totalorder %s25, 0
    %p214 = por %p212, %p213
    %p215 = scmp.ne.s32.totalorder %s203, %s204
    %p216 = scmp.eq.s32.totalorder %s26, 1
    %p217 = por %p215, %p216
    %p219 = scmp.ne.s32.totalorder %s204, %s218
    %p220 = scmp.eq.s32.totalorder %s26, 0
    %p221 = por %p219, %p220
    %s223 = sadd.s32 %s222, 1
    %p226 = scmp.eq.s32.totalorder %s20, 1
    %p227 = scmp.ne.s32.totalorder %s222, %s224
    %p228 = scmp.eq.s32.totalorder %s20, 0
    %p229 = por %p227, %p228
    %p230 = scmp.ne.s32.totalorder %s222, %s224
    %p231 = scmp.eq.s32.totalorder %s25, 1
    %p232 = por %p230, %p231
    %p233 = scmp.ne.s32.totalorder %s224, %s225
    %p234 = scmp.eq.s32.totalorder %s25, 0
    %p235 = por %p233, %p234
    %p236 = scmp.ne.s32.totalorder %s224, %s225
    %p237 = scmp.eq.s32.totalorder %s26, 1
    %p238 = por %p236, %p237
    %p240 = scmp.ne.s32.totalorder %s225, %s239
    %p241 = scmp.eq.s32.totalorder %s26, 0
    %p242 = por %p240, %p241
    %s244 = sadd.s32 %s243, 1
    %p247 = scmp.eq.s32.totalorder %s20, 1
    %p248 = scmp.ne.s32.totalorder %s243, %s245
    %p249 = scmp.eq.s32.totalorder %s20, 0
    %p250 = por %p248, %p249
    %p251 = scmp.ne.s32.totalorder %s243, %s245
    %p252 = scmp.eq.s32.totalorder %s25, 1
    %p253 = por %p251, %p252
    %p254 = scmp.ne.s32.totalorder %s245, %s246
    %p255 = scmp.eq.s32.totalorder %s25, 0
    %p256 = por %p254, %p255
    %p257 = scmp.ne.s32.totalorder %s245, %s246
    %p258 = scmp.eq.s32.totalorder %s26, 1
    %p259 = por %p257, %p258
    %p261 = scmp.ne.s32.totalorder %s246, %s260
    %p262 = scmp.eq.s32.totalorder %s26, 0
    %p263 = por %p261, %p262
    %s264 = ssub.s32 %s20, %s27
    %p265 = scmp.eq.s32.totalorder %s264, 0
    %s267 = sadd.s32 %s266, 1
    %s268 = scalar_select %p265, %s266, %s267
    %p271 = pneg %p265
    %p272 = scmp.eq.s32.totalorder %s20, 1
    %p273 = por %p271, %p272
    %p274 = scmp.ne.s32.totalorder %s266, %s269
    %p275 = scmp.eq.s32.totalorder %s20, 0
    %p276 = por %p274, %p275
    %p277 = scmp.ne.s32.totalorder %s266, %s269
    %p278 = scmp.eq.s32.totalorder %s25, 1
    %p279 = por %p277, %p278
    %p280 = scmp.ne.s32.totalorder %s269, %s270
    %p281 = scmp.eq.s32.totalorder %s25, 0
    %p282 = por %p280, %p281
    %p283 = scmp.ne.s32.totalorder %s269, %s270
    %p284 = scmp.eq.s32.totalorder %s26, 1
    %p285 = por %p283, %p284
    %p287 = scmp.ne.s32.totalorder %s270, %s286
    %p288 = scmp.eq.s32.totalorder %s26, 0
    %p289 = por %p287, %p288
    %s290 = ssub.s32 %s20, %s27
    %p291 = scmp.eq.s32.totalorder %s290, 0
    %s293 = sadd.s32 %s292, 1
    %s294 = scalar_select %p291, %s292, %s293
    %p297 = pneg %p291
    %p298 = scmp.eq.s32.totalorder %s20, 1
    %p299 = por %p297, %p298
    %p300 = scmp.ne.s32.totalorder %s292, %s295
    %p301 = scmp.eq.s32.totalorder %s20, 0
    %p302 = por %p300, %p301
    %p303 = scmp.ne.s32.totalorder %s292, %s295
    %p304 = scmp.eq.s32.totalorder %s25, 1
    %p305 = por %p303, %p304
    %p306 = scmp.ne.s32.totalorder %s295, %s296
    %p307 = scmp.eq.s32.totalorder %s25, 0
    %p308 = por %p306, %p307
    %p309 = scmp.ne.s32.totalorder %s295, %s296
    %p310 = scmp.eq.s32.totalorder %s26, 1
    %p311 = por %p309, %p310
    %p313 = scmp.ne.s32.totalorder %s296, %s312
    %p314 = scmp.eq.s32.totalorder %s26, 0
    %p315 = por %p313, %p314
    %s316 = ssub.s32 %s20, %s27
    %p317 = scmp.eq.s32.totalorder %s316, 0
    %s319 = sadd.s32 %s318, 1
    %s320 = scalar_select %p317, %s318, %s319
    %p323 = pneg %p317
    %p324 = scmp.eq.s32.totalorder %s20, 1
    %p325 = por %p323, %p324
    %p326 = scmp.ne.s32.totalorder %s318, %s321
    %p327 = scmp.eq.s32.totalorder %s20, 0
    %p328 = por %p326, %p327
    %p329 = scmp.ne.s32.totalorder %s318, %s321
    %p330 = scmp.eq.s32.totalorder %s25, 1
    %p331 = por %p329, %p330
    %p332 = scmp.ne.s32.totalorder %s321, %s322
    %p333 = scmp.eq.s32.totalorder %s25, 0
    %p334 = por %p332, %p333
    %p335 = scmp.ne.s32.totalorder %s321, %s322
    %p336 = scmp.eq.s32.totalorder %s26, 1
    %p337 = por %p335, %p336
    %p339 = scmp.ne.s32.totalorder %s322, %s338
    %p340 = scmp.eq.s32.totalorder %s26, 0
    %p341 = por %p339, %p340
    %p342 = scmp.le.s32.totalorder 1, %s20
    %p343 = scmp.lt.s32.totalorder %s20, 3
    %p344 = pnand %p342, %p343
    %p345 = pneg %p344
    // Predicated region
    $region9: #{spectral_block.1} parent=5 // pred_check
      _
    $region10: #{spectral_block.1} parent=5 // pred_check_branch
      %347 = sbr.rel (%p344) target = $region12
    $region11: #{spectral_block.1} parent=5 // pred_region
      %s348 = ssub.s32 %s20, 1
      // Predicated region
      $region13: #{spectral_block.1} parent=11 // pred_check
        %p349 = pneg %p67
      $region14: #{spectral_block.1} parent=11 // pred_check_branch
        %351 = sbr.rel (%p349) target = $region16
      $region15: #{spectral_block.1} parent=11 // pred_region
        _
      $region16: #{spectral_block.1} parent=11 // pred_fallthru
        _
      // Predicated region
      $region17: #{spectral_block.1} parent=11 // pred_check
        %p352 = pneg %p88
      $region18: #{spectral_block.1} parent=11 // pred_check_branch
        %354 = sbr.rel (%p352) target = $region20
      $region19: #{spectral_block.1} parent=11 // pred_region
        _
      $region20: #{spectral_block.1} parent=11 // pred_fallthru
        _
      // Predicated region
      $region21: #{spectral_block.1} parent=11 // pred_check
        %p355 = pneg %p109
      $region22: #{spectral_block.1} parent=11 // pred_check_branch
        %357 = sbr.rel (%p355) target = $region24
      $region23: #{spectral_block.1} parent=11 // pred_region
        _
      $region24: #{spectral_block.1} parent=11 // pred_fallthru
        _
      // Predicated region
      $region25: #{spectral_block.1} parent=11 // pred_check
        %p358 = pneg %p130
      $region26: #{spectral_block.1} parent=11 // pred_check_branch
        %360 = sbr.rel (%p358) target = $region28
      $region27: #{spectral_block.1} parent=11 // pred_region
        _
      $region28: #{spectral_block.1} parent=11 // pred_fallthru
        _
      // Predicated region
      $region29: #{spectral_block.1} parent=11 // pred_check
        %p361 = pneg %p151
      $region30: #{spectral_block.1} parent=11 // pred_check_branch
        %363 = sbr.rel (%p361) target = $region32
      $region31: #{spectral_block.1} parent=11 // pred_region
        _
      $region32: #{spectral_block.1} parent=11 // pred_fallthru
        _
      // Predicated region
      $region33: #{spectral_block.1} parent=11 // pred_check
        %p364 = pneg %p172
      $region34: #{spectral_block.1} parent=11 // pred_check_branch
        %366 = sbr.rel (%p364) target = $region36
      $region35: #{spectral_block.1} parent=11 // pred_region
        _
      $region36: #{spectral_block.1} parent=11 // pred_fallthru
        _
      // Predicated region
      $region37: #{spectral_block.1} parent=11 // pred_check
        %p367 = pneg %p193
      $region38: #{spectral_block.1} parent=11 // pred_check_branch
        %369 = sbr.rel (%p367) target = $region40
      $region39: #{spectral_block.1} parent=11 // pred_region
        _
      $region40: #{spectral_block.1} parent=11 // pred_fallthru
        _
      // Predicated region
      $region41: #{spectral_block.1} parent=11 // pred_check
        %p370 = pneg %p214
      $region42: #{spectral_block.1} parent=11 // pred_check_branch
        %372 = sbr.rel (%p370) target = $region44
      $region43: #{spectral_block.1} parent=11 // pred_region
        _
      $region44: #{spectral_block.1} parent=11 // pred_fallthru
        _
      // Predicated region
      $region45: #{spectral_block.1} parent=11 // pred_check
        %p373 = pneg %p235
      $region46: #{spectral_block.1} parent=11 // pred_check_branch
        %375 = sbr.rel (%p373) target = $region48
      $region47: #{spectral_block.1} parent=11 // pred_region
        _
      $region48: #{spectral_block.1} parent=11 // pred_fallthru
        _
      // Predicated region
      $region49: #{spectral_block.1} parent=11 // pred_check
        %p376 = pneg %p256
      $region50: #{spectral_block.1} parent=11 // pred_check_branch
        %378 = sbr.rel (%p376) target = $region52
      $region51: #{spectral_block.1} parent=11 // pred_region
        _
      $region52: #{spectral_block.1} parent=11 // pred_fallthru
        _
    $region12: #{spectral_block.1} parent=5 // pred_fallthru
      _
    %p379 = scmp.lt.s32.totalorder %s20, 2
    // Predicated region
    $region53: #{spectral_block.1} parent=5 // pred_check
      %p380 = pneg %p379
    $region54: #{spectral_block.1} parent=5 // pred_check_branch
      %382 = sbr.rel (%p380) target = $region56
    $region55: #{spectral_block.1} parent=5 // pred_region
      // Predicated region
      $region57: #{spectral_block.1} parent=55 // pred_check
        %p383 = pneg %p40
      $region58: #{spectral_block.1} parent=55 // pred_check_branch
        %385 = sbr.rel (%p383) target = $region60
      $region59: #{spectral_block.1} parent=55 // pred_region
        %s386 = smul.u32 26, %s20
        %p387 = scmp.lt.s32.totalorder %s386, 51
        %s388 = scalar_select %p387, %s386, 51
        %s389 = smul.addr %s388, 8
        %s390 = scalar_lea.vmem %s0, %s389
        %s391 = smul.u32 26, %s20
      $region60: #{spectral_block.1} parent=55 // pred_fallthru
        _
    $region56: #{spectral_block.1} parent=5 // pred_fallthru
      _
    %p392 = scmp.le.s32.totalorder 1, %s20
    %p393 = scmp.lt.s32.totalorder %s20, 3
    %p394 = pnand %p392, %p393
    %p395 = pneg %p394
    // Predicated region
    $region61: #{spectral_block.1} parent=5 // pred_check
      _
    $region62: #{spectral_block.1} parent=5 // pred_check_branch
      %397 = sbr.rel (%p394) target = $region64
    $region63: #{spectral_block.1} parent=5 // pred_region
      %s398 = ssub.s32 %s20, 1
      %s399 = smul.u32 26, %s25
      %p400 = scmp.lt.s32.totalorder %s399, 51
      %s401 = scalar_select %p400, %s399, 51
      %s402 = smul.addr %s401, 8
      %s403 = scalar_lea.vmem %s0, %s402
      %p404 = pneg %p46
      %p405 = pneg %p43
      %p406 = pneg %p67
      %p407 = pneg %p64
      %p408 = pneg %p88
      %p409 = pneg %p85
      %p410 = pneg %p109
      %p411 = pneg %p106
      %p412 = pneg %p130
      %p413 = pneg %p127
      %p414 = pneg %p151
      %p415 = pneg %p148
      %p416 = pneg %p172
      %p417 = pneg %p169
      %p418 = pneg %p193
      %p419 = pneg %p190
      %p420 = pneg %p214
      %p421 = pneg %p211
      %p422 = pneg %p235
      %p423 = pneg %p232
      %p424 = pneg %p256
      %p425 = pneg %p253
      %p426 = pneg %p282
      %p427 = pneg %p279
      %s428 = smul.u32 26, %s25
      %p429 = scmp.lt.s32.totalorder %s428, 51
      %s430 = scalar_select %p429, %s428, 51
      %s431 = smul.addr %s430, 4
      %s432 = scalar_lea.vmem %s11, %s431
      %p433 = pneg %p308
      %p434 = pneg %p305
      %s435 = smul.u32 26, %s25
      %p436 = scmp.lt.s32.totalorder %s435, 51
      %s437 = scalar_select %p436, %s435, 51
      %s438 = smul.addr %s437, 8
      %s439 = scalar_lea.vmem %s12, %s438
      %p440 = pneg %p334
      %p441 = pneg %p331
      %p442 = scmp.lt.s32.totalorder %s25, 1
      %s443 = scalar_select %p442, %s25, 1
      %s444 = smul.addr %s443, 2
      %s445 = smul.addr %s444, 8
      %s446 = scalar_lea.vmem %s13, %s445
      %s447 = smul.u32 26, %s25
      %p448 = scmp.lt.s32.totalorder %s447, 51
      %s449 = scalar_select %p448, %s447, 51
      %s450 = smul.addr %s449, 8
      %s451 = scalar_lea.vmem %s0, %s450
      %s452 = smul.u32 26, %s25
      %s453 = smul.u32 26, %s25
      %p454 = scmp.lt.s32.totalorder %s453, 51
      %s455 = scalar_select %p454, %s453, 51
      %s456 = smul.addr %s455, 4
      %s457 = scalar_lea.vmem %s11, %s456
      %s458 = smul.u32 26, %s25
      %s459 = smul.u32 26, %s25
      %p460 = scmp.lt.s32.totalorder %s459, 51
      %s461 = scalar_select %p460, %s459, 51
      %s462 = smul.addr %s461, 8
      %s463 = scalar_lea.vmem %s12, %s462
      %s464 = smul.u32 26, %s25
      %p465 = scmp.lt.s32.totalorder %s25, 1
      %s466 = scalar_select %p465, %s25, 1
      %s467 = smul.addr %s466, 2
      %s468 = smul.addr %s467, 8
      %s469 = scalar_lea.vmem %s13, %s468
      %v471 = vld [vmem:[%s451] sm:$0xff]
      %v472 = vld [vmem:[%s451 + $0x8] sm:$0xff]
      %v473 = vld [vmem:[%s451 + $0x10] sm:$0xff]
      %v474 = vld [vmem:[%s451 + $0x18] sm:$0xff]
      %v475 = vld [vmem:[%s451 + $0x20] sm:$0xff]
      %v476 = vld [vmem:[%s451 + $0x28] sm:$0xff]
      %v477 = vld [vmem:[%s451 + $0x30] sm:$0xff]
      %v478 = vld [vmem:[%s451 + $0x38] sm:$0xff]
      %v479 = vld [vmem:[%s451 + $0x40] sm:$0xff]
      %v480 = vld [vmem:[%s451 + $0x48] sm:$0xff]
      %v481 = vld [vmem:[%s451 + $0x50] sm:$0xff]
      %v482 = vld [vmem:[%s451 + $0x58] sm:$0xff]
      %v483 = vld [vmem:[%s451 + $0x60] sm:$0xff]
      %v484 = vld [vmem:[%s451 + $0x68] sm:$0xff]
      %v485 = vld [vmem:[%s451 + $0x70] sm:$0xff]
      %v486 = vld [vmem:[%s451 + $0x78] sm:$0xff]
      %v487 = vld [vmem:[%s451 + $0x80] sm:$0xff]
      %v488 = vld [vmem:[%s451 + $0x88] sm:$0xff]
      %v489 = vld [vmem:[%s451 + $0x90] sm:$0xff]
      %v490 = vld [vmem:[%s451 + $0x98] sm:$0xff]
      %v491 = vld [vmem:[%s451 + $0xa0] sm:$0xff]
      %v492 = vld [vmem:[%s451 + $0xa8] sm:$0xff]
      %v493 = vld [vmem:[%s451 + $0xb0] sm:$0xff]
      %v494 = vld [vmem:[%s451 + $0xb8] sm:$0xff]
      %v495 = vld [vmem:[%s451 + $0xc0] sm:$0xff]
      %v496 = vld [vmem:[%s451 + $0xc8] sm:$0xff]
      %v497 = vlaneseq
      %v498 = vand.u32 %v497, 127
      %vm499 = vcmp.lt.s32.totalorder %v498, 32
      %v500 = vsel %vm499, 1, 0
      %v501 = vcvt.s32.f32 %v500
      %v502 = vld [vmem:[%s1] sm:$0x1]
      %v503 = vld [vmem:[%s2] sm:$0x1]
      %504 = vadd.xlane.f32.xlu0 %v471
      %v505 = vpop.xlane.xlu0 %504
      %506 = vadd.xlane.f32.xlu0 %v472
      %v507 = vpop.xlane.xlu0 %506
      %508 = vadd.xlane.f32.xlu0 %v473
      %v509 = vpop.xlane.xlu0 %508
      %510 = vadd.xlane.f32.xlu0 %v474
      %v511 = vpop.xlane.xlu0 %510
      %512 = vadd.xlane.f32.xlu0 %v475
      %v513 = vpop.xlane.xlu0 %512
      %514 = vadd.xlane.f32.xlu0 %v476
      %v515 = vpop.xlane.xlu0 %514
      %516 = vadd.xlane.f32.xlu0 %v477
      %v517 = vpop.xlane.xlu0 %516
      %518 = vadd.xlane.f32.xlu0 %v478
      %v519 = vpop.xlane.xlu0 %518
      %520 = vadd.xlane.f32.xlu0 %v479
      %v521 = vpop.xlane.xlu0 %520
      %522 = vadd.xlane.f32.xlu0 %v480
      %v523 = vpop.xlane.xlu0 %522
      %524 = vadd.xlane.f32.xlu0 %v481
      %v525 = vpop.xlane.xlu0 %524
      %526 = vadd.xlane.f32.xlu0 %v482
      %v527 = vpop.xlane.xlu0 %526
      %528 = vadd.xlane.f32.xlu0 %v483
      %v529 = vpop.xlane.xlu0 %528
      %530 = vadd.xlane.f32.xlu0 %v484
      %v531 = vpop.xlane.xlu0 %530
      %532 = vadd.xlane.f32.xlu0 %v485
      %v533 = vpop.xlane.xlu0 %532
      %534 = vadd.xlane.f32.xlu0 %v486
      %v535 = vpop.xlane.xlu0 %534
      %536 = vadd.xlane.f32.xlu0 %v487
      %v537 = vpop.xlane.xlu0 %536
      %538 = vadd.xlane.f32.xlu0 %v488
      %v539 = vpop.xlane.xlu0 %538
      %540 = vadd.xlane.f32.xlu0 %v489
      %v541 = vpop.xlane.xlu0 %540
      %542 = vadd.xlane.f32.xlu0 %v490
      %v543 = vpop.xlane.xlu0 %542
      %544 = vadd.xlane.f32.xlu0 %v491
      %v545 = vpop.xlane.xlu0 %544
      %546 = vadd.xlane.f32.xlu0 %v492
      %v547 = vpop.xlane.xlu0 %546
      %548 = vadd.xlane.f32.xlu0 %v493
      %v549 = vpop.xlane.xlu0 %548
      %550 = vadd.xlane.f32.xlu0 %v494
      %v551 = vpop.xlane.xlu0 %550
      %552 = vadd.xlane.f32.xlu0 %v495
      %v553 = vpop.xlane.xlu0 %552
      %554 = vadd.xlane.f32.xlu0 %v496
      %v555 = vpop.xlane.xlu0 %554
      %v556 = vmul.f32 %v505, 0.03125
      %v557 = vmul.f32 %v507, 0.03125
      %v558 = vmul.f32 %v509, 0.03125
      %v559 = vmul.f32 %v511, 0.03125
      %v560 = vmul.f32 %v513, 0.03125
      %v561 = vmul.f32 %v515, 0.03125
      %v562 = vmul.f32 %v517, 0.03125
      %v563 = vmul.f32 %v519, 0.03125
      %v564 = vmul.f32 %v521, 0.03125
      %v565 = vmul.f32 %v523, 0.03125
      %v566 = vmul.f32 %v525, 0.03125
      %v567 = vmul.f32 %v527, 0.03125
      %v568 = vmul.f32 %v529, 0.03125
      %v569 = vmul.f32 %v531, 0.03125
      %v570 = vmul.f32 %v533, 0.03125
      %v571 = vmul.f32 %v535, 0.03125
      %v572 = vmul.f32 %v537, 0.03125
      %v573 = vmul.f32 %v539, 0.03125
      %v574 = vmul.f32 %v541, 0.03125
      %v575 = vmul.f32 %v543, 0.03125
      %v576 = vmul.f32 %v545, 0.03125
      %v577 = vmul.f32 %v547, 0.03125
      %v578 = vmul.f32 %v549, 0.03125
      %v579 = vmul.f32 %v551, 0.03125
      %v580 = vmul.f32 %v553, 0.03125
      %v581 = vmul.f32 %v555, 0.03125
      %v582 = vsub.f32 %v471, %v556
      %v583 = vsub.f32 %v472, %v557
      %v584 = vsub.f32 %v473, %v558
      %v585 = vsub.f32 %v474, %v559
      %v586 = vsub.f32 %v475, %v560
      %v587 = vsub.f32 %v476, %v561
      %v588 = vsub.f32 %v477, %v562
      %v589 = vsub.f32 %v478, %v563
      %v590 = vsub.f32 %v479, %v564
      %v591 = vsub.f32 %v480, %v565
      %v592 = vsub.f32 %v481, %v566
      %v593 = vsub.f32 %v482, %v567
      %v594 = vsub.f32 %v483, %v568
      %v595 = vsub.f32 %v484, %v569
      %v596 = vsub.f32 %v485, %v570
      %v597 = vsub.f32 %v486, %v571
      %v598 = vsub.f32 %v487, %v572
      %v599 = vsub.f32 %v488, %v573
      %v600 = vsub.f32 %v489, %v574
      %v601 = vsub.f32 %v490, %v575
      %v602 = vsub.f32 %v491, %v576
      %v603 = vsub.f32 %v492, %v577
      %v604 = vsub.f32 %v493, %v578
      %v605 = vsub.f32 %v494, %v579
      %v606 = vsub.f32 %v495, %v580
      %v607 = vsub.f32 %v496, %v581
      %v608 = vmul.f32 %v582, %v501
      %v609 = vmul.f32 %v583, %v501
      %v610 = vmul.f32 %v584, %v501
      %v611 = vmul.f32 %v585, %v501
      %v612 = vmul.f32 %v586, %v501
      %v613 = vmul.f32 %v587, %v501
      %v614 = vmul.f32 %v588, %v501
      %v615 = vmul.f32 %v589, %v501
      %v616 = vmul.f32 %v590, %v501
      %v617 = vmul.f32 %v591, %v501
      %v618 = vmul.f32 %v592, %v501
      %v619 = vmul.f32 %v593, %v501
      %v620 = vmul.f32 %v594, %v501
      %v621 = vmul.f32 %v595, %v501
      %v622 = vmul.f32 %v596, %v501
      %v623 = vmul.f32 %v597, %v501
      %v624 = vmul.f32 %v598, %v501
      %v625 = vmul.f32 %v599, %v501
      %v626 = vmul.f32 %v600, %v501
      %v627 = vmul.f32 %v601, %v501
      %v628 = vmul.f32 %v602, %v501
      %v629 = vmul.f32 %v603, %v501
      %v630 = vmul.f32 %v604, %v501
      %v631 = vmul.f32 %v605, %v501
      %v632 = vmul.f32 %v606, %v501
      %v633 = vmul.f32 %v607, %v501
      %v634 = vmul.f32 %v608, %v608
      %v635 = vmul.f32 %v609, %v609
      %v636 = vmul.f32 %v610, %v610
      %v637 = vmul.f32 %v611, %v611
      %v638 = vmul.f32 %v612, %v612
      %v639 = vmul.f32 %v613, %v613
      %v640 = vmul.f32 %v614, %v614
      %v641 = vmul.f32 %v615, %v615
      %v642 = vmul.f32 %v616, %v616
      %v643 = vmul.f32 %v617, %v617
      %v644 = vmul.f32 %v618, %v618
      %v645 = vmul.f32 %v619, %v619
      %v646 = vmul.f32 %v620, %v620
      %v647 = vmul.f32 %v621, %v621
      %v648 = vmul.f32 %v622, %v622
      %v649 = vmul.f32 %v623, %v623
      %v650 = vmul.f32 %v624, %v624
      %v651 = vmul.f32 %v625, %v625
      %v652 = vmul.f32 %v626, %v626
      %v653 = vmul.f32 %v627, %v627
      %v654 = vmul.f32 %v628, %v628
      %v655 = vmul.f32 %v629, %v629
      %v656 = vmul.f32 %v630, %v630
      %v657 = vmul.f32 %v631, %v631
      %v658 = vmul.f32 %v632, %v632
      %v659 = vmul.f32 %v633, %v633
      %660 = vadd.xlane.f32.xlu0 %v634
      %v661 = vpop.xlane.xlu0 %660
      %662 = vadd.xlane.f32.xlu0 %v635
      %v663 = vpop.xlane.xlu0 %662
      %664 = vadd.xlane.f32.xlu0 %v636
      %v665 = vpop.xlane.xlu0 %664
      %666 = vadd.xlane.f32.xlu0 %v637
      %v667 = vpop.xlane.xlu0 %666
      %668 = vadd.xlane.f32.xlu0 %v638
      %v669 = vpop.xlane.xlu0 %668
      %670 = vadd.xlane.f32.xlu0 %v639
      %v671 = vpop.xlane.xlu0 %670
      %672 = vadd.xlane.f32.xlu0 %v640
      %v673 = vpop.xlane.xlu0 %672
      %674 = vadd.xlane.f32.xlu0 %v641
      %v675 = vpop.xlane.xlu0 %674
      %676 = vadd.xlane.f32.xlu0 %v642
      %v677 = vpop.xlane.xlu0 %676
      %678 = vadd.xlane.f32.xlu0 %v643
      %v679 = vpop.xlane.xlu0 %678
      %680 = vadd.xlane.f32.xlu0 %v644
      %v681 = vpop.xlane.xlu0 %680
      %682 = vadd.xlane.f32.xlu0 %v645
      %v683 = vpop.xlane.xlu0 %682
      %684 = vadd.xlane.f32.xlu0 %v646
      %v685 = vpop.xlane.xlu0 %684
      %686 = vadd.xlane.f32.xlu0 %v647
      %v687 = vpop.xlane.xlu0 %686
      %688 = vadd.xlane.f32.xlu0 %v648
      %v689 = vpop.xlane.xlu0 %688
      %690 = vadd.xlane.f32.xlu0 %v649
      %v691 = vpop.xlane.xlu0 %690
      %692 = vadd.xlane.f32.xlu0 %v650
      %v693 = vpop.xlane.xlu0 %692
      %694 = vadd.xlane.f32.xlu0 %v651
      %v695 = vpop.xlane.xlu0 %694
      %696 = vadd.xlane.f32.xlu0 %v652
      %v697 = vpop.xlane.xlu0 %696
      %698 = vadd.xlane.f32.xlu0 %v653
      %v699 = vpop.xlane.xlu0 %698
      %700 = vadd.xlane.f32.xlu0 %v654
      %v701 = vpop.xlane.xlu0 %700
      %702 = vadd.xlane.f32.xlu0 %v655
      %v703 = vpop.xlane.xlu0 %702
      %704 = vadd.xlane.f32.xlu0 %v656
      %v705 = vpop.xlane.xlu0 %704
      %706 = vadd.xlane.f32.xlu0 %v657
      %v707 = vpop.xlane.xlu0 %706
      %708 = vadd.xlane.f32.xlu0 %v658
      %v709 = vpop.xlane.xlu0 %708
      %710 = vadd.xlane.f32.xlu0 %v659
      %v711 = vpop.xlane.xlu0 %710
      %v712 = vmul.f32 %v661, 0.03125
      %v713 = vmul.f32 %v663, 0.03125
      %v714 = vmul.f32 %v665, 0.03125
      %v715 = vmul.f32 %v667, 0.03125
      %v716 = vmul.f32 %v669, 0.03125
      %v717 = vmul.f32 %v671, 0.03125
      %v718 = vmul.f32 %v673, 0.03125
      %v719 = vmul.f32 %v675, 0.03125
      %v720 = vmul.f32 %v677, 0.03125
      %v721 = vmul.f32 %v679, 0.03125
      %v722 = vmul.f32 %v681, 0.03125
      %v723 = vmul.f32 %v683, 0.03125
      %v724 = vmul.f32 %v685, 0.03125
      %v725 = vmul.f32 %v687, 0.03125
      %v726 = vmul.f32 %v689, 0.03125
      %v727 = vmul.f32 %v691, 0.03125
      %v728 = vmul.f32 %v693, 0.03125
      %v729 = vmul.f32 %v695, 0.03125
      %v730 = vmul.f32 %v697, 0.03125
      %v731 = vmul.f32 %v699, 0.03125
      %v732 = vmul.f32 %v701, 0.03125
      %v733 = vmul.f32 %v703, 0.03125
      %v734 = vmul.f32 %v705, 0.03125
      %v735 = vmul.f32 %v707, 0.03125
      %v736 = vmul.f32 %v709, 0.03125
      %v737 = vmul.f32 %v711, 0.03125
      %v738 = vadd.f32 %v712, 1e-05
      %v739 = vadd.f32 %v713, 1e-05
      %v740 = vadd.f32 %v714, 1e-05
      %v741 = vadd.f32 %v715, 1e-05
      %v742 = vadd.f32 %v716, 1e-05
      %v743 = vadd.f32 %v717, 1e-05
      %v744 = vadd.f32 %v718, 1e-05
      %v745 = vadd.f32 %v719, 1e-05
      %v746 = vadd.f32 %v720, 1e-05
      %v747 = vadd.f32 %v721, 1e-05
      %v748 = vadd.f32 %v722, 1e-05
      %v749 = vadd.f32 %v723, 1e-05
      %v750 = vadd.f32 %v724, 1e-05
      %v751 = vadd.f32 %v725, 1e-05
      %v752 = vadd.f32 %v726, 1e-05
      %v753 = vadd.f32 %v727, 1e-05
      %v754 = vadd.f32 %v728, 1e-05
      %v755 = vadd.f32 %v729, 1e-05
      %v756 = vadd.f32 %v730, 1e-05
      %v757 = vadd.f32 %v731, 1e-05
      %v758 = vadd.f32 %v732, 1e-05
      %v759 = vadd.f32 %v733, 1e-05
      %v760 = vadd.f32 %v734, 1e-05
      %v761 = vadd.f32 %v735, 1e-05
      %v762 = vadd.f32 %v736, 1e-05
      %v763 = vadd.f32 %v737, 1e-05
      %v764 = vrsqrt.pop %v738
      %v765 = vrsqrt.pop %v739
      %v766 = vrsqrt.pop %v740
      %v767 = vrsqrt.pop %v741
      %v768 = vrsqrt.pop %v742
      %v769 = vrsqrt.pop %v743
      %v770 = vrsqrt.pop %v744
      %v771 = vrsqrt.pop %v745
      %v772 = vrsqrt.pop %v746
      %v773 = vrsqrt.pop %v747
      %v774 = vrsqrt.pop %v748
      %v775 = vrsqrt.pop %v749
      %v776 = vrsqrt.pop %v750
      %v777 = vrsqrt.pop %v751
      %v778 = vrsqrt.pop %v752
      %v779 = vrsqrt.pop %v753
      %v780 = vrsqrt.pop %v754
      %v781 = vrsqrt.pop %v755
      %v782 = vrsqrt.pop %v756
      %v783 = vrsqrt.pop %v757
      %v784 = vrsqrt.pop %v758
      %v785 = vrsqrt.pop %v759
      %v786 = vrsqrt.pop %v760
      %v787 = vrsqrt.pop %v761
      %v788 = vrsqrt.pop %v762
      %v789 = vrsqrt.pop %v763
      %v790 = vmul.f32 %v608, %v764
      %v791 = vmul.f32 %v609, %v765
      %v792 = vmul.f32 %v610, %v766
      %v793 = vmul.f32 %v611, %v767
      %v794 = vmul.f32 %v612, %v768
      %v795 = vmul.f32 %v613, %v769
      %v796 = vmul.f32 %v614, %v770
      %v797 = vmul.f32 %v615, %v771
      %v798 = vmul.f32 %v616, %v772
      %v799 = vmul.f32 %v617, %v773
      %v800 = vmul.f32 %v618, %v774
      %v801 = vmul.f32 %v619, %v775
      %v802 = vmul.f32 %v620, %v776
      %v803 = vmul.f32 %v621, %v777
      %v804 = vmul.f32 %v622, %v778
      %v805 = vmul.f32 %v623, %v779
      %v806 = vmul.f32 %v624, %v780
      %v807 = vmul.f32 %v625, %v781
      %v808 = vmul.f32 %v626, %v782
      %v809 = vmul.f32 %v627, %v783
      %v810 = vmul.f32 %v628, %v784
      %v811 = vmul.f32 %v629, %v785
      %v812 = vmul.f32 %v630, %v786
      %v813 = vmul.f32 %v631, %v787
      %v814 = vmul.f32 %v632, %v788
      %v815 = vmul.f32 %v633, %v789
      %v817 = vlaneseq
      %v818 = vshrl.u32 %v817, 7
      %v819 = vsub.s32 0, %v818
      %v820 = vrot.slane %v502, %v819
      %v822 = vmul.f32 %v790, %v820
      %v823 = vmul.f32 %v791, %v820
      %v824 = vmul.f32 %v792, %v820
      %v825 = vmul.f32 %v793, %v820
      %v826 = vmul.f32 %v794, %v820
      %v827 = vmul.f32 %v795, %v820
      %v828 = vmul.f32 %v796, %v820
      %v829 = vmul.f32 %v797, %v820
      %v830 = vmul.f32 %v798, %v820
      %v831 = vmul.f32 %v799, %v820
      %v832 = vmul.f32 %v800, %v820
      %v833 = vmul.f32 %v801, %v820
      %v834 = vmul.f32 %v802, %v820
      %v835 = vmul.f32 %v803, %v820
      %v836 = vmul.f32 %v804, %v820
      %v837 = vmul.f32 %v805, %v820
      %v838 = vmul.f32 %v806, %v820
      %v839 = vmul.f32 %v807, %v820
      %v840 = vmul.f32 %v808, %v820
      %v841 = vmul.f32 %v809, %v820
      %v842 = vmul.f32 %v810, %v820
      %v843 = vmul.f32 %v811, %v820
      %v844 = vmul.f32 %v812, %v820
      %v845 = vmul.f32 %v813, %v820
      %v846 = vmul.f32 %v814, %v820
      %v847 = vmul.f32 %v815, %v820
      %v849 = vlaneseq
      %v850 = vshrl.u32 %v849, 7
      %v851 = vsub.s32 0, %v850
      %v852 = vrot.slane %v503, %v851
      %v854 = vadd.f32 %v822, %v852
      %v855 = vadd.f32 %v823, %v852
      %v856 = vadd.f32 %v824, %v852
      %v857 = vadd.f32 %v825, %v852
      %v858 = vadd.f32 %v826, %v852
      %v859 = vadd.f32 %v827, %v852
      %v860 = vadd.f32 %v828, %v852
      %v861 = vadd.f32 %v829, %v852
      %v862 = vadd.f32 %v830, %v852
      %v863 = vadd.f32 %v831, %v852
      %v864 = vadd.f32 %v832, %v852
      %v865 = vadd.f32 %v833, %v852
      %v866 = vadd.f32 %v834, %v852
      %v867 = vadd.f32 %v835, %v852
      %v868 = vadd.f32 %v836, %v852
      %v869 = vadd.f32 %v837, %v852
      %v870 = vadd.f32 %v838, %v852
      %v871 = vadd.f32 %v839, %v852
      %v872 = vadd.f32 %v840, %v852
      %v873 = vadd.f32 %v841, %v852
      %v874 = vadd.f32 %v842, %v852
      %v875 = vadd.f32 %v843, %v852
      %v876 = vadd.f32 %v844, %v852
      %v877 = vadd.f32 %v845, %v852
      %v878 = vadd.f32 %v846, %v852
      %v879 = vadd.f32 %v847, %v852
      %v880 = vpack.c.bf16 %v855, %v854
      %v881 = vpack.c.bf16 %v857, %v856
      %v882 = vpack.c.bf16 %v859, %v858
      %v883 = vpack.c.bf16 %v861, %v860
      %v884 = vpack.c.bf16 %v863, %v862
      %v885 = vpack.c.bf16 %v865, %v864
      %v886 = vpack.c.bf16 %v867, %v866
      %v887 = vpack.c.bf16 %v869, %v868
      %v888 = vpack.c.bf16 %v871, %v870
      %v889 = vpack.c.bf16 %v873, %v872
      %v890 = vpack.c.bf16 %v875, %v874
      %v891 = vpack.c.bf16 %v877, %v876
      %v892 = vpack.c.bf16 %v879, %v878
      %v893 = vld [vmem:[%s3] sm:$0xf]
      %v894 = vld [vmem:[%s3 + $0x4] sm:$0xf]
      %v895 = vld [vmem:[%s3 + $0x8] sm:$0xf]
      %v896 = vld [vmem:[%s3 + $0xc] sm:$0xf]
      %v897 = vld [vmem:[%s3 + $0x10] sm:$0xf]
      %v898 = vld [vmem:[%s3 + $0x14] sm:$0xf]
      %v899 = vld [vmem:[%s3 + $0x18] sm:$0xf]
      %v900 = vld [vmem:[%s3 + $0x1c] sm:$0xf]
      %v901 = vld [vmem:[%s3 + $0x20] sm:$0xf]
      %v902 = vld [vmem:[%s3 + $0x24] sm:$0xf]
      %v903 = vld [vmem:[%s3 + $0x28] sm:$0xf]
      %v904 = vld [vmem:[%s3 + $0x2c] sm:$0xf]
      %v905 = vld [vmem:[%s3 + $0x30] sm:$0xf]
      %v906 = vld [vmem:[%s3 + $0x34] sm:$0xf]
      %v907 = vld [vmem:[%s3 + $0x38] sm:$0xf]
      %v908 = vld [vmem:[%s3 + $0x3c] sm:$0xf]
      %v925 = vunpack.c.l.b16 %v893
      %v926 = vunpack.c.l.b16 %v894
      %v927 = vunpack.c.l.b16 %v895
      %v928 = vunpack.c.l.b16 %v896
      %v929 = vunpack.c.l.b16 %v897
      %v930 = vunpack.c.l.b16 %v898
      %v931 = vunpack.c.l.b16 %v899
      %v932 = vunpack.c.l.b16 %v900
      %v933 = vunpack.c.l.b16 %v901
      %v934 = vunpack.c.l.b16 %v902
      %v935 = vunpack.c.l.b16 %v903
      %v936 = vunpack.c.l.b16 %v904
      %v937 = vunpack.c.l.b16 %v905
      %v938 = vunpack.c.l.b16 %v906
      %v939 = vunpack.c.l.b16 %v907
      %v940 = vunpack.c.l.b16 %v908
      %v941 = vpack.c.b16 %v926, %v925
      %v942 = vpack.c.b16 %v928, %v927
      %v943 = vpack.c.b16 %v930, %v929
      %v944 = vpack.c.b16 %v932, %v931
      %v945 = vpack.c.b16 %v934, %v933
      %v946 = vpack.c.b16 %v936, %v935
      %v947 = vpack.c.b16 %v938, %v937
      %v948 = vpack.c.b16 %v940, %v939
      %957 = vmatprep.subr.bf16.mxu0 0
      %958 = vmatpush1.bf16.msra.mxu0 %v941
      %959 = vmatprep.subr.bf16.mxu0 0
      %960 = vmatpush1.bf16.msra.mxu0 %v942
      %961 = vmatprep.subr.bf16.mxu0 0
      %962 = vmatpush1.bf16.msra.mxu0 %v943
      %963 = vmatprep.subr.bf16.mxu0 0
      %964 = vmatpush1.bf16.msra.mxu0 %v944
      %965 = vmatprep.subr.bf16.mxu0 0
      %966 = vmatpush1.bf16.msra.mxu0 %v945
      %967 = vmatprep.subr.bf16.mxu0 0
      %968 = vmatpush1.bf16.msra.mxu0 %v946
      %969 = vmatprep.subr.bf16.mxu0 0
      %970 = vmatpush1.bf16.msra.mxu0 %v947
      %971 = vmatprep.subr.bf16.mxu0 0
      %972 = vmatpush1.bf16.msra.mxu0 %v948
      %973 = vmatprep.subr.bf16.mxu0 0
      %974 = vmatpush1.bf16.msra.mxu0 0
      %975 = vmatprep.subr.bf16.mxu0 0
      %976 = vmatpush1.bf16.msra.mxu0 0
      %977 = vmatprep.subr.bf16.mxu0 0
      %978 = vmatpush1.bf16.msra.mxu0 0
      %979 = vmatprep.subr.bf16.mxu0 0
      %980 = vmatpush1.bf16.msra.mxu0 0
      %981 = vmatprep.subr.bf16.mxu0 0
      %982 = vmatpush1.bf16.msra.mxu0 0
      %983 = vmatprep.subr.bf16.mxu0 0
      %984 = vmatpush1.bf16.msra.mxu0 0
      %985 = vmatprep.subr.bf16.mxu0 0
      %986 = vmatpush1.bf16.msra.mxu0 0
      %987 = vmatprep.subr.bf16.mxu0 0
      %988 = vmatpush1.bf16.msra.mxu0 0
      %989 = vmatprep.mubr.bf16.mxu0 0
      %990 = vmatmul.mubr.bf16.gmra.mrb[0].mxu0 %v880
      %v991 = vpop.f32.mrb[0].mxu0
      %v992 = vadd.f32 0.0, %v991
      %v993 = vpop.f32.mrb[0].mxu0
      %v994 = vpop.f32.mrb[0].mxu0
      %v995 = vadd.f32 0.0, %v994
      %v996 = vpop.f32.mrb[0].mxu0
      %997 = vmatprep.mubr.bf16.mxu0 0
      %998 = vmatmul.mubr.bf16.gmra.mrb[0].mxu0 %v881
      %v999 = vpop.f32.mrb[0].mxu0
      %v1000 = vadd.f32 0.0, %v999
      %v1001 = vpop.f32.mrb[0].mxu0
      %v1002 = vpop.f32.mrb[0].mxu0
      %v1003 = vadd.f32 0.0, %v1002
      %v1004 = vpop.f32.mrb[0].mxu0
      %1005 = vmatprep.mubr.bf16.mxu0 0
      %1006 = vmatmul.mubr.bf16.gmra.mrb[0].mxu0 %v882
      %v1007 = vpop.f32.mrb[0].mxu0
      %v1008 = vadd.f32 0.0, %v1007
      %v1009 = vpop.f32.mrb[0].mxu0
      %v1010 = vpop.f32.mrb[0].mxu0
      %v1011 = vadd.f32 0.0, %v1010
      %v1012 = vpop.f32.mrb[0].mxu0
      %1013 = vmatprep.mubr.bf16.mxu0 0
      %1014 = vmatmul.mubr.bf16.gmra.mrb[0].mxu0 %v883
      %v1015 = vpop.f32.mrb[0].mxu0
      %v1016 = vadd.f32 0.0, %v1015
      %v1017 = vpop.f32.mrb[0].mxu0
      %v1018 = vpop.f32.mrb[0].mxu0
      %v1019 = vadd.f32 0.0, %v1018
      %v1020 = vpop.f32.mrb[0].mxu0
      %1021 = vmatprep.mubr.bf16.mxu0 0
      %1022 = vmatmul.mubr.bf16.gmra.mrb[0].mxu0 %v884
      %v1023 = vpop.f32.mrb[0].mxu0
      %v1024 = vadd.f32 0.0, %v1023
      %v1025 = vpop.f32.mrb[0].mxu0
      %v1026 = vpop.f32.mrb[0].mxu0
      %v1027 = vadd.f32 0.0, %v1026
      %v1028 = vpop.f32.mrb[0].mxu0
      %1029 = vmatprep.mubr.bf16.mxu0 0
      %1030 = vmatmul.mubr.bf16.gmra.mrb[0].mxu0 %v885
      %v1031 = vpop.f32.mrb[0].mxu0
      %v1032 = vadd.f32 0.0, %v1031
      %v1033 = vpop.f32.mrb[0].mxu0
      %v1034 = vpop.f32.mrb[0].mxu0
      %v1035 = vadd.f32 0.0, %v1034
      %v1036 = vpop.f32.mrb[0].mxu0
      %1037 = vmatprep.mubr.bf16.mxu0 0
      %1038 = vmatmul.mubr.bf16.gmra.mrb[0].mxu0 %v886
      %v1039 = vpop.f32.mrb[0].mxu0
      %v1040 = vadd.f32 0.0, %v1039
      %v1041 = vpop.f32.mrb[0].mxu0
      %v1042 = vpop.f32.mrb[0].mxu0
      %v1043 = vadd.f32 0.0, %v1042
      %v1044 = vpop.f32.mrb[0].mxu0
      %1045 = vmatprep.mubr.bf16.mxu0 0
      %1046 = vmatmul.mubr.bf16.gmra.mrb[0].mxu0 %v887
      %v1047 = vpop.f32.mrb[0].mxu0
      %v1048 = vadd.f32 0.0, %v1047
      %v1049 = vpop.f32.mrb[0].mxu0
      %v1050 = vpop.f32.mrb[0].mxu0
      %v1051 = vadd.f32 0.0, %v1050
      %v1052 = vpop.f32.mrb[0].mxu0
      %1053 = vmatprep.mubr.bf16.mxu0 0
      %1054 = vmatmul.mubr.bf16.gmra.mrb[0].mxu0 %v888
      %v1055 = vpop.f32.mrb[0].mxu0
      %v1056 = vadd.f32 0.0, %v1055
      %v1057 = vpop.f32.mrb[0].mxu0
      %v1058 = vpop.f32.mrb[0].mxu0
      %v1059 = vadd.f32 0.0, %v1058
      %v1060 = vpop.f32.mrb[0].mxu0
      %1061 = vmatprep.mubr.bf16.mxu0 0
      %1062 = vmatmul.mubr.bf16.gmra.mrb[0].mxu0 %v889
      %v1063 = vpop.f32.mrb[0].mxu0
      %v1064 = vadd.f32 0.0, %v1063
      %v1065 = vpop.f32.mrb[0].mxu0
      %v1066 = vpop.f32.mrb[0].mxu0
      %v1067 = vadd.f32 0.0, %v1066
      %v1068 = vpop.f32.mrb[0].mxu0
      %1069 = vmatprep.mubr.bf16.mxu0 0
      %1070 = vmatmul.mubr.bf16.gmra.mrb[0].mxu0 %v890
      %v1071 = vpop.f32.mrb[0].mxu0
      %v1072 = vadd.f32 0.0, %v1071
      %v1073 = vpop.f32.mrb[0].mxu0
      %v1074 = vpop.f32.mrb[0].mxu0
      %v1075 = vadd.f32 0.0, %v1074
      %v1076 = vpop.f32.mrb[0].mxu0
      %1077 = vmatprep.mubr.bf16.mxu0 0
      %1078 = vmatmul.mubr.bf16.gmra.mrb[0].mxu0 %v891
      %v1079 = vpop.f32.mrb[0].mxu0
      %v1080 = vadd.f32 0.0, %v1079
      %v1081 = vpop.f32.mrb[0].mxu0
      %v1082 = vpop.f32.mrb[0].mxu0
      %v1083 = vadd.f32 0.0, %v1082
      %v1084 = vpop.f32.mrb[0].mxu0
      %1085 = vmatprep.mubr.bf16.mxu0 0
      %1086 = vmatmul.mubr.bf16.gmra.mrb[0].mxu0 %v892
      %v1087 = vpop.f32.mrb[0].mxu0
      %v1088 = vadd.f32 0.0, %v1087
      %v1089 = vpop.f32.mrb[0].mxu0
      %v1090 = vpop.f32.mrb[0].mxu0
      %v1091 = vadd.f32 0.0, %v1090
      %v1092 = vpop.f32.mrb[0].mxu0
      %1093 = vdwg.mxu0
      %v1094 = vtanh.pop %v992
      %v1095 = vtanh.pop %v995
      %v1096 = vtanh.pop %v1000
      %v1097 = vtanh.pop %v1003
      %v1098 = vtanh.pop %v1008
      %v1099 = vtanh.pop %v1011
      %v1100 = vtanh.pop %v1016
      %v1101 = vtanh.pop %v1019
      %v1102 = vtanh.pop %v1024
      %v1103 = vtanh.pop %v1027
      %v1104 = vtanh.pop %v1032
      %v1105 = vtanh.pop %v1035
      %v1106 = vtanh.pop %v1040
      %v1107 = vtanh.pop %v1043
      %v1108 = vtanh.pop %v1048
      %v1109 = vtanh.pop %v1051
      %v1110 = vtanh.pop %v1056
      %v1111 = vtanh.pop %v1059
      %v1112 = vtanh.pop %v1064
      %v1113 = vtanh.pop %v1067
      %v1114 = vtanh.pop %v1072
      %v1115 = vtanh.pop %v1075
      %v1116 = vtanh.pop %v1080
      %v1117 = vtanh.pop %v1083
      %v1118 = vtanh.pop %v1088
      %v1119 = vtanh.pop %v1091
      %v1120 = vmul.f32 %v992, %v1094
      %v1121 = vmul.f32 %v995, %v1095
      %v1122 = vmul.f32 %v1000, %v1096
      %v1123 = vmul.f32 %v1003, %v1097
      %v1124 = vmul.f32 %v1008, %v1098
      %v1125 = vmul.f32 %v1011, %v1099
      %v1126 = vmul.f32 %v1016, %v1100
      %v1127 = vmul.f32 %v1019, %v1101
      %v1128 = vmul.f32 %v1024, %v1102
      %v1129 = vmul.f32 %v1027, %v1103
      %v1130 = vmul.f32 %v1032, %v1104
      %v1131 = vmul.f32 %v1035, %v1105
      %v1132 = vmul.f32 %v1040, %v1106
      %v1133 = vmul.f32 %v1043, %v1107
      %v1134 = vmul.f32 %v1048, %v1108
      %v1135 = vmul.f32 %v1051, %v1109
      %v1136 = vmul.f32 %v1056, %v1110
      %v1137 = vmul.f32 %v1059, %v1111
      %v1138 = vmul.f32 %v1064, %v1112
      %v1139 = vmul.f32 %v1067, %v1113
      %v1140 = vmul.f32 %v1072, %v1114
      %v1141 = vmul.f32 %v1075, %v1115
      %v1142 = vmul.f32 %v1080, %v1116
      %v1143 = vmul.f32 %v1083, %v1117
      %v1144 = vmul.f32 %v1088, %v1118
      %v1145 = vmul.f32 %v1091, %v1119
      %v1146 = vpack.c.bf16 %v1121, %v1120
      %v1147 = vpack.c.bf16 %v1123, %v1122
      %v1148 = vpack.c.bf16 %v1125, %v1124
      %v1149 = vpack.c.bf16 %v1127, %v1126
      %v1150 = vpack.c.bf16 %v1129, %v1128
      %v1151 = vpack.c.bf16 %v1131, %v1130
      %v1152 = vpack.c.bf16 %v1133, %v1132
      %v1153 = vpack.c.bf16 %v1135, %v1134
      %v1154 = vpack.c.bf16 %v1137, %v1136
      %v1155 = vpack.c.bf16 %v1139, %v1138
      %v1156 = vpack.c.bf16 %v1141, %v1140
      %v1157 = vpack.c.bf16 %v1143, %v1142
      %v1158 = vpack.c.bf16 %v1145, %v1144
      %v1159 = vld [vmem:[%s4] sm:$0xf]
      %v1160 = vld [vmem:[%s4 + $0x4] sm:$0xf]
      %v1161 = vld [vmem:[%s4 + $0x8] sm:$0xf]
      %v1162 = vld [vmem:[%s4 + $0xc] sm:$0xf]
      %v1163 = vld [vmem:[%s4 + $0x10] sm:$0xf]
      %v1164 = vld [vmem:[%s4 + $0x14] sm:$0xf]
      %v1165 = vld [vmem:[%s4 + $0x18] sm:$0xf]
      %v1166 = vld [vmem:[%s4 + $0x1c] sm:$0xf]
      %v1167 = vld [vmem:[%s4 + $0x20] sm:$0xf]
      %v1168 = vld [vmem:[%s4 + $0x24] sm:$0xf]
      %v1169 = vld [vmem:[%s4 + $0x28] sm:$0xf]
      %v1170 = vld [vmem:[%s4 + $0x2c] sm:$0xf]
      %v1171 = vld [vmem:[%s4 + $0x30] sm:$0xf]
      %v1172 = vld [vmem:[%s4 + $0x34] sm:$0xf]
      %v1173 = vld [vmem:[%s4 + $0x38] sm:$0xf]
      %v1174 = vld [vmem:[%s4 + $0x3c] sm:$0xf]
      %v1191 = vunpack.c.l.b16 %v1159
      %v1192 = vunpack.c.l.b16 %v1160
      %v1193 = vunpack.c.l.b16 %v1161
      %v1194 = vunpack.c.l.b16 %v1162
      %v1195 = vunpack.c.l.b16 %v1163
      %v1196 = vunpack.c.l.b16 %v1164
      %v1197 = vunpack.c.l.b16 %v1165
      %v1198 = vunpack.c.l.b16 %v1166
      %v1199 = vunpack.c.l.b16 %v1167
      %v1200 = vunpack.c.l.b16 %v1168
      %v1201 = vunpack.c.l.b16 %v1169
      %v1202 = vunpack.c.l.b16 %v1170
      %v1203 = vunpack.c.l.b16 %v1171
      %v1204 = vunpack.c.l.b16 %v1172
      %v1205 = vunpack.c.l.b16 %v1173
      %v1206 = vunpack.c.l.b16 %v1174
      %v1207 = vpack.c.b16 %v1192, %v1191
      %v1208 = vpack.c.b16 %v1194, %v1193
      %v1209 = vpack.c.b16 %v1196, %v1195
      %v1210 = vpack.c.b16 %v1198, %v1197
      %v1211 = vpack.c.b16 %v1200, %v1199
      %v1212 = vpack.c.b16 %v1202, %v1201
      %v1213 = vpack.c.b16 %v1204, %v1203
      %v1214 = vpack.c.b16 %v1206, %v1205
      %1223 = vmatprep.subr.bf16.mxu0 0
      %1224 = vmatpush1.bf16.msra.mxu0 %v1207
      %1225 = vmatprep.subr.bf16.mxu0 0
      %1226 = vmatpush1.bf16.msra.mxu0 %v1208
      %1227 = vmatprep.subr.bf16.mxu0 0
      %1228 = vmatpush1.bf16.msra.mxu0 %v1209
      %1229 = vmatprep.subr.bf16.mxu0 0
      %1230 = vmatpush1.bf16.msra.mxu0 %v1210
      %1231 = vmatprep.subr.bf16.mxu0 0
      %1232 = vmatpush1.bf16.msra.mxu0 %v1211
      %1233 = vmatprep.subr.bf16.mxu0 0
      %1234 = vmatpush1.bf16.msra.mxu0 %v1212
      %1235 = vmatprep.subr.bf16.mxu0 0
      %1236 = vmatpush1.bf16.msra.mxu0 %v1213
      %1237 = vmatprep.subr.bf16.mxu0 0
      %1238 = vmatpush1.bf16.msra.mxu0 %v1214
      %1239 = vmatprep.subr.bf16.mxu0 0
      %1240 = vmatpush1.bf16.msra.mxu0 0
      %1241 = vmatprep.subr.bf16.mxu0 0
      %1242 = vmatpush1.bf16.msra.mxu0 0
      %1243 = vmatprep.subr.bf16.mxu0 0
      %1244 = vmatpush1.bf16.msra.mxu0 0
      %1245 = vmatprep.subr.bf16.mxu0 0
      %1246 = vmatpush1.bf16.msra.mxu0 0
      %1247 = vmatprep.subr.bf16.mxu0 0
      %1248 = vmatpush1.bf16.msra.mxu0 0
      %1249 = vmatprep.subr.bf16.mxu0 0
      %1250 = vmatpush1.bf16.msra.mxu0 0
      %1251 = vmatprep.subr.bf16.mxu0 0
      %1252 = vmatpush1.bf16.msra.mxu0 0
      %1253 = vmatprep.subr.bf16.mxu0 0
      %1254 = vmatpush1.bf16.msra.mxu0 0
      %1255 = vmatprep.mubr.bf16.mxu0 0
      %1256 = vmatmul.mubr.bf16.gmra.mrb[0].mxu0 %v1146
      %v1257 = vpop.f32.mrb[0].mxu0
      %v1258 = vadd.f32 0.0, %v1257
      %v1259 = vpop.f32.mrb[0].mxu0
      %v1260 = vpop.f32.mrb[0].mxu0
      %v1261 = vadd.f32 0.0, %v1260
      %v1262 = vpop.f32.mrb[0].mxu0
      %1263 = vmatprep.mubr.bf16.mxu0 0
      %1264 = vmatmul.mubr.bf16.gmra.mrb[0].mxu0 %v1147
      %v1265 = vpop.f32.mrb[0].mxu0
      %v1266 = vadd.f32 0.0, %v1265
      %v1267 = vpop.f32.mrb[0].mxu0
      %v1268 = vpop.f32.mrb[0].mxu0
      %v1269 = vadd.f32 0.0, %v1268
      %v1270 = vpop.f32.mrb[0].mxu0
      %1271 = vmatprep.mubr.bf16.mxu0 0
      %1272 = vmatmul.mubr.bf16.gmra.mrb[0].mxu0 %v1148
      %v1273 = vpop.f32.mrb[0].mxu0
      %v1274 = vadd.f32 0.0, %v1273
      %v1275 = vpop.f32.mrb[0].mxu0
      %v1276 = vpop.f32.mrb[0].mxu0
      %v1277 = vadd.f32 0.0, %v1276
      %v1278 = vpop.f32.mrb[0].mxu0
      %1279 = vmatprep.mubr.bf16.mxu0 0
      %1280 = vmatmul.mubr.bf16.gmra.mrb[0].mxu0 %v1149
      %v1281 = vpop.f32.mrb[0].mxu0
      %v1282 = vadd.f32 0.0, %v1281
      %v1283 = vpop.f32.mrb[0].mxu0
      %v1284 = vpop.f32.mrb[0].mxu0
      %v1285 = vadd.f32 0.0, %v1284
      %v1286 = vpop.f32.mrb[0].mxu0
      %1287 = vmatprep.mubr.bf16.mxu0 0
      %1288 = vmatmul.mubr.bf16.gmra.mrb[0].mxu0 %v1150
      %v1289 = vpop.f32.mrb[0].mxu0
      %v1290 = vadd.f32 0.0, %v1289
      %v1291 = vpop.f32.mrb[0].mxu0
      %v1292 = vpop.f32.mrb[0].mxu0
      %v1293 = vadd.f32 0.0, %v1292
      %v1294 = vpop.f32.mrb[0].mxu0
      %1295 = vmatprep.mubr.bf16.mxu0 0
      %1296 = vmatmul.mubr.bf16.gmra.mrb[0].mxu0 %v1151
      %v1297 = vpop.f32.mrb[0].mxu0
      %v1298 = vadd.f32 0.0, %v1297
      %v1299 = vpop.f32.mrb[0].mxu0
      %v1300 = vpop.f32.mrb[0].mxu0
      %v1301 = vadd.f32 0.0, %v1300
      %v1302 = vpop.f32.mrb[0].mxu0
      %1303 = vmatprep.mubr.bf16.mxu0 0
      %1304 = vmatmul.mubr.bf16.gmra.mrb[0].mxu0 %v1152
      %v1305 = vpop.f32.mrb[0].mxu0
      %v1306 = vadd.f32 0.0, %v1305
      %v1307 = vpop.f32.mrb[0].mxu0
      %v1308 = vpop.f32.mrb[0].mxu0
      %v1309 = vadd.f32 0.0, %v1308
      %v1310 = vpop.f32.mrb[0].mxu0
      %1311 = vmatprep.mubr.bf16.mxu0 0
      %1312 = vmatmul.mubr.bf16.gmra.mrb[0].mxu0 %v1153
      %v1313 = vpop.f32.mrb[0].mxu0
      %v1314 = vadd.f32 0.0, %v1313
      %v1315 = vpop.f32.mrb[0].mxu0
      %v1316 = vpop.f32.mrb[0].mxu0
      %v1317 = vadd.f32 0.0, %v1316
      %v1318 = vpop.f32.mrb[0].mxu0
      %1319 = vmatprep.mubr.bf16.mxu0 0
      %1320 = vmatmul.mubr.bf16.gmra.mrb[0].mxu0 %v1154
      %v1321 = vpop.f32.mrb[0].mxu0
      %v1322 = vadd.f32 0.0, %v1321
      %v1323 = vpop.f32.mrb[0].mxu0
      %v1324 = vpop.f32.mrb[0].mxu0
      %v1325 = vadd.f32 0.0, %v1324
      %v1326 = vpop.f32.mrb[0].mxu0
      %1327 = vmatprep.mubr.bf16.mxu0 0
      %1328 = vmatmul.mubr.bf16.gmra.mrb[0].mxu0 %v1155
      %v1329 = vpop.f32.mrb[0].mxu0
      %v1330 = vadd.f32 0.0, %v1329
      %v1331 = vpop.f32.mrb[0].mxu0
      %v1332 = vpop.f32.mrb[0].mxu0
      %v1333 = vadd.f32 0.0, %v1332
      %v1334 = vpop.f32.mrb[0].mxu0
      %1335 = vmatprep.mubr.bf16.mxu0 0
      %1336 = vmatmul.mubr.bf16.gmra.mrb[0].mxu0 %v1156
      %v1337 = vpop.f32.mrb[0].mxu0
      %v1338 = vadd.f32 0.0, %v1337
      %v1339 = vpop.f32.mrb[0].mxu0
      %v1340 = vpop.f32.mrb[0].mxu0
      %v1341 = vadd.f32 0.0, %v1340
      %v1342 = vpop.f32.mrb[0].mxu0
      %1343 = vmatprep.mubr.bf16.mxu0 0
      %1344 = vmatmul.mubr.bf16.gmra.mrb[0].mxu0 %v1157
      %v1345 = vpop.f32.mrb[0].mxu0
      %v1346 = vadd.f32 0.0, %v1345
      %v1347 = vpop.f32.mrb[0].mxu0
      %v1348 = vpop.f32.mrb[0].mxu0
      %v1349 = vadd.f32 0.0, %v1348
      %v1350 = vpop.f32.mrb[0].mxu0
      %1351 = vmatprep.mubr.bf16.mxu0 0
      %1352 = vmatmul.mubr.bf16.gmra.mrb[0].mxu0 %v1158
      %v1353 = vpop.f32.mrb[0].mxu0
      %v1354 = vadd.f32 0.0, %v1353
      %v1355 = vpop.f32.mrb[0].mxu0
      %v1356 = vpop.f32.mrb[0].mxu0
      %v1357 = vadd.f32 0.0, %v1356
      %v1358 = vpop.f32.mrb[0].mxu0
      %1359 = vdwg.mxu0
      %v1360 = vpack.c.bf16 %v1261, %v1258
      %v1361 = vpack.c.bf16 %v1269, %v1266
      %v1362 = vpack.c.bf16 %v1277, %v1274
      %v1363 = vpack.c.bf16 %v1285, %v1282
      %v1364 = vpack.c.bf16 %v1293, %v1290
      %v1365 = vpack.c.bf16 %v1301, %v1298
      %v1366 = vpack.c.bf16 %v1309, %v1306
      %v1367 = vpack.c.bf16 %v1317, %v1314
      %v1368 = vpack.c.bf16 %v1325, %v1322
      %v1369 = vpack.c.bf16 %v1333, %v1330
      %v1370 = vpack.c.bf16 %v1341, %v1338
      %v1371 = vpack.c.bf16 %v1349, %v1346
      %v1372 = vpack.c.bf16 %v1357, %v1354
      %v1386 = vunpack.c.l.b16 %v1360
      %v1387 = vunpack.c.h.b16 %v1360
      %v1388 = vunpack.c.l.b16 %v1361
      %v1389 = vunpack.c.h.b16 %v1361
      %v1390 = vunpack.c.l.b16 %v1362
      %v1391 = vunpack.c.h.b16 %v1362
      %v1392 = vunpack.c.l.b16 %v1363
      %v1393 = vunpack.c.h.b16 %v1363
      %v1394 = vunpack.c.l.b16 %v1364
      %v1395 = vunpack.c.h.b16 %v1364
      %v1396 = vunpack.c.l.b16 %v1365
      %v1397 = vunpack.c.h.b16 %v1365
      %v1398 = vunpack.c.l.b16 %v1366
      %v1399 = vunpack.c.h.b16 %v1366
      %v1400 = vunpack.c.l.b16 %v1367
      %v1401 = vunpack.c.h.b16 %v1367
      %v1402 = vunpack.c.l.b16 %v1368
      %v1403 = vunpack.c.h.b16 %v1368
      %v1404 = vunpack.c.l.b16 %v1369
      %v1405 = vunpack.c.h.b16 %v1369
      %v1406 = vunpack.c.l.b16 %v1370
      %v1407 = vunpack.c.h.b16 %v1370
      %v1408 = vunpack.c.l.b16 %v1371
      %v1409 = vunpack.c.h.b16 %v1371
      %v1410 = vunpack.c.l.b16 %v1372
      %v1411 = vunpack.c.h.b16 %v1372
      %v1412 = vpack.c.b16 %v1386, %v1386
      %v1413 = vpack.c.b16 %v1387, %v1387
      %v1414 = vpack.c.b16 %v1388, %v1388
      %v1415 = vpack.c.b16 %v1389, %v1389
      %v1416 = vpack.c.b16 %v1390, %v1390
      %v1417 = vpack.c.b16 %v1391, %v1391
      %v1418 = vpack.c.b16 %v1392, %v1392
      %v1419 = vpack.c.b16 %v1393, %v1393
      %v1420 = vpack.c.b16 %v1394, %v1394
      %v1421 = vpack.c.b16 %v1395, %v1395
      %v1422 = vpack.c.b16 %v1396, %v1396
      %v1423 = vpack.c.b16 %v1397, %v1397
      %v1424 = vpack.c.b16 %v1398, %v1398
      %v1425 = vpack.c.b16 %v1399, %v1399
      %v1426 = vpack.c.b16 %v1400, %v1400
      %v1427 = vpack.c.b16 %v1401, %v1401
      %v1428 = vpack.c.b16 %v1402, %v1402
      %v1429 = vpack.c.b16 %v1403, %v1403
      %v1430 = vpack.c.b16 %v1404, %v1404
      %v1431 = vpack.c.b16 %v1405, %v1405
      %v1432 = vpack.c.b16 %v1406, %v1406
      %v1433 = vpack.c.b16 %v1407, %v1407
      %v1434 = vpack.c.b16 %v1408, %v1408
      %v1435 = vpack.c.b16 %v1409, %v1409
      %v1436 = vpack.c.b16 %v1410, %v1410
      %v1437 = vpack.c.b16 %v1411, %v1411
      %1464 = vst [vmem:[%s457] sm:$0xf] %v1412
      %1465 = vst [vmem:[%s457 + $0x4] sm:$0xf] %v1413
      %1466 = vst [vmem:[%s457 + $0x8] sm:$0xf] %v1414
      %1467 = vst [vmem:[%s457 + $0xc] sm:$0xf] %v1415
      %1468 = vst [vmem:[%s457 + $0x10] sm:$0xf] %v1416
      %1469 = vst [vmem:[%s457 + $0x14] sm:$0xf] %v1417
      %1470 = vst [vmem:[%s457 + $0x18] sm:$0xf] %v1418
      %1471 = vst [vmem:[%s457 + $0x1c] sm:$0xf] %v1419
      %1472 = vst [vmem:[%s457 + $0x20] sm:$0xf] %v1420
      %1473 = vst [vmem:[%s457 + $0x24] sm:$0xf] %v1421
      %1474 = vst [vmem:[%s457 + $0x28] sm:$0xf] %v1422
      %1475 = vst [vmem:[%s457 + $0x2c] sm:$0xf] %v1423
      %1476 = vst [vmem:[%s457 + $0x30] sm:$0xf] %v1424
      %1477 = vst [vmem:[%s457 + $0x34] sm:$0xf] %v1425
      %1478 = vst [vmem:[%s457 + $0x38] sm:$0xf] %v1426
      %1479 = vst [vmem:[%s457 + $0x3c] sm:$0xf] %v1427
      %1480 = vst [vmem:[%s457 + $0x40] sm:$0xf] %v1428
      %1481 = vst [vmem:[%s457 + $0x44] sm:$0xf] %v1429
      %1482 = vst [vmem:[%s457 + $0x48] sm:$0xf] %v1430
      %1483 = vst [vmem:[%s457 + $0x4c] sm:$0xf] %v1431
      %1484 = vst [vmem:[%s457 + $0x50] sm:$0xf] %v1432
      %1485 = vst [vmem:[%s457 + $0x54] sm:$0xf] %v1433
      %1486 = vst [vmem:[%s457 + $0x58] sm:$0xf] %v1434
      %1487 = vst [vmem:[%s457 + $0x5c] sm:$0xf] %v1435
      %1488 = vst [vmem:[%s457 + $0x60] sm:$0xf] %v1436
      %1489 = vst [vmem:[%s457 + $0x64] sm:$0xf] %v1437
      %v1490 = vadd.f32 %v471, %v1258
      %v1491 = vadd.f32 %v472, %v1261
      %v1492 = vadd.f32 %v473, %v1266
      %v1493 = vadd.f32 %v474, %v1269
      %v1494 = vadd.f32 %v475, %v1274
      %v1495 = vadd.f32 %v476, %v1277
      %v1496 = vadd.f32 %v477, %v1282
      %v1497 = vadd.f32 %v478, %v1285
      %v1498 = vadd.f32 %v479, %v1290
      %v1499 = vadd.f32 %v480, %v1293
      %v1500 = vadd.f32 %v481, %v1298
      %v1501 = vadd.f32 %v482, %v1301
      %v1502 = vadd.f32 %v483, %v1306
      %v1503 = vadd.f32 %v484, %v1309
      %v1504 = vadd.f32 %v485, %v1314
      %v1505 = vadd.f32 %v486, %v1317
      %v1506 = vadd.f32 %v487, %v1322
      %v1507 = vadd.f32 %v488, %v1325
      %v1508 = vadd.f32 %v489, %v1330
      %v1509 = vadd.f32 %v490, %v1333
      %v1510 = vadd.f32 %v491, %v1338
      %v1511 = vadd.f32 %v492, %v1341
      %v1512 = vadd.f32 %v493, %v1346
      %v1513 = vadd.f32 %v494, %v1349
      %v1514 = vadd.f32 %v495, %v1354
      %v1515 = vadd.f32 %v496, %v1357
      %v1516 = vld [vmem:[%s5] sm:$0x1]
      %v1517 = vld [vmem:[%s6] sm:$0x1]
      %1518 = vadd.xlane.f32.xlu0 %v1490
      %v1519 = vpop.xlane.xlu0 %1518
      %1520 = vadd.xlane.f32.xlu0 %v1491
      %v1521 = vpop.xlane.xlu0 %1520
      %1522 = vadd.xlane.f32.xlu0 %v1492
      %v1523 = vpop.xlane.xlu0 %1522
      %1524 = vadd.xlane.f32.xlu0 %v1493
      %v1525 = vpop.xlane.xlu0 %1524
      %1526 = vadd.xlane.f32.xlu0 %v1494
      %v1527 = vpop.xlane.xlu0 %1526
      %1528 = vadd.xlane.f32.xlu0 %v1495
      %v1529 = vpop.xlane.xlu0 %1528
      %1530 = vadd.xlane.f32.xlu0 %v1496
      %v1531 = vpop.xlane.xlu0 %1530
      %1532 = vadd.xlane.f32.xlu0 %v1497
      %v1533 = vpop.xlane.xlu0 %1532
      %1534 = vadd.xlane.f32.xlu0 %v1498
      %v1535 = vpop.xlane.xlu0 %1534
      %1536 = vadd.xlane.f32.xlu0 %v1499
      %v1537 = vpop.xlane.xlu0 %1536
      %1538 = vadd.xlane.f32.xlu0 %v1500
      %v1539 = vpop.xlane.xlu0 %1538
      %1540 = vadd.xlane.f32.xlu0 %v1501
      %v1541 = vpop.xlane.xlu0 %1540
      %1542 = vadd.xlane.f32.xlu0 %v1502
      %v1543 = vpop.xlane.xlu0 %1542
      %1544 = vadd.xlane.f32.xlu0 %v1503
      %v1545 = vpop.xlane.xlu0 %1544
      %1546 = vadd.xlane.f32.xlu0 %v1504
      %v1547 = vpop.xlane.xlu0 %1546
      %1548 = vadd.xlane.f32.xlu0 %v1505
      %v1549 = vpop.xlane.xlu0 %1548
      %1550 = vadd.xlane.f32.xlu0 %v1506
      %v1551 = vpop.xlane.xlu0 %1550
      %1552 = vadd.xlane.f32.xlu0 %v1507
      %v1553 = vpop.xlane.xlu0 %1552
      %1554 = vadd.xlane.f32.xlu0 %v1508
      %v1555 = vpop.xlane.xlu0 %1554
      %1556 = vadd.xlane.f32.xlu0 %v1509
      %v1557 = vpop.xlane.xlu0 %1556
      %1558 = vadd.xlane.f32.xlu0 %v1510
      %v1559 = vpop.xlane.xlu0 %1558
      %1560 = vadd.xlane.f32.xlu0 %v1511
      %v1561 = vpop.xlane.xlu0 %1560
      %1562 = vadd.xlane.f32.xlu0 %v1512
      %v1563 = vpop.xlane.xlu0 %1562
      %1564 = vadd.xlane.f32.xlu0 %v1513
      %v1565 = vpop.xlane.xlu0 %1564
      %1566 = vadd.xlane.f32.xlu0 %v1514
      %v1567 = vpop.xlane.xlu0 %1566
      %1568 = vadd.xlane.f32.xlu0 %v1515
      %v1569 = vpop.xlane.xlu0 %1568
      %v1570 = vmul.f32 %v1519, 0.03125
      %v1571 = vmul.f32 %v1521, 0.03125
      %v1572 = vmul.f32 %v1523, 0.03125
      %v1573 = vmul.f32 %v1525, 0.03125
      %v1574 = vmul.f32 %v1527, 0.03125
      %v1575 = vmul.f32 %v1529, 0.03125
      %v1576 = vmul.f32 %v1531, 0.03125
      %v1577 = vmul.f32 %v1533, 0.03125
      %v1578 = vmul.f32 %v1535, 0.03125
      %v1579 = vmul.f32 %v1537, 0.03125
      %v1580 = vmul.f32 %v1539, 0.03125
      %v1581 = vmul.f32 %v1541, 0.03125
      %v1582 = vmul.f32 %v1543, 0.03125
      %v1583 = vmul.f32 %v1545, 0.03125
      %v1584 = vmul.f32 %v1547, 0.03125
      %v1585 = vmul.f32 %v1549, 0.03125
      %v1586 = vmul.f32 %v1551, 0.03125
      %v1587 = vmul.f32 %v1553, 0.03125
      %v1588 = vmul.f32 %v1555, 0.03125
      %v1589 = vmul.f32 %v1557, 0.03125
      %v1590 = vmul.f32 %v1559, 0.03125
      %v1591 = vmul.f32 %v1561, 0.03125
      %v1592 = vmul.f32 %v1563, 0.03125
      %v1593 = vmul.f32 %v1565, 0.03125
      %v1594 = vmul.f32 %v1567, 0.03125
      %v1595 = vmul.f32 %v1569, 0.03125
      %v1596 = vsub.f32 %v1490, %v1570
      %v1597 = vsub.f32 %v1491, %v1571
      %v1598 = vsub.f32 %v1492, %v1572
      %v1599 = vsub.f32 %v1493, %v1573
      %v1600 = vsub.f32 %v1494, %v1574
      %v1601 = vsub.f32 %v1495, %v1575
      %v1602 = vsub.f32 %v1496, %v1576
      %v1603 = vsub.f32 %v1497, %v1577
      %v1604 = vsub.f32 %v1498, %v1578
      %v1605 = vsub.f32 %v1499, %v1579
      %v1606 = vsub.f32 %v1500, %v1580
      %v1607 = vsub.f32 %v1501, %v1581
      %v1608 = vsub.f32 %v1502, %v1582
      %v1609 = vsub.f32 %v1503, %v1583
      %v1610 = vsub.f32 %v1504, %v1584
      %v1611 = vsub.f32 %v1505, %v1585
      %v1612 = vsub.f32 %v1506, %v1586
      %v1613 = vsub.f32 %v1507, %v1587
      %v1614 = vsub.f32 %v1508, %v1588
      %v1615 = vsub.f32 %v1509, %v1589
      %v1616 = vsub.f32 %v1510, %v1590
      %v1617 = vsub.f32 %v1511, %v1591
      %v1618 = vsub.f32 %v1512, %v1592
      %v1619 = vsub.f32 %v1513, %v1593
      %v1620 = vsub.f32 %v1514, %v1594
      %v1621 = vsub.f32 %v1515, %v1595
      %v1622 = vmul.f32 %v1596, %v501
      %v1623 = vmul.f32 %v1597, %v501
      %v1624 = vmul.f32 %v1598, %v501
      %v1625 = vmul.f32 %v1599, %v501
      %v1626 = vmul.f32 %v1600, %v501
      %v1627 = vmul.f32 %v1601, %v501
      %v1628 = vmul.f32 %v1602, %v501
      %v1629 = vmul.f32 %v1603, %v501
      %v1630 = vmul.f32 %v1604, %v501
      %v1631 = vmul.f32 %v1605, %v501
      %v1632 = vmul.f32 %v1606, %v501
      %v1633 = vmul.f32 %v1607, %v501
      %v1634 = vmul.f32 %v1608, %v501
      %v1635 = vmul.f32 %v1609, %v501
      %v1636 = vmul.f32 %v1610, %v501
      %v1637 = vmul.f32 %v1611, %v501
      %v1638 = vmul.f32 %v1612, %v501
      %v1639 = vmul.f32 %v1613, %v501
      %v1640 = vmul.f32 %v1614, %v501
      %v1641 = vmul.f32 %v1615, %v501
      %v1642 = vmul.f32 %v1616, %v501
      %v1643 = vmul.f32 %v1617, %v501
      %v1644 = vmul.f32 %v1618, %v501
      %v1645 = vmul.f32 %v1619, %v501
      %v1646 = vmul.f32 %v1620, %v501
      %v1647 = vmul.f32 %v1621, %v501
      %v1648 = vmul.f32 %v1622, %v1622
      %v1649 = vmul.f32 %v1623, %v1623
      %v1650 = vmul.f32 %v1624, %v1624
      %v1651 = vmul.f32 %v1625, %v1625
      %v1652 = vmul.f32 %v1626, %v1626
      %v1653 = vmul.f32 %v1627, %v1627
      %v1654 = vmul.f32 %v1628, %v1628
      %v1655 = vmul.f32 %v1629, %v1629
      %v1656 = vmul.f32 %v1630, %v1630
      %v1657 = vmul.f32 %v1631, %v1631
      %v1658 = vmul.f32 %v1632, %v1632
      %v1659 = vmul.f32 %v1633, %v1633
      %v1660 = vmul.f32 %v1634, %v1634
      %v1661 = vmul.f32 %v1635, %v1635
      %v1662 = vmul.f32 %v1636, %v1636
      %v1663 = vmul.f32 %v1637, %v1637
      %v1664 = vmul.f32 %v1638, %v1638
      %v1665 = vmul.f32 %v1639, %v1639
      %v1666 = vmul.f32 %v1640, %v1640
      %v1667 = vmul.f32 %v1641, %v1641
      %v1668 = vmul.f32 %v1642, %v1642
      %v1669 = vmul.f32 %v1643, %v1643
      %v1670 = vmul.f32 %v1644, %v1644
      %v1671 = vmul.f32 %v1645, %v1645
      %v1672 = vmul.f32 %v1646, %v1646
      %v1673 = vmul.f32 %v1647, %v1647
      %1674 = vadd.xlane.f32.xlu0 %v1648
      %v1675 = vpop.xlane.xlu0 %1674
      %1676 = vadd.xlane.f32.xlu0 %v1649
      %v1677 = vpop.xlane.xlu0 %1676
      %1678 = vadd.xlane.f32.xlu0 %v1650
      %v1679 = vpop.xlane.xlu0 %1678
      %1680 = vadd.xlane.f32.xlu0 %v1651
      %v1681 = vpop.xlane.xlu0 %1680
      %1682 = vadd.xlane.f32.xlu0 %v1652
      %v1683 = vpop.xlane.xlu0 %1682
      %1684 = vadd.xlane.f32.xlu0 %v1653
      %v1685 = vpop.xlane.xlu0 %1684
      %1686 = vadd.xlane.f32.xlu0 %v1654
      %v1687 = vpop.xlane.xlu0 %1686
      %1688 = vadd.xlane.f32.xlu0 %v1655
      %v1689 = vpop.xlane.xlu0 %1688
      %1690 = vadd.xlane.f32.xlu0 %v1656
      %v1691 = vpop.xlane.xlu0 %1690
      %1692 = vadd.xlane.f32.xlu0 %v1657
      %v1693 = vpop.xlane.xlu0 %1692
      %1694 = vadd.xlane.f32.xlu0 %v1658
      %v1695 = vpop.xlane.xlu0 %1694
      %1696 = vadd.xlane.f32.xlu0 %v1659
      %v1697 = vpop.xlane.xlu0 %1696
      %1698 = vadd.xlane.f32.xlu0 %v1660
      %v1699 = vpop.xlane.xlu0 %1698
      %1700 = vadd.xlane.f32.xlu0 %v1661
      %v1701 = vpop.xlane.xlu0 %1700
      %1702 = vadd.xlane.f32.xlu0 %v1662
      %v1703 = vpop.xlane.xlu0 %1702
      %1704 = vadd.xlane.f32.xlu0 %v1663
      %v1705 = vpop.xlane.xlu0 %1704
      %1706 = vadd.xlane.f32.xlu0 %v1664
      %v1707 = vpop.xlane.xlu0 %1706
      %1708 = vadd.xlane.f32.xlu0 %v1665
      %v1709 = vpop.xlane.xlu0 %1708
      %1710 = vadd.xlane.f32.xlu0 %v1666
      %v1711 = vpop.xlane.xlu0 %1710
      %1712 = vadd.xlane.f32.xlu0 %v1667
      %v1713 = vpop.xlane.xlu0 %1712
      %1714 = vadd.xlane.f32.xlu0 %v1668
      %v1715 = vpop.xlane.xlu0 %1714
      %1716 = vadd.xlane.f32.xlu0 %v1669
      %v1717 = vpop.xlane.xlu0 %1716
      %1718 = vadd.xlane.f32.xlu0 %v1670
      %v1719 = vpop.xlane.xlu0 %1718
      %1720 = vadd.xlane.f32.xlu0 %v1671
      %v1721 = vpop.xlane.xlu0 %1720
      %1722 = vadd.xlane.f32.xlu0 %v1672
      %v1723 = vpop.xlane.xlu0 %1722
      %1724 = vadd.xlane.f32.xlu0 %v1673
      %v1725 = vpop.xlane.xlu0 %1724
      %v1726 = vmul.f32 %v1675, 0.03125
      %v1727 = vmul.f32 %v1677, 0.03125
      %v1728 = vmul.f32 %v1679, 0.03125
      %v1729 = vmul.f32 %v1681, 0.03125
      %v1730 = vmul.f32 %v1683, 0.03125
      %v1731 = vmul.f32 %v1685, 0.03125
      %v1732 = vmul.f32 %v1687, 0.03125
      %v1733 = vmul.f32 %v1689, 0.03125
      %v1734 = vmul.f32 %v1691, 0.03125
      %v1735 = vmul.f32 %v1693, 0.03125
      %v1736 = vmul.f32 %v1695, 0.03125
      %v1737 = vmul.f32 %v1697, 0.03125
      %v1738 = vmul.f32 %v1699, 0.03125
      %v1739 = vmul.f32 %v1701, 0.03125
      %v1740 = vmul.f32 %v1703, 0.03125
      %v1741 = vmul.f32 %v1705, 0.03125
      %v1742 = vmul.f32 %v1707, 0.03125
      %v1743 = vmul.f32 %v1709, 0.03125
      %v1744 = vmul.f32 %v1711, 0.03125
      %v1745 = vmul.f32 %v1713, 0.03125
      %v1746 = vmul.f32 %v1715, 0.03125
      %v1747 = vmul.f32 %v1717, 0.03125
      %v1748 = vmul.f32 %v1719, 0.03125
      %v1749 = vmul.f32 %v1721, 0.03125
      %v1750 = vmul.f32 %v1723, 0.03125
      %v1751 = vmul.f32 %v1725, 0.03125
      %v1752 = vadd.f32 %v1726, 1e-05
      %v1753 = vadd.f32 %v1727, 1e-05
      %v1754 = vadd.f32 %v1728, 1e-05
      %v1755 = vadd.f32 %v1729, 1e-05
      %v1756 = vadd.f32 %v1730, 1e-05
      %v1757 = vadd.f32 %v1731, 1e-05
      %v1758 = vadd.f32 %v1732, 1e-05
      %v1759 = vadd.f32 %v1733, 1e-05
      %v1760 = vadd.f32 %v1734, 1e-05
      %v1761 = vadd.f32 %v1735, 1e-05
      %v1762 = vadd.f32 %v1736, 1e-05
      %v1763 = vadd.f32 %v1737, 1e-05
      %v1764 = vadd.f32 %v1738, 1e-05
      %v1765 = vadd.f32 %v1739, 1e-05
      %v1766 = vadd.f32 %v1740, 1e-05
      %v1767 = vadd.f32 %v1741, 1e-05
      %v1768 = vadd.f32 %v1742, 1e-05
      %v1769 = vadd.f32 %v1743, 1e-05
      %v1770 = vadd.f32 %v1744, 1e-05
      %v1771 = vadd.f32 %v1745, 1e-05
      %v1772 = vadd.f32 %v1746, 1e-05
      %v1773 = vadd.f32 %v1747, 1e-05
      %v1774 = vadd.f32 %v1748, 1e-05
      %v1775 = vadd.f32 %v1749, 1e-05
      %v1776 = vadd.f32 %v1750, 1e-05
      %v1777 = vadd.f32 %v1751, 1e-05
      %v1778 = vrsqrt.pop %v1752
      %v1779 = vrsqrt.pop %v1753
      %v1780 = vrsqrt.pop %v1754
      %v1781 = vrsqrt.pop %v1755
      %v1782 = vrsqrt.pop %v1756
      %v1783 = vrsqrt.pop %v1757
      %v1784 = vrsqrt.pop %v1758
      %v1785 = vrsqrt.pop %v1759
      %v1786 = vrsqrt.pop %v1760
      %v1787 = vrsqrt.pop %v1761
      %v1788 = vrsqrt.pop %v1762
      %v1789 = vrsqrt.pop %v1763
      %v1790 = vrsqrt.pop %v1764
      %v1791 = vrsqrt.pop %v1765
      %v1792 = vrsqrt.pop %v1766
      %v1793 = vrsqrt.pop %v1767
      %v1794 = vrsqrt.pop %v1768
      %v1795 = vrsqrt.pop %v1769
      %v1796 = vrsqrt.pop %v1770
      %v1797 = vrsqrt.pop %v1771
      %v1798 = vrsqrt.pop %v1772
      %v1799 = vrsqrt.pop %v1773
      %v1800 = vrsqrt.pop %v1774
      %v1801 = vrsqrt.pop %v1775
      %v1802 = vrsqrt.pop %v1776
      %v1803 = vrsqrt.pop %v1777
      %v1804 = vmul.f32 %v1622, %v1778
      %v1805 = vmul.f32 %v1623, %v1779
      %v1806 = vmul.f32 %v1624, %v1780
      %v1807 = vmul.f32 %v1625, %v1781
      %v1808 = vmul.f32 %v1626, %v1782
      %v1809 = vmul.f32 %v1627, %v1783
      %v1810 = vmul.f32 %v1628, %v1784
      %v1811 = vmul.f32 %v1629, %v1785
      %v1812 = vmul.f32 %v1630, %v1786
      %v1813 = vmul.f32 %v1631, %v1787
      %v1814 = vmul.f32 %v1632, %v1788
      %v1815 = vmul.f32 %v1633, %v1789
      %v1816 = vmul.f32 %v1634, %v1790
      %v1817 = vmul.f32 %v1635, %v1791
      %v1818 = vmul.f32 %v1636, %v1792
      %v1819 = vmul.f32 %v1637, %v1793
      %v1820 = vmul.f32 %v1638, %v1794
      %v1821 = vmul.f32 %v1639, %v1795
      %v1822 = vmul.f32 %v1640, %v1796
      %v1823 = vmul.f32 %v1641, %v1797
      %v1824 = vmul.f32 %v1642, %v1798
      %v1825 = vmul.f32 %v1643, %v1799
      %v1826 = vmul.f32 %v1644, %v1800
      %v1827 = vmul.f32 %v1645, %v1801
      %v1828 = vmul.f32 %v1646, %v1802
      %v1829 = vmul.f32 %v1647, %v1803
      %v1831 = vlaneseq
      %v1832 = vshrl.u32 %v1831, 7
      %v1833 = vsub.s32 0, %v1832
      %v1834 = vrot.slane %v1516, %v1833
      %v1836 = vmul.f32 %v1804, %v1834
      %v1837 = vmul.f32 %v1805, %v1834
      %v1838 = vmul.f32 %v1806, %v1834
      %v1839 = vmul.f32 %v1807, %v1834
      %v1840 = vmul.f32 %v1808, %v1834
      %v1841 = vmul.f32 %v1809, %v1834
      %v1842 = vmul.f32 %v1810, %v1834
      %v1843 = vmul.f32 %v1811, %v1834
      %v1844 = vmul.f32 %v1812, %v1834
      %v1845 = vmul.f32 %v1813, %v1834
      %v1846 = vmul.f32 %v1814, %v1834
      %v1847 = vmul.f32 %v1815, %v1834
      %v1848 = vmul.f32 %v1816, %v1834
      %v1849 = vmul.f32 %v1817, %v1834
      %v1850 = vmul.f32 %v1818, %v1834
      %v1851 = vmul.f32 %v1819, %v1834
      %v1852 = vmul.f32 %v1820, %v1834
      %v1853 = vmul.f32 %v1821, %v1834
      %v1854 = vmul.f32 %v1822, %v1834
      %v1855 = vmul.f32 %v1823, %v1834
      %v1856 = vmul.f32 %v1824, %v1834
      %v1857 = vmul.f32 %v1825, %v1834
      %v1858 = vmul.f32 %v1826, %v1834
      %v1859 = vmul.f32 %v1827, %v1834
      %v1860 = vmul.f32 %v1828, %v1834
      %v1861 = vmul.f32 %v1829, %v1834
      %v1863 = vlaneseq
      %v1864 = vshrl.u32 %v1863, 7
      %v1865 = vsub.s32 0, %v1864
      %v1866 = vrot.slane %v1517, %v1865
      %v1868 = vadd.f32 %v1836, %v1866
      %v1869 = vadd.f32 %v1837, %v1866
      %v1870 = vadd.f32 %v1838, %v1866
      %v1871 = vadd.f32 %v1839, %v1866
      %v1872 = vadd.f32 %v1840, %v1866
      %v1873 = vadd.f32 %v1841, %v1866
      %v1874 = vadd.f32 %v1842, %v1866
      %v1875 = vadd.f32 %v1843, %v1866
      %v1876 = vadd.f32 %v1844, %v1866
      %v1877 = vadd.f32 %v1845, %v1866
      %v1878 = vadd.f32 %v1846, %v1866
      %v1879 = vadd.f32 %v1847, %v1866
      %v1880 = vadd.f32 %v1848, %v1866
      %v1881 = vadd.f32 %v1849, %v1866
      %v1882 = vadd.f32 %v1850, %v1866
      %v1883 = vadd.f32 %v1851, %v1866
      %v1884 = vadd.f32 %v1852, %v1866
      %v1885 = vadd.f32 %v1853, %v1866
      %v1886 = vadd.f32 %v1854, %v1866
      %v1887 = vadd.f32 %v1855, %v1866
      %v1888 = vadd.f32 %v1856, %v1866
      %v1889 = vadd.f32 %v1857, %v1866
      %v1890 = vadd.f32 %v1858, %v1866
      %v1891 = vadd.f32 %v1859, %v1866
      %v1892 = vadd.f32 %v1860, %v1866
      %v1893 = vadd.f32 %v1861, %v1866
      %v1894 = vpack.c.bf16 %v1869, %v1868
      %v1895 = vpack.c.bf16 %v1871, %v1870
      %v1896 = vpack.c.bf16 %v1873, %v1872
      %v1897 = vpack.c.bf16 %v1875, %v1874
      %v1898 = vpack.c.bf16 %v1877, %v1876
      %v1899 = vpack.c.bf16 %v1879, %v1878
      %v1900 = vpack.c.bf16 %v1881, %v1880
      %v1901 = vpack.c.bf16 %v1883, %v1882
      %v1902 = vpack.c.bf16 %v1885, %v1884
      %v1903 = vpack.c.bf16 %v1887, %v1886
      %v1904 = vpack.c.bf16 %v1889, %v1888
      %v1905 = vpack.c.bf16 %v1891, %v1890
      %v1906 = vpack.c.bf16 %v1893, %v1892
      %v1907 = vld [vmem:[%s7] sm:$0xf]
      %v1908 = vld [vmem:[%s7 + $0x4] sm:$0xf]
      %v1909 = vld [vmem:[%s7 + $0x8] sm:$0xf]
      %v1910 = vld [vmem:[%s7 + $0xc] sm:$0xf]
      %v1911 = vld [vmem:[%s7 + $0x10] sm:$0xf]
      %v1912 = vld [vmem:[%s7 + $0x14] sm:$0xf]
      %v1913 = vld [vmem:[%s7 + $0x18] sm:$0xf]
      %v1914 = vld [vmem:[%s7 + $0x1c] sm:$0xf]
      %v1915 = vld [vmem:[%s7 + $0x20] sm:$0xf]
      %v1916 = vld [vmem:[%s7 + $0x24] sm:$0xf]
      %v1917 = vld [vmem:[%s7 + $0x28] sm:$0xf]
      %v1918 = vld [vmem:[%s7 + $0x2c] sm:$0xf]
      %v1919 = vld [vmem:[%s7 + $0x30] sm:$0xf]
      %v1920 = vld [vmem:[%s7 + $0x34] sm:$0xf]
      %v1921 = vld [vmem:[%s7 + $0x38] sm:$0xf]
      %v1922 = vld [vmem:[%s7 + $0x3c] sm:$0xf]
      %v1923 = vld [vmem:[%s8] sm:$0x1]
      %v1925 = vlaneseq
      %v1926 = vshrl.u32 %v1925, 7
      %v1927 = vsub.s32 0, %v1926
      %v1928 = vrot.slane %v1923, %v1927
      %v1946 = vunpack.c.l.b16 %v1907
      %v1947 = vunpack.c.l.b16 %v1908
      %v1948 = vunpack.c.l.b16 %v1909
      %v1949 = vunpack.c.l.b16 %v1910
      %v1950 = vunpack.c.l.b16 %v1911
      %v1951 = vunpack.c.l.b16 %v1912
      %v1952 = vunpack.c.l.b16 %v1913
      %v1953 = vunpack.c.l.b16 %v1914
      %v1954 = vunpack.c.l.b16 %v1915
      %v1955 = vunpack.c.l.b16 %v1916
      %v1956 = vunpack.c.l.b16 %v1917
      %v1957 = vunpack.c.l.b16 %v1918
      %v1958 = vunpack.c.l.b16 %v1919
      %v1959 = vunpack.c.l.b16 %v1920
      %v1960 = vunpack.c.l.b16 %v1921
      %v1961 = vunpack.c.l.b16 %v1922
      %v1962 = vpack.c.b16 %v1947, %v1946
      %v1963 = vpack.c.b16 %v1949, %v1948
      %v1964 = vpack.c.b16 %v1951, %v1950
      %v1965 = vpack.c.b16 %v1953, %v1952
      %v1966 = vpack.c.b16 %v1955, %v1954
      %v1967 = vpack.c.b16 %v1957, %v1956
      %v1968 = vpack.c.b16 %v1959, %v1958
      %v1969 = vpack.c.b16 %v1961, %v1960
      %1978 = vmatprep.subr.bf16.mxu0 0
      %1979 = vmatpush1.bf16.msra.mxu0 %v1962
      %1980 = vmatprep.subr.bf16.mxu0 0
      %1981 = vmatpush1.bf16.msra.mxu0 %v1963
      %1982 = vmatprep.subr.bf16.mxu0 0
      %1983 = vmatpush1.bf16.msra.mxu0 %v1964
      %1984 = vmatprep.subr.bf16.mxu0 0
      %1985 = vmatpush1.bf16.msra.mxu0 %v1965
      %1986 = vmatprep.subr.bf16.mxu0 0
      %1987 = vmatpush1.bf16.msra.mxu0 %v1966
      %1988 = vmatprep.subr.bf16.mxu0 0
      %1989 = vmatpush1.bf16.msra.mxu0 %v1967
      %1990 = vmatprep.subr.bf16.mxu0 0
      %1991 = vmatpush1.bf16.msra.mxu0 %v1968
      %1992 = vmatprep.subr.bf16.mxu0 0
      %1993 = vmatpush1.bf16.msra.mxu0 %v1969
      %1994 = vmatprep.subr.bf16.mxu0 0
      %1995 = vmatpush1.bf16.msra.mxu0 0
      %1996 = vmatprep.subr.bf16.mxu0 0
      %1997 = vmatpush1.bf16.msra.mxu0 0
      %1998 = vmatprep.subr.bf16.mxu0 0
      %1999 = vmatpush1.bf16.msra.mxu0 0
      %2000 = vmatprep.subr.bf16.mxu0 0
      %2001 = vmatpush1.bf16.msra.mxu0 0
      %2002 = vmatprep.subr.bf16.mxu0 0
      %2003 = vmatpush1.bf16.msra.mxu0 0
      %2004 = vmatprep.subr.bf16.mxu0 0
      %2005 = vmatpush1.bf16.msra.mxu0 0
      %2006 = vmatprep.subr.bf16.mxu0 0
      %2007 = vmatpush1.bf16.msra.mxu0 0
      %2008 = vmatprep.subr.bf16.mxu0 0
      %2009 = vmatpush1.bf16.msra.mxu0 0
      %2010 = vmatprep.mubr.bf16.mxu0 0
      %2011 = vmatmul.mubr.bf16.gmra.mrb[0].mxu0 %v1894
      %v2012 = vpop.f32.mrb[0].mxu0
      %v2013 = vadd.f32 %v1928, %v2012
      %v2014 = vpop.f32.mrb[0].mxu0
      %v2015 = vpop.f32.mrb[0].mxu0
      %v2016 = vadd.f32 %v1928, %v2015
      %v2017 = vpop.f32.mrb[0].mxu0
      %2018 = vmatprep.mubr.bf16.mxu0 0
      %2019 = vmatmul.mubr.bf16.gmra.mrb[0].mxu0 %v1895
      %v2020 = vpop.f32.mrb[0].mxu0
      %v2021 = vadd.f32 %v1928, %v2020
      %v2022 = vpop.f32.mrb[0].mxu0
      %v2023 = vpop.f32.mrb[0].mxu0
      %v2024 = vadd.f32 %v1928, %v2023
      %v2025 = vpop.f32.mrb[0].mxu0
      %2026 = vmatprep.mubr.bf16.mxu0 0
      %2027 = vmatmul.mubr.bf16.gmra.mrb[0].mxu0 %v1896
      %v2028 = vpop.f32.mrb[0].mxu0
      %v2029 = vadd.f32 %v1928, %v2028
      %v2030 = vpop.f32.mrb[0].mxu0
      %v2031 = vpop.f32.mrb[0].mxu0
      %v2032 = vadd.f32 %v1928, %v2031
      %v2033 = vpop.f32.mrb[0].mxu0
      %2034 = vmatprep.mubr.bf16.mxu0 0
      %2035 = vmatmul.mubr.bf16.gmra.mrb[0].mxu0 %v1897
      %v2036 = vpop.f32.mrb[0].mxu0
      %v2037 = vadd.f32 %v1928, %v2036
      %v2038 = vpop.f32.mrb[0].mxu0
      %v2039 = vpop.f32.mrb[0].mxu0
      %v2040 = vadd.f32 %v1928, %v2039
      %v2041 = vpop.f32.mrb[0].mxu0
      %2042 = vmatprep.mubr.bf16.mxu0 0
      %2043 = vmatmul.mubr.bf16.gmra.mrb[0].mxu0 %v1898
      %v2044 = vpop.f32.mrb[0].mxu0
      %v2045 = vadd.f32 %v1928, %v2044
      %v2046 = vpop.f32.mrb[0].mxu0
      %v2047 = vpop.f32.mrb[0].mxu0
      %v2048 = vadd.f32 %v1928, %v2047
      %v2049 = vpop.f32.mrb[0].mxu0
      %2050 = vmatprep.mubr.bf16.mxu0 0
      %2051 = vmatmul.mubr.bf16.gmra.mrb[0].mxu0 %v1899
      %v2052 = vpop.f32.mrb[0].mxu0
      %v2053 = vadd.f32 %v1928, %v2052
      %v2054 = vpop.f32.mrb[0].mxu0
      %v2055 = vpop.f32.mrb[0].mxu0
      %v2056 = vadd.f32 %v1928, %v2055
      %v2057 = vpop.f32.mrb[0].mxu0
      %2058 = vmatprep.mubr.bf16.mxu0 0
      %2059 = vmatmul.mubr.bf16.gmra.mrb[0].mxu0 %v1900
      %v2060 = vpop.f32.mrb[0].mxu0
      %v2061 = vadd.f32 %v1928, %v2060
      %v2062 = vpop.f32.mrb[0].mxu0
      %v2063 = vpop.f32.mrb[0].mxu0
      %v2064 = vadd.f32 %v1928, %v2063
      %v2065 = vpop.f32.mrb[0].mxu0
      %2066 = vmatprep.mubr.bf16.mxu0 0
      %2067 = vmatmul.mubr.bf16.gmra.mrb[0].mxu0 %v1901
      %v2068 = vpop.f32.mrb[0].mxu0
      %v2069 = vadd.f32 %v1928, %v2068
      %v2070 = vpop.f32.mrb[0].mxu0
      %v2071 = vpop.f32.mrb[0].mxu0
      %v2072 = vadd.f32 %v1928, %v2071
      %v2073 = vpop.f32.mrb[0].mxu0
      %2074 = vmatprep.mubr.bf16.mxu0 0
      %2075 = vmatmul.mubr.bf16.gmra.mrb[0].mxu0 %v1902
      %v2076 = vpop.f32.mrb[0].mxu0
      %v2077 = vadd.f32 %v1928, %v2076
      %v2078 = vpop.f32.mrb[0].mxu0
      %v2079 = vpop.f32.mrb[0].mxu0
      %v2080 = vadd.f32 %v1928, %v2079
      %v2081 = vpop.f32.mrb[0].mxu0
      %2082 = vmatprep.mubr.bf16.mxu0 0
      %2083 = vmatmul.mubr.bf16.gmra.mrb[0].mxu0 %v1903
      %v2084 = vpop.f32.mrb[0].mxu0
      %v2085 = vadd.f32 %v1928, %v2084
      %v2086 = vpop.f32.mrb[0].mxu0
      %v2087 = vpop.f32.mrb[0].mxu0
      %v2088 = vadd.f32 %v1928, %v2087
      %v2089 = vpop.f32.mrb[0].mxu0
      %2090 = vmatprep.mubr.bf16.mxu0 0
      %2091 = vmatmul.mubr.bf16.gmra.mrb[0].mxu0 %v1904
      %v2092 = vpop.f32.mrb[0].mxu0
      %v2093 = vadd.f32 %v1928, %v2092
      %v2094 = vpop.f32.mrb[0].mxu0
      %v2095 = vpop.f32.mrb[0].mxu0
      %v2096 = vadd.f32 %v1928, %v2095
      %v2097 = vpop.f32.mrb[0].mxu0
      %2098 = vmatprep.mubr.bf16.mxu0 0
      %2099 = vmatmul.mubr.bf16.gmra.mrb[0].mxu0 %v1905
      %v2100 = vpop.f32.mrb[0].mxu0
      %v2101 = vadd.f32 %v1928, %v2100
      %v2102 = vpop.f32.mrb[0].mxu0
      %v2103 = vpop.f32.mrb[0].mxu0
      %v2104 = vadd.f32 %v1928, %v2103
      %v2105 = vpop.f32.mrb[0].mxu0
      %2106 = vmatprep.mubr.bf16.mxu0 0
      %2107 = vmatmul.mubr.bf16.gmra.mrb[0].mxu0 %v1906
      %v2108 = vpop.f32.mrb[0].mxu0
      %v2109 = vadd.f32 %v1928, %v2108
      %v2110 = vpop.f32.mrb[0].mxu0
      %v2111 = vpop.f32.mrb[0].mxu0
      %v2112 = vadd.f32 %v1928, %v2111
      %v2113 = vpop.f32.mrb[0].mxu0
      %2114 = vdwg.mxu0
      %v2115 = vmul.f32 %v2013, 0.5
      %v2116 = vmul.f32 %v2016, 0.5
      %v2117 = vmul.f32 %v2021, 0.5
      %v2118 = vmul.f32 %v2024, 0.5
      %v2119 = vmul.f32 %v2029, 0.5
      %v2120 = vmul.f32 %v2032, 0.5
      %v2121 = vmul.f32 %v2037, 0.5
      %v2122 = vmul.f32 %v2040, 0.5
      %v2123 = vmul.f32 %v2045, 0.5
      %v2124 = vmul.f32 %v2048, 0.5
      %v2125 = vmul.f32 %v2053, 0.5
      %v2126 = vmul.f32 %v2056, 0.5
      %v2127 = vmul.f32 %v2061, 0.5
      %v2128 = vmul.f32 %v2064, 0.5
      %v2129 = vmul.f32 %v2069, 0.5
      %v2130 = vmul.f32 %v2072, 0.5
      %v2131 = vmul.f32 %v2077, 0.5
      %v2132 = vmul.f32 %v2080, 0.5
      %v2133 = vmul.f32 %v2085, 0.5
      %v2134 = vmul.f32 %v2088, 0.5
      %v2135 = vmul.f32 %v2093, 0.5
      %v2136 = vmul.f32 %v2096, 0.5
      %v2137 = vmul.f32 %v2101, 0.5
      %v2138 = vmul.f32 %v2104, 0.5
      %v2139 = vmul.f32 %v2109, 0.5
      %v2140 = vmul.f32 %v2112, 0.5
      %v2141 = vmul.f32 %v2013, 0.044715
      %v2142 = vmul.f32 %v2016, 0.044715
      %v2143 = vmul.f32 %v2021, 0.044715
      %v2144 = vmul.f32 %v2024, 0.044715
      %v2145 = vmul.f32 %v2029, 0.044715
      %v2146 = vmul.f32 %v2032, 0.044715
      %v2147 = vmul.f32 %v2037, 0.044715
      %v2148 = vmul.f32 %v2040, 0.044715
      %v2149 = vmul.f32 %v2045, 0.044715
      %v2150 = vmul.f32 %v2048, 0.044715
      %v2151 = vmul.f32 %v2053, 0.044715
      %v2152 = vmul.f32 %v2056, 0.044715
      %v2153 = vmul.f32 %v2061, 0.044715
      %v2154 = vmul.f32 %v2064, 0.044715
      %v2155 = vmul.f32 %v2069, 0.044715
      %v2156 = vmul.f32 %v2072, 0.044715
      %v2157 = vmul.f32 %v2077, 0.044715
      %v2158 = vmul.f32 %v2080, 0.044715
      %v2159 = vmul.f32 %v2085, 0.044715
      %v2160 = vmul.f32 %v2088, 0.044715
      %v2161 = vmul.f32 %v2093, 0.044715
      %v2162 = vmul.f32 %v2096, 0.044715
      %v2163 = vmul.f32 %v2101, 0.044715
      %v2164 = vmul.f32 %v2104, 0.044715
      %v2165 = vmul.f32 %v2109, 0.044715
      %v2166 = vmul.f32 %v2112, 0.044715
      %v2167 = vmul.f32 %v2141, %v2013
      %v2168 = vmul.f32 %v2142, %v2016
      %v2169 = vmul.f32 %v2143, %v2021
      %v2170 = vmul.f32 %v2144, %v2024
      %v2171 = vmul.f32 %v2145, %v2029
      %v2172 = vmul.f32 %v2146, %v2032
      %v2173 = vmul.f32 %v2147, %v2037
      %v2174 = vmul.f32 %v2148, %v2040
      %v2175 = vmul.f32 %v2149, %v2045
      %v2176 = vmul.f32 %v2150, %v2048
      %v2177 = vmul.f32 %v2151, %v2053
      %v2178 = vmul.f32 %v2152, %v2056
      %v2179 = vmul.f32 %v2153, %v2061
      %v2180 = vmul.f32 %v2154, %v2064
      %v2181 = vmul.f32 %v2155, %v2069
      %v2182 = vmul.f32 %v2156, %v2072
      %v2183 = vmul.f32 %v2157, %v2077
      %v2184 = vmul.f32 %v2158, %v2080
      %v2185 = vmul.f32 %v2159, %v2085
      %v2186 = vmul.f32 %v2160, %v2088
      %v2187 = vmul.f32 %v2161, %v2093
      %v2188 = vmul.f32 %v2162, %v2096
      %v2189 = vmul.f32 %v2163, %v2101
      %v2190 = vmul.f32 %v2164, %v2104
      %v2191 = vmul.f32 %v2165, %v2109
      %v2192 = vmul.f32 %v2166, %v2112
      %v2193 = vmul.f32 %v2167, %v2013
      %v2194 = vmul.f32 %v2168, %v2016
      %v2195 = vmul.f32 %v2169, %v2021
      %v2196 = vmul.f32 %v2170, %v2024
      %v2197 = vmul.f32 %v2171, %v2029
      %v2198 = vmul.f32 %v2172, %v2032
      %v2199 = vmul.f32 %v2173, %v2037
      %v2200 = vmul.f32 %v2174, %v2040
      %v2201 = vmul.f32 %v2175, %v2045
      %v2202 = vmul.f32 %v2176, %v2048
      %v2203 = vmul.f32 %v2177, %v2053
      %v2204 = vmul.f32 %v2178, %v2056
      %v2205 = vmul.f32 %v2179, %v2061
      %v2206 = vmul.f32 %v2180, %v2064
      %v2207 = vmul.f32 %v2181, %v2069
      %v2208 = vmul.f32 %v2182, %v2072
      %v2209 = vmul.f32 %v2183, %v2077
      %v2210 = vmul.f32 %v2184, %v2080
      %v2211 = vmul.f32 %v2185, %v2085
      %v2212 = vmul.f32 %v2186, %v2088
      %v2213 = vmul.f32 %v2187, %v2093
      %v2214 = vmul.f32 %v2188, %v2096
      %v2215 = vmul.f32 %v2189, %v2101
      %v2216 = vmul.f32 %v2190, %v2104
      %v2217 = vmul.f32 %v2191, %v2109
      %v2218 = vmul.f32 %v2192, %v2112
      %v2219 = vadd.f32 %v2013, %v2193
      %v2220 = vadd.f32 %v2016, %v2194
      %v2221 = vadd.f32 %v2021, %v2195
      %v2222 = vadd.f32 %v2024, %v2196
      %v2223 = vadd.f32 %v2029, %v2197
      %v2224 = vadd.f32 %v2032, %v2198
      %v2225 = vadd.f32 %v2037, %v2199
      %v2226 = vadd.f32 %v2040, %v2200
      %v2227 = vadd.f32 %v2045, %v2201
      %v2228 = vadd.f32 %v2048, %v2202
      %v2229 = vadd.f32 %v2053, %v2203
      %v2230 = vadd.f32 %v2056, %v2204
      %v2231 = vadd.f32 %v2061, %v2205
      %v2232 = vadd.f32 %v2064, %v2206
      %v2233 = vadd.f32 %v2069, %v2207
      %v2234 = vadd.f32 %v2072, %v2208
      %v2235 = vadd.f32 %v2077, %v2209
      %v2236 = vadd.f32 %v2080, %v2210
      %v2237 = vadd.f32 %v2085, %v2211
      %v2238 = vadd.f32 %v2088, %v2212
      %v2239 = vadd.f32 %v2093, %v2213
      %v2240 = vadd.f32 %v2096, %v2214
      %v2241 = vadd.f32 %v2101, %v2215
      %v2242 = vadd.f32 %v2104, %v2216
      %v2243 = vadd.f32 %v2109, %v2217
      %v2244 = vadd.f32 %v2112, %v2218
      %v2245 = vmul.f32 %v2219, 0.7978846
      %v2246 = vmul.f32 %v2220, 0.7978846
      %v2247 = vmul.f32 %v2221, 0.7978846
      %v2248 = vmul.f32 %v2222, 0.7978846
      %v2249 = vmul.f32 %v2223, 0.7978846
      %v2250 = vmul.f32 %v2224, 0.7978846
      %v2251 = vmul.f32 %v2225, 0.7978846
      %v2252 = vmul.f32 %v2226, 0.7978846
      %v2253 = vmul.f32 %v2227, 0.7978846
      %v2254 = vmul.f32 %v2228, 0.7978846
      %v2255 = vmul.f32 %v2229, 0.7978846
      %v2256 = vmul.f32 %v2230, 0.7978846
      %v2257 = vmul.f32 %v2231, 0.7978846
      %v2258 = vmul.f32 %v2232, 0.7978846
      %v2259 = vmul.f32 %v2233, 0.7978846
      %v2260 = vmul.f32 %v2234, 0.7978846
      %v2261 = vmul.f32 %v2235, 0.7978846
      %v2262 = vmul.f32 %v2236, 0.7978846
      %v2263 = vmul.f32 %v2237, 0.7978846
      %v2264 = vmul.f32 %v2238, 0.7978846
      %v2265 = vmul.f32 %v2239, 0.7978846
      %v2266 = vmul.f32 %v2240, 0.7978846
      %v2267 = vmul.f32 %v2241, 0.7978846
      %v2268 = vmul.f32 %v2242, 0.7978846
      %v2269 = vmul.f32 %v2243, 0.7978846
      %v2270 = vmul.f32 %v2244, 0.7978846
      %v2271 = vtanh.pop %v2245
      %v2272 = vtanh.pop %v2246
      %v2273 = vtanh.pop %v2247
      %v2274 = vtanh.pop %v2248
      %v2275 = vtanh.pop %v2249
      %v2276 = vtanh.pop %v2250
      %v2277 = vtanh.pop %v2251
      %v2278 = vtanh.pop %v2252
      %v2279 = vtanh.pop %v2253
      %v2280 = vtanh.pop %v2254
      %v2281 = vtanh.pop %v2255
      %v2282 = vtanh.pop %v2256
      %v2283 = vtanh.pop %v2257
      %v2284 = vtanh.pop %v2258
      %v2285 = vtanh.pop %v2259
      %v2286 = vtanh.pop %v2260
      %v2287 = vtanh.pop %v2261
      %v2288 = vtanh.pop %v2262
      %v2289 = vtanh.pop %v2263
      %v2290 = vtanh.pop %v2264
      %v2291 = vtanh.pop %v2265
      %v2292 = vtanh.pop %v2266
      %v2293 = vtanh.pop %v2267
      %v2294 = vtanh.pop %v2268
      %v2295 = vtanh.pop %v2269
      %v2296 = vtanh.pop %v2270
      %v2297 = vadd.f32 %v2271, 1.0
      %v2298 = vadd.f32 %v2272, 1.0
      %v2299 = vadd.f32 %v2273, 1.0
      %v2300 = vadd.f32 %v2274, 1.0
      %v2301 = vadd.f32 %v2275, 1.0
      %v2302 = vadd.f32 %v2276, 1.0
      %v2303 = vadd.f32 %v2277, 1.0
      %v2304 = vadd.f32 %v2278, 1.0
      %v2305 = vadd.f32 %v2279, 1.0
      %v2306 = vadd.f32 %v2280, 1.0
      %v2307 = vadd.f32 %v2281, 1.0
      %v2308 = vadd.f32 %v2282, 1.0
      %v2309 = vadd.f32 %v2283, 1.0
      %v2310 = vadd.f32 %v2284, 1.0
      %v2311 = vadd.f32 %v2285, 1.0
      %v2312 = vadd.f32 %v2286, 1.0
      %v2313 = vadd.f32 %v2287, 1.0
      %v2314 = vadd.f32 %v2288, 1.0
      %v2315 = vadd.f32 %v2289, 1.0
      %v2316 = vadd.f32 %v2290, 1.0
      %v2317 = vadd.f32 %v2291, 1.0
      %v2318 = vadd.f32 %v2292, 1.0
      %v2319 = vadd.f32 %v2293, 1.0
      %v2320 = vadd.f32 %v2294, 1.0
      %v2321 = vadd.f32 %v2295, 1.0
      %v2322 = vadd.f32 %v2296, 1.0
      %v2323 = vmul.f32 %v2115, %v2297
      %v2324 = vmul.f32 %v2116, %v2298
      %v2325 = vmul.f32 %v2117, %v2299
      %v2326 = vmul.f32 %v2118, %v2300
      %v2327 = vmul.f32 %v2119, %v2301
      %v2328 = vmul.f32 %v2120, %v2302
      %v2329 = vmul.f32 %v2121, %v2303
      %v2330 = vmul.f32 %v2122, %v2304
      %v2331 = vmul.f32 %v2123, %v2305
      %v2332 = vmul.f32 %v2124, %v2306
      %v2333 = vmul.f32 %v2125, %v2307
      %v2334 = vmul.f32 %v2126, %v2308
      %v2335 = vmul.f32 %v2127, %v2309
      %v2336 = vmul.f32 %v2128, %v2310
      %v2337 = vmul.f32 %v2129, %v2311
      %v2338 = vmul.f32 %v2130, %v2312
      %v2339 = vmul.f32 %v2131, %v2313
      %v2340 = vmul.f32 %v2132, %v2314
      %v2341 = vmul.f32 %v2133, %v2315
      %v2342 = vmul.f32 %v2134, %v2316
      %v2343 = vmul.f32 %v2135, %v2317
      %v2344 = vmul.f32 %v2136, %v2318
      %v2345 = vmul.f32 %v2137, %v2319
      %v2346 = vmul.f32 %v2138, %v2320
      %v2347 = vmul.f32 %v2139, %v2321
      %v2348 = vmul.f32 %v2140, %v2322
      %v2349 = vpack.c.bf16 %v2324, %v2323
      %v2350 = vpack.c.bf16 %v2326, %v2325
      %v2351 = vpack.c.bf16 %v2328, %v2327
      %v2352 = vpack.c.bf16 %v2330, %v2329
      %v2353 = vpack.c.bf16 %v2332, %v2331
      %v2354 = vpack.c.bf16 %v2334, %v2333
      %v2355 = vpack.c.bf16 %v2336, %v2335
      %v2356 = vpack.c.bf16 %v2338, %v2337
      %v2357 = vpack.c.bf16 %v2340, %v2339
      %v2358 = vpack.c.bf16 %v2342, %v2341
      %v2359 = vpack.c.bf16 %v2344, %v2343
      %v2360 = vpack.c.bf16 %v2346, %v2345
      %v2361 = vpack.c.bf16 %v2348, %v2347
      %v2362 = vld [vmem:[%s9] sm:$0xf]
      %v2363 = vld [vmem:[%s9 + $0x4] sm:$0xf]
      %v2364 = vld [vmem:[%s9 + $0x8] sm:$0xf]
      %v2365 = vld [vmem:[%s9 + $0xc] sm:$0xf]
      %v2366 = vld [vmem:[%s9 + $0x10] sm:$0xf]
      %v2367 = vld [vmem:[%s9 + $0x14] sm:$0xf]
      %v2368 = vld [vmem:[%s9 + $0x18] sm:$0xf]
      %v2369 = vld [vmem:[%s9 + $0x1c] sm:$0xf]
      %v2370 = vld [vmem:[%s9 + $0x20] sm:$0xf]
      %v2371 = vld [vmem:[%s9 + $0x24] sm:$0xf]
      %v2372 = vld [vmem:[%s9 + $0x28] sm:$0xf]
      %v2373 = vld [vmem:[%s9 + $0x2c] sm:$0xf]
      %v2374 = vld [vmem:[%s9 + $0x30] sm:$0xf]
      %v2375 = vld [vmem:[%s9 + $0x34] sm:$0xf]
      %v2376 = vld [vmem:[%s9 + $0x38] sm:$0xf]
      %v2377 = vld [vmem:[%s9 + $0x3c] sm:$0xf]
      %v2378 = vld [vmem:[%s10] sm:$0x1]
      %v2380 = vlaneseq
      %v2381 = vshrl.u32 %v2380, 7
      %v2382 = vsub.s32 0, %v2381
      %v2383 = vrot.slane %v2378, %v2382
      %v2401 = vunpack.c.l.b16 %v2362
      %v2402 = vunpack.c.l.b16 %v2363
      %v2403 = vunpack.c.l.b16 %v2364
      %v2404 = vunpack.c.l.b16 %v2365
      %v2405 = vunpack.c.l.b16 %v2366
      %v2406 = vunpack.c.l.b16 %v2367
      %v2407 = vunpack.c.l.b16 %v2368
      %v2408 = vunpack.c.l.b16 %v2369
      %v2409 = vunpack.c.l.b16 %v2370
      %v2410 = vunpack.c.l.b16 %v2371
      %v2411 = vunpack.c.l.b16 %v2372
      %v2412 = vunpack.c.l.b16 %v2373
      %v2413 = vunpack.c.l.b16 %v2374
      %v2414 = vunpack.c.l.b16 %v2375
      %v2415 = vunpack.c.l.b16 %v2376
      %v2416 = vunpack.c.l.b16 %v2377
      %v2417 = vpack.c.b16 %v2402, %v2401
      %v2418 = vpack.c.b16 %v2404, %v2403
      %v2419 = vpack.c.b16 %v2406, %v2405
      %v2420 = vpack.c.b16 %v2408, %v2407
      %v2421 = vpack.c.b16 %v2410, %v2409
      %v2422 = vpack.c.b16 %v2412, %v2411
      %v2423 = vpack.c.b16 %v2414, %v2413
      %v2424 = vpack.c.b16 %v2416, %v2415
      %2433 = vmatprep.subr.bf16.mxu0 0
      %2434 = vmatpush1.bf16.msra.mxu0 %v2417
      %2435 = vmatprep.subr.bf16.mxu0 0
      %2436 = vmatpush1.bf16.msra.mxu0 %v2418
      %2437 = vmatprep.subr.bf16.mxu0 0
      %2438 = vmatpush1.bf16.msra.mxu0 %v2419
      %2439 = vmatprep.subr.bf16.mxu0 0
      %2440 = vmatpush1.bf16.msra.mxu0 %v2420
      %2441 = vmatprep.subr.bf16.mxu0 0
      %2442 = vmatpush1.bf16.msra.mxu0 %v2421
      %2443 = vmatprep.subr.bf16.mxu0 0
      %2444 = vmatpush1.bf16.msra.mxu0 %v2422
      %2445 = vmatprep.subr.bf16.mxu0 0
      %2446 = vmatpush1.bf16.msra.mxu0 %v2423
      %2447 = vmatprep.subr.bf16.mxu0 0
      %2448 = vmatpush1.bf16.msra.mxu0 %v2424
      %2449 = vmatprep.subr.bf16.mxu0 0
      %2450 = vmatpush1.bf16.msra.mxu0 0
      %2451 = vmatprep.subr.bf16.mxu0 0
      %2452 = vmatpush1.bf16.msra.mxu0 0
      %2453 = vmatprep.subr.bf16.mxu0 0
      %2454 = vmatpush1.bf16.msra.mxu0 0
      %2455 = vmatprep.subr.bf16.mxu0 0
      %2456 = vmatpush1.bf16.msra.mxu0 0
      %2457 = vmatprep.subr.bf16.mxu0 0
      %2458 = vmatpush1.bf16.msra.mxu0 0
      %2459 = vmatprep.subr.bf16.mxu0 0
      %2460 = vmatpush1.bf16.msra.mxu0 0
      %2461 = vmatprep.subr.bf16.mxu0 0
      %2462 = vmatpush1.bf16.msra.mxu0 0
      %2463 = vmatprep.subr.bf16.mxu0 0
      %2464 = vmatpush1.bf16.msra.mxu0 0
      %2465 = vmatprep.mubr.bf16.mxu0 0
      %2466 = vmatmul.mubr.bf16.gmra.mrb[0].mxu0 %v2349
      %v2467 = vpop.f32.mrb[0].mxu0
      %v2468 = vadd.f32 %v2383, %v2467
      %v2469 = vpop.f32.mrb[0].mxu0
      %v2470 = vpop.f32.mrb[0].mxu0
      %v2471 = vadd.f32 %v2383, %v2470
      %v2472 = vpop.f32.mrb[0].mxu0
      %2473 = vmatprep.mubr.bf16.mxu0 0
      %2474 = vmatmul.mubr.bf16.gmra.mrb[0].mxu0 %v2350
      %v2475 = vpop.f32.mrb[0].mxu0
      %v2476 = vadd.f32 %v2383, %v2475
      %v2477 = vpop.f32.mrb[0].mxu0
      %v2478 = vpop.f32.mrb[0].mxu0
      %v2479 = vadd.f32 %v2383, %v2478
      %v2480 = vpop.f32.mrb[0].mxu0
      %2481 = vmatprep.mubr.bf16.mxu0 0
      %2482 = vmatmul.mubr.bf16.gmra.mrb[0].mxu0 %v2351
      %v2483 = vpop.f32.mrb[0].mxu0
      %v2484 = vadd.f32 %v2383, %v2483
      %v2485 = vpop.f32.mrb[0].mxu0
      %v2486 = vpop.f32.mrb[0].mxu0
      %v2487 = vadd.f32 %v2383, %v2486
      %v2488 = vpop.f32.mrb[0].mxu0
      %2489 = vmatprep.mubr.bf16.mxu0 0
      %2490 = vmatmul.mubr.bf16.gmra.mrb[0].mxu0 %v2352
      %v2491 = vpop.f32.mrb[0].mxu0
      %v2492 = vadd.f32 %v2383, %v2491
      %v2493 = vpop.f32.mrb[0].mxu0
      %v2494 = vpop.f32.mrb[0].mxu0
      %v2495 = vadd.f32 %v2383, %v2494
      %v2496 = vpop.f32.mrb[0].mxu0
      %2497 = vmatprep.mubr.bf16.mxu0 0
      %2498 = vmatmul.mubr.bf16.gmra.mrb[0].mxu0 %v2353
      %v2499 = vpop.f32.mrb[0].mxu0
      %v2500 = vadd.f32 %v2383, %v2499
      %v2501 = vpop.f32.mrb[0].mxu0
      %v2502 = vpop.f32.mrb[0].mxu0
      %v2503 = vadd.f32 %v2383, %v2502
      %v2504 = vpop.f32.mrb[0].mxu0
      %2505 = vmatprep.mubr.bf16.mxu0 0
      %2506 = vmatmul.mubr.bf16.gmra.mrb[0].mxu0 %v2354
      %v2507 = vpop.f32.mrb[0].mxu0
      %v2508 = vadd.f32 %v2383, %v2507
      %v2509 = vpop.f32.mrb[0].mxu0
      %v2510 = vpop.f32.mrb[0].mxu0
      %v2511 = vadd.f32 %v2383, %v2510
      %v2512 = vpop.f32.mrb[0].mxu0
      %2513 = vmatprep.mubr.bf16.mxu0 0
      %2514 = vmatmul.mubr.bf16.gmra.mrb[0].mxu0 %v2355
      %v2515 = vpop.f32.mrb[0].mxu0
      %v2516 = vadd.f32 %v2383, %v2515
      %v2517 = vpop.f32.mrb[0].mxu0
      %v2518 = vpop.f32.mrb[0].mxu0
      %v2519 = vadd.f32 %v2383, %v2518
      %v2520 = vpop.f32.mrb[0].mxu0
      %2521 = vmatprep.mubr.bf16.mxu0 0
      %2522 = vmatmul.mubr.bf16.gmra.mrb[0].mxu0 %v2356
      %v2523 = vpop.f32.mrb[0].mxu0
      %v2524 = vadd.f32 %v2383, %v2523
      %v2525 = vpop.f32.mrb[0].mxu0
      %v2526 = vpop.f32.mrb[0].mxu0
      %v2527 = vadd.f32 %v2383, %v2526
      %v2528 = vpop.f32.mrb[0].mxu0
      %2529 = vmatprep.mubr.bf16.mxu0 0
      %2530 = vmatmul.mubr.bf16.gmra.mrb[0].mxu0 %v2357
      %v2531 = vpop.f32.mrb[0].mxu0
      %v2532 = vadd.f32 %v2383, %v2531
      %v2533 = vpop.f32.mrb[0].mxu0
      %v2534 = vpop.f32.mrb[0].mxu0
      %v2535 = vadd.f32 %v2383, %v2534
      %v2536 = vpop.f32.mrb[0].mxu0
      %2537 = vmatprep.mubr.bf16.mxu0 0
      %2538 = vmatmul.mubr.bf16.gmra.mrb[0].mxu0 %v2358
      %v2539 = vpop.f32.mrb[0].mxu0
      %v2540 = vadd.f32 %v2383, %v2539
      %v2541 = vpop.f32.mrb[0].mxu0
      %v2542 = vpop.f32.mrb[0].mxu0
      %v2543 = vadd.f32 %v2383, %v2542
      %v2544 = vpop.f32.mrb[0].mxu0
      %2545 = vmatprep.mubr.bf16.mxu0 0
      %2546 = vmatmul.mubr.bf16.gmra.mrb[0].mxu0 %v2359
      %v2547 = vpop.f32.mrb[0].mxu0
      %v2548 = vadd.f32 %v2383, %v2547
      %v2549 = vpop.f32.mrb[0].mxu0
      %v2550 = vpop.f32.mrb[0].mxu0
      %v2551 = vadd.f32 %v2383, %v2550
      %v2552 = vpop.f32.mrb[0].mxu0
      %2553 = vmatprep.mubr.bf16.mxu0 0
      %2554 = vmatmul.mubr.bf16.gmra.mrb[0].mxu0 %v2360
      %v2555 = vpop.f32.mrb[0].mxu0
      %v2556 = vadd.f32 %v2383, %v2555
      %v2557 = vpop.f32.mrb[0].mxu0
      %v2558 = vpop.f32.mrb[0].mxu0
      %v2559 = vadd.f32 %v2383, %v2558
      %v2560 = vpop.f32.mrb[0].mxu0
      %2561 = vmatprep.mubr.bf16.mxu0 0
      %2562 = vmatmul.mubr.bf16.gmra.mrb[0].mxu0 %v2361
      %v2563 = vpop.f32.mrb[0].mxu0
      %v2564 = vadd.f32 %v2383, %v2563
      %v2565 = vpop.f32.mrb[0].mxu0
      %v2566 = vpop.f32.mrb[0].mxu0
      %v2567 = vadd.f32 %v2383, %v2566
      %v2568 = vpop.f32.mrb[0].mxu0
      %2569 = vdwg.mxu0
      %v2570 = vadd.f32 %v471, %v2468
      %v2571 = vadd.f32 %v472, %v2471
      %v2572 = vadd.f32 %v473, %v2476
      %v2573 = vadd.f32 %v474, %v2479
      %v2574 = vadd.f32 %v475, %v2484
      %v2575 = vadd.f32 %v476, %v2487
      %v2576 = vadd.f32 %v477, %v2492
      %v2577 = vadd.f32 %v478, %v2495
      %v2578 = vadd.f32 %v479, %v2500
      %v2579 = vadd.f32 %v480, %v2503
      %v2580 = vadd.f32 %v481, %v2508
      %v2581 = vadd.f32 %v482, %v2511
      %v2582 = vadd.f32 %v483, %v2516
      %v2583 = vadd.f32 %v484, %v2519
      %v2584 = vadd.f32 %v485, %v2524
      %v2585 = vadd.f32 %v486, %v2527
      %v2586 = vadd.f32 %v487, %v2532
      %v2587 = vadd.f32 %v488, %v2535
      %v2588 = vadd.f32 %v489, %v2540
      %v2589 = vadd.f32 %v490, %v2543
      %v2590 = vadd.f32 %v491, %v2548
      %v2591 = vadd.f32 %v492, %v2551
      %v2592 = vadd.f32 %v493, %v2556
      %v2593 = vadd.f32 %v494, %v2559
      %v2594 = vadd.f32 %v495, %v2564
      %v2595 = vadd.f32 %v496, %v2567
      %2596 = vst [vmem:[%s463] sm:$0xff] %v2570
      %2597 = vst [vmem:[%s463 + $0x8] sm:$0xff] %v2571
      %2598 = vst [vmem:[%s463 + $0x10] sm:$0xff] %v2572
      %2599 = vst [vmem:[%s463 + $0x18] sm:$0xff] %v2573
      %2600 = vst [vmem:[%s463 + $0x20] sm:$0xff] %v2574
      %2601 = vst [vmem:[%s463 + $0x28] sm:$0xff] %v2575
      %2602 = vst [vmem:[%s463 + $0x30] sm:$0xff] %v2576
      %2603 = vst [vmem:[%s463 + $0x38] sm:$0xff] %v2577
      %2604 = vst [vmem:[%s463 + $0x40] sm:$0xff] %v2578
      %2605 = vst [vmem:[%s463 + $0x48] sm:$0xff] %v2579
      %2606 = vst [vmem:[%s463 + $0x50] sm:$0xff] %v2580
      %2607 = vst [vmem:[%s463 + $0x58] sm:$0xff] %v2581
      %2608 = vst [vmem:[%s463 + $0x60] sm:$0xff] %v2582
      %2609 = vst [vmem:[%s463 + $0x68] sm:$0xff] %v2583
      %2610 = vst [vmem:[%s463 + $0x70] sm:$0xff] %v2584
      %2611 = vst [vmem:[%s463 + $0x78] sm:$0xff] %v2585
      %2612 = vst [vmem:[%s463 + $0x80] sm:$0xff] %v2586
      %2613 = vst [vmem:[%s463 + $0x88] sm:$0xff] %v2587
      %2614 = vst [vmem:[%s463 + $0x90] sm:$0xff] %v2588
      %2615 = vst [vmem:[%s463 + $0x98] sm:$0xff] %v2589
      %2616 = vst [vmem:[%s463 + $0xa0] sm:$0xff] %v2590
      %2617 = vst [vmem:[%s463 + $0xa8] sm:$0xff] %v2591
      %2618 = vst [vmem:[%s463 + $0xb0] sm:$0xff] %v2592
      %2619 = vst [vmem:[%s463 + $0xb8] sm:$0xff] %v2593
      %2620 = vst [vmem:[%s463 + $0xc0] sm:$0xff] %v2594
      %2621 = vst [vmem:[%s463 + $0xc8] sm:$0xff] %v2595
      %v2622 = vmul.f32 %v1258, %v1258
      %v2623 = vmul.f32 %v1261, %v1261
      %v2624 = vmul.f32 %v1266, %v1266
      %v2625 = vmul.f32 %v1269, %v1269
      %v2626 = vmul.f32 %v1274, %v1274
      %v2627 = vmul.f32 %v1277, %v1277
      %v2628 = vmul.f32 %v1282, %v1282
      %v2629 = vmul.f32 %v1285, %v1285
      %v2630 = vmul.f32 %v1290, %v1290
      %v2631 = vmul.f32 %v1293, %v1293
      %v2632 = vmul.f32 %v1298, %v1298
      %v2633 = vmul.f32 %v1301, %v1301
      %v2634 = vmul.f32 %v1306, %v1306
      %v2635 = vmul.f32 %v1309, %v1309
      %v2636 = vmul.f32 %v1314, %v1314
      %v2637 = vmul.f32 %v1317, %v1317
      %v2638 = vmul.f32 %v1322, %v1322
      %v2639 = vmul.f32 %v1325, %v1325
      %v2640 = vmul.f32 %v1330, %v1330
      %v2641 = vmul.f32 %v1333, %v1333
      %v2642 = vmul.f32 %v1338, %v1338
      %v2643 = vmul.f32 %v1341, %v1341
      %v2644 = vmul.f32 %v1346, %v1346
      %v2645 = vmul.f32 %v1349, %v1349
      %v2646 = vmul.f32 %v1354, %v1354
      %v2647 = vmul.f32 %v1357, %v1357
      %2648 = vadd.xlane.f32.xlu0 %v2622
      %v2649 = vpop.xlane.xlu0 %2648
      %2650 = vadd.xlane.f32.xlu0 %v2623
      %v2651 = vpop.xlane.xlu0 %2650
      %2652 = vadd.xlane.f32.xlu0 %v2624
      %v2653 = vpop.xlane.xlu0 %2652
      %2654 = vadd.xlane.f32.xlu0 %v2625
      %v2655 = vpop.xlane.xlu0 %2654
      %2656 = vadd.xlane.f32.xlu0 %v2626
      %v2657 = vpop.xlane.xlu0 %2656
      %2658 = vadd.xlane.f32.xlu0 %v2627
      %v2659 = vpop.xlane.xlu0 %2658
      %2660 = vadd.xlane.f32.xlu0 %v2628
      %v2661 = vpop.xlane.xlu0 %2660
      %2662 = vadd.xlane.f32.xlu0 %v2629
      %v2663 = vpop.xlane.xlu0 %2662
      %2664 = vadd.xlane.f32.xlu0 %v2630
      %v2665 = vpop.xlane.xlu0 %2664
      %2666 = vadd.xlane.f32.xlu0 %v2631
      %v2667 = vpop.xlane.xlu0 %2666
      %2668 = vadd.xlane.f32.xlu0 %v2632
      %v2669 = vpop.xlane.xlu0 %2668
      %2670 = vadd.xlane.f32.xlu0 %v2633
      %v2671 = vpop.xlane.xlu0 %2670
      %2672 = vadd.xlane.f32.xlu0 %v2634
      %v2673 = vpop.xlane.xlu0 %2672
      %2674 = vadd.xlane.f32.xlu0 %v2635
      %v2675 = vpop.xlane.xlu0 %2674
      %2676 = vadd.xlane.f32.xlu0 %v2636
      %v2677 = vpop.xlane.xlu0 %2676
      %2678 = vadd.xlane.f32.xlu0 %v2637
      %v2679 = vpop.xlane.xlu0 %2678
      %2680 = vadd.xlane.f32.xlu0 %v2638
      %v2681 = vpop.xlane.xlu0 %2680
      %2682 = vadd.xlane.f32.xlu0 %v2639
      %v2683 = vpop.xlane.xlu0 %2682
      %2684 = vadd.xlane.f32.xlu0 %v2640
      %v2685 = vpop.xlane.xlu0 %2684
      %2686 = vadd.xlane.f32.xlu0 %v2641
      %v2687 = vpop.xlane.xlu0 %2686
      %2688 = vadd.xlane.f32.xlu0 %v2642
      %v2689 = vpop.xlane.xlu0 %2688
      %2690 = vadd.xlane.f32.xlu0 %v2643
      %v2691 = vpop.xlane.xlu0 %2690
      %2692 = vadd.xlane.f32.xlu0 %v2644
      %v2693 = vpop.xlane.xlu0 %2692
      %2694 = vadd.xlane.f32.xlu0 %v2645
      %v2695 = vpop.xlane.xlu0 %2694
      %2696 = vadd.xlane.f32.xlu0 %v2646
      %v2697 = vpop.xlane.xlu0 %2696
      %2698 = vadd.xlane.f32.xlu0 %v2647
      %v2699 = vpop.xlane.xlu0 %2698
      %v2700 = vmul.f32 %v2468, %v2468
      %v2701 = vmul.f32 %v2471, %v2471
      %v2702 = vmul.f32 %v2476, %v2476
      %v2703 = vmul.f32 %v2479, %v2479
      %v2704 = vmul.f32 %v2484, %v2484
      %v2705 = vmul.f32 %v2487, %v2487
      %v2706 = vmul.f32 %v2492, %v2492
      %v2707 = vmul.f32 %v2495, %v2495
      %v2708 = vmul.f32 %v2500, %v2500
      %v2709 = vmul.f32 %v2503, %v2503
      %v2710 = vmul.f32 %v2508, %v2508
      %v2711 = vmul.f32 %v2511, %v2511
      %v2712 = vmul.f32 %v2516, %v2516
      %v2713 = vmul.f32 %v2519, %v2519
      %v2714 = vmul.f32 %v2524, %v2524
      %v2715 = vmul.f32 %v2527, %v2527
      %v2716 = vmul.f32 %v2532, %v2532
      %v2717 = vmul.f32 %v2535, %v2535
      %v2718 = vmul.f32 %v2540, %v2540
      %v2719 = vmul.f32 %v2543, %v2543
      %v2720 = vmul.f32 %v2548, %v2548
      %v2721 = vmul.f32 %v2551, %v2551
      %v2722 = vmul.f32 %v2556, %v2556
      %v2723 = vmul.f32 %v2559, %v2559
      %v2724 = vmul.f32 %v2564, %v2564
      %v2725 = vmul.f32 %v2567, %v2567
      %2726 = vadd.xlane.f32.xlu0 %v2700
      %v2727 = vpop.xlane.xlu0 %2726
      %2728 = vadd.xlane.f32.xlu0 %v2701
      %v2729 = vpop.xlane.xlu0 %2728
      %2730 = vadd.xlane.f32.xlu0 %v2702
      %v2731 = vpop.xlane.xlu0 %2730
      %2732 = vadd.xlane.f32.xlu0 %v2703
      %v2733 = vpop.xlane.xlu0 %2732
      %2734 = vadd.xlane.f32.xlu0 %v2704
      %v2735 = vpop.xlane.xlu0 %2734
      %2736 = vadd.xlane.f32.xlu0 %v2705
      %v2737 = vpop.xlane.xlu0 %2736
      %2738 = vadd.xlane.f32.xlu0 %v2706
      %v2739 = vpop.xlane.xlu0 %2738
      %2740 = vadd.xlane.f32.xlu0 %v2707
      %v2741 = vpop.xlane.xlu0 %2740
      %2742 = vadd.xlane.f32.xlu0 %v2708
      %v2743 = vpop.xlane.xlu0 %2742
      %2744 = vadd.xlane.f32.xlu0 %v2709
      %v2745 = vpop.xlane.xlu0 %2744
      %2746 = vadd.xlane.f32.xlu0 %v2710
      %v2747 = vpop.xlane.xlu0 %2746
      %2748 = vadd.xlane.f32.xlu0 %v2711
      %v2749 = vpop.xlane.xlu0 %2748
      %2750 = vadd.xlane.f32.xlu0 %v2712
      %v2751 = vpop.xlane.xlu0 %2750
      %2752 = vadd.xlane.f32.xlu0 %v2713
      %v2753 = vpop.xlane.xlu0 %2752
      %2754 = vadd.xlane.f32.xlu0 %v2714
      %v2755 = vpop.xlane.xlu0 %2754
      %2756 = vadd.xlane.f32.xlu0 %v2715
      %v2757 = vpop.xlane.xlu0 %2756
      %2758 = vadd.xlane.f32.xlu0 %v2716
      %v2759 = vpop.xlane.xlu0 %2758
      %2760 = vadd.xlane.f32.xlu0 %v2717
      %v2761 = vpop.xlane.xlu0 %2760
      %2762 = vadd.xlane.f32.xlu0 %v2718
      %v2763 = vpop.xlane.xlu0 %2762
      %2764 = vadd.xlane.f32.xlu0 %v2719
      %v2765 = vpop.xlane.xlu0 %2764
      %2766 = vadd.xlane.f32.xlu0 %v2720
      %v2767 = vpop.xlane.xlu0 %2766
      %2768 = vadd.xlane.f32.xlu0 %v2721
      %v2769 = vpop.xlane.xlu0 %2768
      %2770 = vadd.xlane.f32.xlu0 %v2722
      %v2771 = vpop.xlane.xlu0 %2770
      %2772 = vadd.xlane.f32.xlu0 %v2723
      %v2773 = vpop.xlane.xlu0 %2772
      %2774 = vadd.xlane.f32.xlu0 %v2724
      %v2775 = vpop.xlane.xlu0 %2774
      %2776 = vadd.xlane.f32.xlu0 %v2725
      %v2777 = vpop.xlane.xlu0 %2776
      %s2778 = smul.u32 %s25, 208
      %v2779 = vlaneseq
      %v2780 = vshrl.u32 %v2779, 7
      %v2781 = vadd.s32 %v2780, 8
      %v2782 = vadd.s32 %v2780, 16
      %v2783 = vadd.s32 %v2780, 24
      %v2784 = vadd.s32 %v2780, 32
      %v2785 = vadd.s32 %v2780, 40
      %v2786 = vadd.s32 %v2780, 48
      %v2787 = vadd.s32 %v2780, 56
      %v2788 = vadd.s32 %v2780, 64
      %v2789 = vadd.s32 %v2780, 72
      %v2790 = vadd.s32 %v2780, 80
      %v2791 = vadd.s32 %v2780, 88
      %v2792 = vadd.s32 %v2780, 96
      %v2793 = vadd.s32 %v2780, 104
      %v2794 = vadd.s32 %v2780, 112
      %v2795 = vadd.s32 %v2780, 120
      %v2796 = vadd.s32 %v2780, 128
      %v2797 = vadd.s32 %v2780, 136
      %v2798 = vadd.s32 %v2780, 144
      %v2799 = vadd.s32 %v2780, 152
      %v2800 = vadd.s32 %v2780, 160
      %v2801 = vadd.s32 %v2780, 168
      %v2802 = vadd.s32 %v2780, 176
      %v2803 = vadd.s32 %v2780, 184
      %v2804 = vadd.s32 %v2780, 192
      %v2805 = vadd.s32 %v2780, 200
      %v2806 = vstv %s2778
      %v2807 = vadd.s32 %v2806, %v2780
      %v2808 = vadd.s32 %v2806, %v2781
      %v2809 = vadd.s32 %v2806, %v2782
      %v2810 = vadd.s32 %v2806, %v2783
      %v2811 = vadd.s32 %v2806, %v2784
      %v2812 = vadd.s32 %v2806, %v2785
      %v2813 = vadd.s32 %v2806, %v2786
      %v2814 = vadd.s32 %v2806, %v2787
      %v2815 = vadd.s32 %v2806, %v2788
      %v2816 = vadd.s32 %v2806, %v2789
      %v2817 = vadd.s32 %v2806, %v2790
      %v2818 = vadd.s32 %v2806, %v2791
      %v2819 = vadd.s32 %v2806, %v2792
      %v2820 = vadd.s32 %v2806, %v2793
      %v2821 = vadd.s32 %v2806, %v2794
      %v2822 = vadd.s32 %v2806, %v2795
      %v2823 = vadd.s32 %v2806, %v2796
      %v2824 = vadd.s32 %v2806, %v2797
      %v2825 = vadd.s32 %v2806, %v2798
      %v2826 = vadd.s32 %v2806, %v2799
      %v2827 = vadd.s32 %v2806, %v2800
      %v2828 = vadd.s32 %v2806, %v2801
      %v2829 = vadd.s32 %v2806, %v2802
      %v2830 = vadd.s32 %v2806, %v2803
      %v2831 = vadd.s32 %v2806, %v2804
      %v2832 = vadd.s32 %v2806, %v2805
      %vm2833 = vcmp.lt.s32.totalorder %v2807, 400
      %vm2834 = vcmp.lt.s32.totalorder %v2808, 400
      %vm2835 = vcmp.lt.s32.totalorder %v2809, 400
      %vm2836 = vcmp.lt.s32.totalorder %v2810, 400
      %vm2837 = vcmp.lt.s32.totalorder %v2811, 400
      %vm2838 = vcmp.lt.s32.totalorder %v2812, 400
      %vm2839 = vcmp.lt.s32.totalorder %v2813, 400
      %vm2840 = vcmp.lt.s32.totalorder %v2814, 400
      %vm2841 = vcmp.lt.s32.totalorder %v2815, 400
      %vm2842 = vcmp.lt.s32.totalorder %v2816, 400
      %vm2843 = vcmp.lt.s32.totalorder %v2817, 400
      %vm2844 = vcmp.lt.s32.totalorder %v2818, 400
      %vm2845 = vcmp.lt.s32.totalorder %v2819, 400
      %vm2846 = vcmp.lt.s32.totalorder %v2820, 400
      %vm2847 = vcmp.lt.s32.totalorder %v2821, 400
      %vm2848 = vcmp.lt.s32.totalorder %v2822, 400
      %vm2849 = vcmp.lt.s32.totalorder %v2823, 400
      %vm2850 = vcmp.lt.s32.totalorder %v2824, 400
      %vm2851 = vcmp.lt.s32.totalorder %v2825, 400
      %vm2852 = vcmp.lt.s32.totalorder %v2826, 400
      %vm2853 = vcmp.lt.s32.totalorder %v2827, 400
      %vm2854 = vcmp.lt.s32.totalorder %v2828, 400
      %vm2855 = vcmp.lt.s32.totalorder %v2829, 400
      %vm2856 = vcmp.lt.s32.totalorder %v2830, 400
      %vm2857 = vcmp.lt.s32.totalorder %v2831, 400
      %vm2858 = vcmp.lt.s32.totalorder %v2832, 400
      %v2859 = vsel %vm2833, 1, 0
      %v2860 = vsel %vm2834, 1, 0
      %v2861 = vsel %vm2835, 1, 0
      %v2862 = vsel %vm2836, 1, 0
      %v2863 = vsel %vm2837, 1, 0
      %v2864 = vsel %vm2838, 1, 0
      %v2865 = vsel %vm2839, 1, 0
      %v2866 = vsel %vm2840, 1, 0
      %v2867 = vsel %vm2841, 1, 0
      %v2868 = vsel %vm2842, 1, 0
      %v2869 = vsel %vm2843, 1, 0
      %v2870 = vsel %vm2844, 1, 0
      %v2871 = vsel %vm2845, 1, 0
      %v2872 = vsel %vm2846, 1, 0
      %v2873 = vsel %vm2847, 1, 0
      %v2874 = vsel %vm2848, 1, 0
      %v2875 = vsel %vm2849, 1, 0
      %v2876 = vsel %vm2850, 1, 0
      %v2877 = vsel %vm2851, 1, 0
      %v2878 = vsel %vm2852, 1, 0
      %v2879 = vsel %vm2853, 1, 0
      %v2880 = vsel %vm2854, 1, 0
      %v2881 = vsel %vm2855, 1, 0
      %v2882 = vsel %vm2856, 1, 0
      %v2883 = vsel %vm2857, 1, 0
      %v2884 = vsel %vm2858, 1, 0
      %v2885 = vcvt.s32.f32 %v2859
      %v2886 = vcvt.s32.f32 %v2860
      %v2887 = vcvt.s32.f32 %v2861
      %v2888 = vcvt.s32.f32 %v2862
      %v2889 = vcvt.s32.f32 %v2863
      %v2890 = vcvt.s32.f32 %v2864
      %v2891 = vcvt.s32.f32 %v2865
      %v2892 = vcvt.s32.f32 %v2866
      %v2893 = vcvt.s32.f32 %v2867
      %v2894 = vcvt.s32.f32 %v2868
      %v2895 = vcvt.s32.f32 %v2869
      %v2896 = vcvt.s32.f32 %v2870
      %v2897 = vcvt.s32.f32 %v2871
      %v2898 = vcvt.s32.f32 %v2872
      %v2899 = vcvt.s32.f32 %v2873
      %v2900 = vcvt.s32.f32 %v2874
      %v2901 = vcvt.s32.f32 %v2875
      %v2902 = vcvt.s32.f32 %v2876
      %v2903 = vcvt.s32.f32 %v2877
      %v2904 = vcvt.s32.f32 %v2878
      %v2905 = vcvt.s32.f32 %v2879
      %v2906 = vcvt.s32.f32 %v2880
      %v2907 = vcvt.s32.f32 %v2881
      %v2908 = vcvt.s32.f32 %v2882
      %v2909 = vcvt.s32.f32 %v2883
      %v2910 = vcvt.s32.f32 %v2884
      %v2911 = vmul.f32 %v2649, %v2885
      %v2912 = vmul.f32 %v2651, %v2886
      %v2913 = vmul.f32 %v2653, %v2887
      %v2914 = vmul.f32 %v2655, %v2888
      %v2915 = vmul.f32 %v2657, %v2889
      %v2916 = vmul.f32 %v2659, %v2890
      %v2917 = vmul.f32 %v2661, %v2891
      %v2918 = vmul.f32 %v2663, %v2892
      %v2919 = vmul.f32 %v2665, %v2893
      %v2920 = vmul.f32 %v2667, %v2894
      %v2921 = vmul.f32 %v2669, %v2895
      %v2922 = vmul.f32 %v2671, %v2896
      %v2923 = vmul.f32 %v2673, %v2897
      %v2924 = vmul.f32 %v2675, %v2898
      %v2925 = vmul.f32 %v2677, %v2899
      %v2926 = vmul.f32 %v2679, %v2900
      %v2927 = vmul.f32 %v2681, %v2901
      %v2928 = vmul.f32 %v2683, %v2902
      %v2929 = vmul.f32 %v2685, %v2903
      %v2930 = vmul.f32 %v2687, %v2904
      %v2931 = vmul.f32 %v2689, %v2905
      %v2932 = vmul.f32 %v2691, %v2906
      %v2933 = vmul.f32 %v2693, %v2907
      %v2934 = vmul.f32 %v2695, %v2908
      %v2935 = vmul.f32 %v2697, %v2909
      %v2936 = vmul.f32 %v2699, %v2910
      %v2937 = vmul.f32 %v2727, %v2885
      %v2938 = vmul.f32 %v2729, %v2886
      %v2939 = vmul.f32 %v2731, %v2887
      %v2940 = vmul.f32 %v2733, %v2888
      %v2941 = vmul.f32 %v2735, %v2889
      %v2942 = vmul.f32 %v2737, %v2890
      %v2943 = vmul.f32 %v2739, %v2891
      %v2944 = vmul.f32 %v2741, %v2892
      %v2945 = vmul.f32 %v2743, %v2893
      %v2946 = vmul.f32 %v2745, %v2894
      %v2947 = vmul.f32 %v2747, %v2895
      %v2948 = vmul.f32 %v2749, %v2896
      %v2949 = vmul.f32 %v2751, %v2897
      %v2950 = vmul.f32 %v2753, %v2898
      %v2951 = vmul.f32 %v2755, %v2899
      %v2952 = vmul.f32 %v2757, %v2900
      %v2953 = vmul.f32 %v2759, %v2901
      %v2954 = vmul.f32 %v2761, %v2902
      %v2955 = vmul.f32 %v2763, %v2903
      %v2956 = vmul.f32 %v2765, %v2904
      %v2957 = vmul.f32 %v2767, %v2905
      %v2958 = vmul.f32 %v2769, %v2906
      %v2959 = vmul.f32 %v2771, %v2907
      %v2960 = vmul.f32 %v2773, %v2908
      %v2961 = vmul.f32 %v2775, %v2909
      %v2962 = vmul.f32 %v2777, %v2910
      %vm2963 = vcmask 7168
      %v2964 = vsel %vm2963, %v2911, 0.0
      %v2965 = vsel %vm2963, %v2912, 0.0
      %v2966 = vadd.f32 %v2964, %v2965
      %v2967 = vsel %vm2963, %v2913, 0.0
      %v2968 = vadd.f32 %v2966, %v2967
      %v2969 = vsel %vm2963, %v2914, 0.0
      %v2970 = vadd.f32 %v2968, %v2969
      %v2971 = vsel %vm2963, %v2915, 0.0
      %v2972 = vadd.f32 %v2970, %v2971
      %v2973 = vsel %vm2963, %v2916, 0.0
      %v2974 = vadd.f32 %v2972, %v2973
      %v2975 = vsel %vm2963, %v2917, 0.0
      %v2976 = vadd.f32 %v2974, %v2975
      %v2977 = vsel %vm2963, %v2918, 0.0
      %v2978 = vadd.f32 %v2976, %v2977
      %v2979 = vsel %vm2963, %v2919, 0.0
      %v2980 = vadd.f32 %v2978, %v2979
      %v2981 = vsel %vm2963, %v2920, 0.0
      %v2982 = vadd.f32 %v2980, %v2981
      %v2983 = vsel %vm2963, %v2921, 0.0
      %v2984 = vadd.f32 %v2982, %v2983
      %v2985 = vsel %vm2963, %v2922, 0.0
      %v2986 = vadd.f32 %v2984, %v2985
      %v2987 = vsel %vm2963, %v2923, 0.0
      %v2988 = vadd.f32 %v2986, %v2987
      %v2989 = vsel %vm2963, %v2924, 0.0
      %v2990 = vadd.f32 %v2988, %v2989
      %v2991 = vsel %vm2963, %v2925, 0.0
      %v2992 = vadd.f32 %v2990, %v2991
      %v2993 = vsel %vm2963, %v2926, 0.0
      %v2994 = vadd.f32 %v2992, %v2993
      %v2995 = vsel %vm2963, %v2927, 0.0
      %v2996 = vadd.f32 %v2994, %v2995
      %v2997 = vsel %vm2963, %v2928, 0.0
      %v2998 = vadd.f32 %v2996, %v2997
      %v2999 = vsel %vm2963, %v2929, 0.0
      %v3000 = vadd.f32 %v2998, %v2999
      %v3001 = vsel %vm2963, %v2930, 0.0
      %v3002 = vadd.f32 %v3000, %v3001
      %v3003 = vsel %vm2963, %v2931, 0.0
      %v3004 = vadd.f32 %v3002, %v3003
      %v3005 = vsel %vm2963, %v2932, 0.0
      %v3006 = vadd.f32 %v3004, %v3005
      %v3007 = vsel %vm2963, %v2933, 0.0
      %v3008 = vadd.f32 %v3006, %v3007
      %v3009 = vsel %vm2963, %v2934, 0.0
      %v3010 = vadd.f32 %v3008, %v3009
      %v3011 = vsel %vm2963, %v2935, 0.0
      %v3012 = vadd.f32 %v3010, %v3011
      %v3013 = vsel %vm2963, %v2936, 0.0
      %v3014 = vadd.f32 %v3012, %v3013
      %3015 = vadd.xlane.f32.xlu0 %v3014
      %v3016 = vpop.xlane.xlu0 %3015
      %v3017 = vrot.slane %v3016, 4
      %v3018 = vadd.f32 %v3016, %v3017
      %v3019 = vrot.slane %v3018, 2
      %v3020 = vadd.f32 %v3018, %v3019
      %v3021 = vrot.slane %v3020, 1
      %v3022 = vadd.f32 %v3020, %v3021
      %s3023 = vtos %v3022
      %v3024 = vstv %s3023
      %v3025 = vadd.f32 %v3024, 0.0
      %3026 = vst [vmem:[%s469] sm:$0xff] %v3025
      %v3027 = vsel %vm2963, %v2937, 0.0
      %v3028 = vsel %vm2963, %v2938, 0.0
      %v3029 = vadd.f32 %v3027, %v3028
      %v3030 = vsel %vm2963, %v2939, 0.0
      %v3031 = vadd.f32 %v3029, %v3030
      %v3032 = vsel %vm2963, %v2940, 0.0
      %v3033 = vadd.f32 %v3031, %v3032
      %v3034 = vsel %vm2963, %v2941, 0.0
      %v3035 = vadd.f32 %v3033, %v3034
      %v3036 = vsel %vm2963, %v2942, 0.0
      %v3037 = vadd.f32 %v3035, %v3036
      %v3038 = vsel %vm2963, %v2943, 0.0
      %v3039 = vadd.f32 %v3037, %v3038
      %v3040 = vsel %vm2963, %v2944, 0.0
      %v3041 = vadd.f32 %v3039, %v3040
      %v3042 = vsel %vm2963, %v2945, 0.0
      %v3043 = vadd.f32 %v3041, %v3042
      %v3044 = vsel %vm2963, %v2946, 0.0
      %v3045 = vadd.f32 %v3043, %v3044
      %v3046 = vsel %vm2963, %v2947, 0.0
      %v3047 = vadd.f32 %v3045, %v3046
      %v3048 = vsel %vm2963, %v2948, 0.0
      %v3049 = vadd.f32 %v3047, %v3048
      %v3050 = vsel %vm2963, %v2949, 0.0
      %v3051 = vadd.f32 %v3049, %v3050
      %v3052 = vsel %vm2963, %v2950, 0.0
      %v3053 = vadd.f32 %v3051, %v3052
      %v3054 = vsel %vm2963, %v2951, 0.0
      %v3055 = vadd.f32 %v3053, %v3054
      %v3056 = vsel %vm2963, %v2952, 0.0
      %v3057 = vadd.f32 %v3055, %v3056
      %v3058 = vsel %vm2963, %v2953, 0.0
      %v3059 = vadd.f32 %v3057, %v3058
      %v3060 = vsel %vm2963, %v2954, 0.0
      %v3061 = vadd.f32 %v3059, %v3060
      %v3062 = vsel %vm2963, %v2955, 0.0
      %v3063 = vadd.f32 %v3061, %v3062
      %v3064 = vsel %vm2963, %v2956, 0.0
      %v3065 = vadd.f32 %v3063, %v3064
      %v3066 = vsel %vm2963, %v2957, 0.0
      %v3067 = vadd.f32 %v3065, %v3066
      %v3068 = vsel %vm2963, %v2958, 0.0
      %v3069 = vadd.f32 %v3067, %v3068
      %v3070 = vsel %vm2963, %v2959, 0.0
      %v3071 = vadd.f32 %v3069, %v3070
      %v3072 = vsel %vm2963, %v2960, 0.0
      %v3073 = vadd.f32 %v3071, %v3072
      %v3074 = vsel %vm2963, %v2961, 0.0
      %v3075 = vadd.f32 %v3073, %v3074
      %v3076 = vsel %vm2963, %v2962, 0.0
      %v3077 = vadd.f32 %v3075, %v3076
      %3078 = vadd.xlane.f32.xlu0 %v3077
      %v3079 = vpop.xlane.xlu0 %3078
      %v3080 = vrot.slane %v3079, 4
      %v3081 = vadd.f32 %v3079, %v3080
      %v3082 = vrot.slane %v3081, 2
      %v3083 = vadd.f32 %v3081, %v3082
      %v3084 = vrot.slane %v3083, 1
      %v3085 = vadd.f32 %v3083, %v3084
      %s3086 = vtos %v3085
      %v3087 = vstv %s3086
      %v3088 = vadd.f32 %v3087, 0.0
      %3089 = vst [vmem:[%s469 + $0x8] sm:$0xff] %v3088
      %s3090 = smul.u32 26, %s25
      %p3091 = scmp.lt.s32.totalorder %s3090, 51
      %s3092 = scalar_select %p3091, %s3090, 51
      %s3093 = smul.addr %s3092, 4
      %s3094 = scalar_lea.vmem %s11, %s3093
      %s3095 = smul.u32 26, %s25
      %p3096 = scmp.lt.s32.totalorder %s3095, 51
      %s3097 = scalar_select %p3096, %s3095, 51
      %s3098 = smul.addr %s3097, 8
      %s3099 = scalar_lea.vmem %s12, %s3098
      %p3100 = scmp.lt.s32.totalorder %s25, 1
      %s3101 = scalar_select %p3100, %s25, 1
      %s3102 = smul.addr %s3101, 2
      %s3103 = smul.addr %s3102, 8
      %s3104 = scalar_lea.vmem %s13, %s3103
      // Predicated region
      $region65: #{spectral_block.1} parent=63 // pred_check
        %p3105 = pneg %p279
      $region66: #{spectral_block.1} parent=63 // pred_check_branch
        %3107 = sbr.rel (%p3105) target = $region68
      $region67: #{spectral_block.1} parent=63 // pred_region
        %s3108 = smul.u32 26, %s25
      $region68: #{spectral_block.1} parent=63 // pred_fallthru
        _
      // Predicated region
      $region69: #{spectral_block.1} parent=63 // pred_check
        %p3109 = pneg %p305
      $region70: #{spectral_block.1} parent=63 // pred_check_branch
        %3111 = sbr.rel (%p3109) target = $region72
      $region71: #{spectral_block.1} parent=63 // pred_region
        %s3112 = smul.u32 26, %s25
      $region72: #{spectral_block.1} parent=63 // pred_fallthru
        _
      // Predicated region
      $region73: #{spectral_block.1} parent=63 // pred_check
        %p3113 = pneg %p331
      $region74: #{spectral_block.1} parent=63 // pred_check_branch
        %3115 = sbr.rel (%p3113) target = $region76
      $region75: #{spectral_block.1} parent=63 // pred_region
        _
      $region76: #{spectral_block.1} parent=63 // pred_fallthru
        _
    $region64: #{spectral_block.1} parent=5 // pred_fallthru
      _
    %p3116 = scmp.le.s32.totalorder 2, %s20
    // Predicated region
    $region77: #{spectral_block.1} parent=5 // pred_check
      %p3117 = pneg %p3116
    $region78: #{spectral_block.1} parent=5 // pred_check_branch
      %3119 = sbr.rel (%p3117) target = $region80
    $region79: #{spectral_block.1} parent=5 // pred_region
      %s3120 = ssub.s32 %s20, 2
      // Predicated region
      $region81: #{spectral_block.1} parent=79 // pred_check
        %p3121 = pneg %p285
      $region82: #{spectral_block.1} parent=79 // pred_check_branch
        %3123 = sbr.rel (%p3121) target = $region84
      $region83: #{spectral_block.1} parent=79 // pred_region
        %s3124 = smul.u32 26, %s26
        %p3125 = scmp.lt.s32.totalorder %s3124, 51
        %s3126 = scalar_select %p3125, %s3124, 51
        %s3127 = smul.addr %s3126, 4
        %s3128 = scalar_lea.vmem %s11, %s3127
      $region84: #{spectral_block.1} parent=79 // pred_fallthru
        _
      // Predicated region
      $region85: #{spectral_block.1} parent=79 // pred_check
        %p3129 = pneg %p311
      $region86: #{spectral_block.1} parent=79 // pred_check_branch
        %3131 = sbr.rel (%p3129) target = $region88
      $region87: #{spectral_block.1} parent=79 // pred_region
        %s3132 = smul.u32 26, %s26
        %p3133 = scmp.lt.s32.totalorder %s3132, 51
        %s3134 = scalar_select %p3133, %s3132, 51
        %s3135 = smul.addr %s3134, 8
        %s3136 = scalar_lea.vmem %s12, %s3135
      $region88: #{spectral_block.1} parent=79 // pred_fallthru
        _
      // Predicated region
      $region89: #{spectral_block.1} parent=79 // pred_check
        %p3137 = pneg %p337
      $region90: #{spectral_block.1} parent=79 // pred_check_branch
        %3139 = sbr.rel (%p3137) target = $region92
      $region91: #{spectral_block.1} parent=79 // pred_region
        %p3140 = scmp.lt.s32.totalorder %s26, 1
        %s3141 = scalar_select %p3140, %s26, 1
        %s3142 = smul.addr %s3141, 2
        %s3143 = smul.addr %s3142, 8
        %s3144 = scalar_lea.vmem %s13, %s3143
      $region92: #{spectral_block.1} parent=79 // pred_fallthru
        _
    $region80: #{spectral_block.1} parent=5 // pred_fallthru
      _
  $region6: #{spectral_block.1} parent=0 // loop_footer
    %s24 = sadd.s32 1, %s20
  $region7: #{spectral_block.1} parent=0 // loop_footer_branch
    %19 = sbr.rel target = $region3
  $region8: #{spectral_block.1} parent=0 // loop_exit
    _

</llo_original>
